<compile_context>
chip_gen: v5e
topology: v5e:2x2
jax: 0.10.0
libtpu: 0.0.40
codegen_flags: <defaults>
</compile_context>

<pallas_src>
import math
import functools

import jax
import jax.numpy as jnp
from jax.experimental import pallas as pl
from jax.experimental.pallas import tpu as pltpu


# ----------------------------- in-kernel helpers -----------------------------

def _gelu(x):
    # torch: 0.5 * x * (1 + tanh(sqrt(2/pi) * (x + 0.044715 * x^3)))
    return 0.5 * x * (1.0 + jnp.tanh(math.sqrt(2.0 / math.pi) * (x + 0.044715 * x * x * x)))


def _layernorm(x, g, b, eps=1e-5):
    # OpenAI-style LayerNorm: epsilon inside the sqrt, biased variance.
    # rsqrt goes to the EUP (its own bundle slot) instead of a VALU divide.
    u = jnp.mean(x, axis=-1, keepdims=True)
    d = x - u
    s = jnp.mean(d * d, axis=-1, keepdims=True)
    return g * (d * jax.lax.rsqrt(s + eps)) + b


# ------------------------------- Pallas kernel --------------------------------

def transformer_block_kernel(n_head,
                             xf_ref, xq_ref,
                             w_q_ref, b_q_ref, w_kv_ref, b_kv_ref,
                             w_aproj_ref, b_aproj_ref, g1_ref, bln1_ref,
                             w_fc_ref, b_fc_ref, w_mproj_ref, b_mproj_ref,
                             g2_ref, bln2_ref,
                             out_ref,
                             k_scr, v_scr):
    S, D = xf_ref.shape                 # full sequence view (resident per batch element)
    TQ = xq_ref.shape[0]                # query-tile rows for this grid step
    H = n_head
    dh = D // H
    scale = 1.0 / math.sqrt(dh)
    qi = pl.program_id(1)               # query-tile index ("arbitrary" axis)

    # ---- K/V projection: ONE bf16 matmul per batch element, cached across q-tiles ----
    @pl.when(qi == 0)
    def _():
        xf16 = xf_ref[...].astype(jnp.bfloat16)
        kv = (jnp.dot(xf16, w_kv_ref[...], preferred_element_type=jnp.float32)
              + b_kv_ref[...])                                   # (S, 2D) f32
        for h in range(H):               # head-split once per batch, reused by all q-tiles
            k_scr[h] = kv[:, h * dh:(h + 1) * dh].astype(jnp.bfloat16)
            v_scr[h] = kv[:, D + h * dh: D + (h + 1) * dh].astype(jnp.bfloat16)

    xq = xq_ref[...]                     # (TQ, D) f32 residual-stream tile
    xq16 = xq.astype(jnp.bfloat16)

    # ---- query projection for this tile; fold 1/sqrt(dh) into q (cheaper than scaling scores) ----
    q = (jnp.dot(xq16, w_q_ref[...], preferred_element_type=jnp.float32)
         + b_q_ref[...]) * scale                                  # (TQ, D) f32
    q16 = q.astype(jnp.bfloat16)
    q_h = jnp.stack([q16[:, h * dh:(h + 1) * dh] for h in range(H)], axis=0)   # (H, TQ, dh)

    # ---- batched multi-head causal attention against the cached K/V ----
    s = jnp.einsum("hqd,hkd->hqk", q_h, k_scr[...],
                   preferred_element_type=jnp.float32)            # (H, TQ, S)
    # causal mask generated in-kernel (identical to torch's w*b + -1e9*(1-b) for the tril mask)
    rows = jax.lax.broadcasted_iota(jnp.int32, (TQ, S), 0) + qi * TQ
    cols = jax.lax.broadcasted_iota(jnp.int32, (TQ, S), 1)
    causal = rows >= cols
    s = jnp.where(causal[None, :, :], s, jnp.float32(-1e9))
    s = s - jnp.max(s, axis=-1, keepdims=True)
    p = jnp.exp(s)
    p = p * pl.reciprocal(jnp.sum(p, axis=-1, keepdims=True), approx=True)   # EUP vrcp
    ctx = jnp.einsum("hqk,hkd->hqd", p.astype(jnp.bfloat16), v_scr[...],
                     preferred_element_type=jnp.float32)          # (H, TQ, dh)

    # ---- merge_heads folded into the output projection (matmul split along K) ----
    acc = jnp.zeros((TQ, D), jnp.float32)
    for h in range(H):
        acc = acc + jnp.dot(ctx[h].astype(jnp.bfloat16),
                            w_aproj_ref[h * dh:(h + 1) * dh, :],
                            preferred_element_type=jnp.float32)
    a = acc + b_aproj_ref[...]

    # ---- n = ln_1(x + a)  (f32 elementwise epilogue) ----
    n = _layernorm(xq + a, g1_ref[...], bln1_ref[...])

    # ---- MLP: gelu(n @ w_fc + b_fc) @ w_mproj + b_mproj ----
    hmid = _gelu(jnp.dot(n.astype(jnp.bfloat16), w_fc_ref[...],
                         preferred_element_type=jnp.float32) + b_fc_ref[...])
    m = (jnp.dot(hmid.astype(jnp.bfloat16), w_mproj_ref[...],
                 preferred_element_type=jnp.float32) + b_mproj_ref[...])

    # ---- out = ln_2(n + m) ----
    out_ref[...] = _layernorm(n + m, g2_ref[...], bln2_ref[...]).astype(out_ref.dtype)


# --------------------------------- wrapper -------------------------------------

def _vmem_limit_bytes():
    """Generation-aware VMEM budget: ~3/4 of physical capacity, capped at 100 MiB."""
    cap = 128 * 1024 * 1024
    try:
        info = pltpu.get_tpu_info()
        cap = int(getattr(info, "vmem_capacity_bytes", cap))
    except Exception:
        pass
    return min((cap * 3) // 4, 100 * 1024 * 1024)


def run_block(h, p, n_head, tq, single_buffer_weights=True):
    B, S, D = h.shape
    assert D % n_head == 0, "n_embd must be divisible by n_head"
    assert S % tq == 0 and (tq % 8 == 0 or tq == S), "query tile must divide S and be sublane-aligned"
    nq = S // tq
    dh = D // n_head

    def const_spec(a):
        zeros = (0,) * a.ndim
        idx = lambda b, qi, _z=zeros: _z          # resident across the whole grid
        if single_buffer_weights:
            try:
                # weights never change block index -> single buffer halves their VMEM
                return pl.BlockSpec(a.shape, idx, pipeline_mode=pl.Buffered(1))
            except Exception:
                return pl.BlockSpec(a.shape, idx)
        return pl.BlockSpec(a.shape, idx)

    # leading batch dim squeezed out of the kernel view
    xfull_spec = pl.BlockSpec((None, S, D), lambda b, qi: (b, 0, 0))   # resident per batch element
    xq_spec = pl.BlockSpec((None, tq, D), lambda b, qi: (b, qi, 0))    # pipelined over q-tiles
    out_spec = pl.BlockSpec((None, tq, D), lambda b, qi: (b, qi, 0))

    consts = (p["w_q"], p["b_q"], p["w_kv"], p["b_kv"],
              p["w_aproj"], p["b_aproj"], p["ln1_g"], p["ln1_b"],
              p["w_fc"], p["b_fc"], p["w_mproj"], p["b_mproj"],
              p["ln2_g"], p["ln2_b"])

    # advisory cost estimate so XLA can overlap successive per-layer calls
    flops = 2 * B * S * D * (12 * D + 2 * S)
    transcendentals = B * S * (n_head * S + 4 * D + 4)
    weight_bytes = sum(int(a.size) * int(a.dtype.itemsize) for a in consts)
    bytes_accessed = 3 * B * S * D * 4 + weight_bytes

    return pl.pallas_call(
        functools.partial(transformer_block_kernel, n_head),
        out_shape=jax.ShapeDtypeStruct(h.shape, h.dtype),
        grid_spec=pltpu.PrefetchScalarGridSpec(
            num_scalar_prefetch=0,
            grid=(B, nq),
            in_specs=[xfull_spec, xq_spec] + [const_spec(a) for a in consts],
            out_specs=out_spec,
            scratch_shapes=[pltpu.VMEM((n_head, S, dh), jnp.bfloat16),   # cached K (head-split)
                            pltpu.VMEM((n_head, S, dh), jnp.bfloat16)],  # cached V (head-split)
        ),
        compiler_params=pltpu.CompilerParams(
            # batch shards across cores (v7x megacore); q-tile axis must stay "arbitrary"
            # because the K/V scratch is filled at qi == 0 and reused by later q-tiles.
            dimension_semantics=("parallel", "arbitrary"),
            vmem_limit_bytes=_vmem_limit_bytes(),
        ),
        cost_estimate=pl.CostEstimate(
            flops=flops, transcendentals=transcendentals, bytes_accessed=bytes_accessed),
    )(h, h, *consts)


_WEIGHTS_SINGLE_BUFFERED = True


def run_block_safe(h, p, n_head, tq):
    """Prefer single-buffered resident weights; fall back to default double-buffering
    if this JAX/Mosaic build rejects pipeline_mode on a BlockSpec."""
    global _WEIGHTS_SINGLE_BUFFERED
    if _WEIGHTS_SINGLE_BUFFERED:
        try:
            return run_block(h, p, n_head, tq, single_buffer_weights=True)
        except Exception:
            _WEIGHTS_SINGLE_BUFFERED = False
    return run_block(h, p, n_head, tq, single_buffer_weights=False)


def _prep_params(p):
    """Split the fused c_attn weight into q / kv parts and cast weight matrices to bf16
    (f32 accumulation happens inside the kernel); biases / LN params stay f32."""
    bf = jnp.bfloat16
    D = p["w_attn"].shape[0]
    return {
        "w_q":     p["w_attn"][:, :D].astype(bf),
        "w_kv":    p["w_attn"][:, D:].astype(bf),
        "b_q":     p["b_attn"][:, :D],
        "b_kv":    p["b_attn"][:, D:],
        "w_aproj": p["w_aproj"].astype(bf),
        "b_aproj": p["b_aproj"],
        "ln1_g":   p["ln1_g"], "ln1_b": p["ln1_b"],
        "w_fc":    p["w_fc"].astype(bf),
        "b_fc":    p["b_fc"],
        "w_mproj": p["w_mproj"].astype(bf),
        "b_mproj": p["b_mproj"],
        "ln2_g":   p["ln2_g"], "ln2_b": p["ln2_b"],
    }


def transformer_forward(x_ids, emb, block_params, n_head, tq=None):
    # torch: x = x.view(-1, x.size(-2), x.size(-1)); e = embed(x); h = e.sum(dim=2)
    # TODO(synk): embedding gather + sum stays in plain JAX (data-dependent gather).
    x_ids = x_ids.reshape(-1, x_ids.shape[-2], x_ids.shape[-1])   # (B, S, K)
    h = jnp.take(emb, x_ids, axis=0).sum(axis=2)                  # (B, S, D) f32
    B, S, D = h.shape
    if tq is None:
        tq = S
        for cand in (512, 256, 128, 64, 32, 16, 8):
            if cand <= S and S % cand == 0:
                tq = cand
                break
    for p in block_params:
        # TODO(synk): prefetch layer l+1 weights across pallas_calls (P10 cross-call futures)
        # to hide the per-layer HBM weight load at real model sizes.
        h = run_block_safe(h, _prep_params(p), n_head, tq)
    return h


# ------------------------------ pure-JAX reference -----------------------------

def _ref_block(h, p, n_head):
    B, S, D = h.shape
    dh = D // n_head
    mask = jnp.tril(jnp.ones((S, S), jnp.float32))
    qkv = h @ p["w_attn"] + p["b_attn"]
    q, k, v = jnp.split(qkv, 3, axis=-1)

    def split_heads(t):
        return t.reshape(B, S, n_head, dh).transpose(0, 2, 1, 3)

    q, k, v = split_heads(q), split_heads(k), split_heads(v)
    w = jnp.einsum("bhqd,bhkd->bhqk", q, k) / math.sqrt(dh)
    w = w * mask + -1e9 * (1.0 - mask)
    w = jax.nn.softmax(w, axis=-1)
    a = jnp.einsum("bhqk,bhkd->bhqd", w, v).transpose(0, 2, 1, 3).reshape(B, S, D)
    a = a @ p["w_aproj"] + p["b_aproj"]

    def ln(x, g, b, eps=1e-5):
        u = jnp.mean(x, axis=-1, keepdims=True)
        s = jnp.mean((x - u) ** 2, axis=-1, keepdims=True)
        return g * ((x - u) / jnp.sqrt(s + eps)) + b

    n = ln(h + a, p["ln1_g"], p["ln1_b"])
    hm = _gelu(n @ p["w_fc"] + p["b_fc"])
    m = hm @ p["w_mproj"] + p["b_mproj"]
    return ln(n + m, p["ln2_g"], p["ln2_b"])


def _ref_forward(x_ids, emb, block_params, n_head):
    x_ids = x_ids.reshape(-1, x_ids.shape[-2], x_ids.shape[-1])
    h = jnp.take(emb, x_ids, axis=0).sum(axis=2)
    for p in block_params:
        h = _ref_block(h, p, n_head)
    return h


# ----------------------------------- main --------------------------------------

if __name__ == "__main__":
    # small config consistent with the module's forward
    B, S, K = 2, 16, 2           # batch, n_ctx (= seq len), indices per position
    D, H, L = 32, 4, 2           # n_embd, n_head, n_layer
    VOCAB = 100
    TQ = 8                       # query tile (S // TQ = 2 tiles exercises the KV cache path)

    key = jax.random.PRNGKey(0)

    def normal(k, shape):
        return (0.02 * jax.random.normal(k, shape, jnp.float32)).astype(jnp.float32)

    key, ek = jax.random.split(key)
    emb = normal(ek, (VOCAB, D))                         # nn.Embedding weight, std=0.02

    block_params = []
    for _ in range(L):
        key, k1, k2, k3, k4 = jax.random.split(key, 5)
        block_params.append({
            "w_attn":  normal(k1, (D, 3 * D)),
            "b_attn":  jnp.zeros((1, 3 * D), jnp.float32),
            "w_aproj": normal(k2, (D, D)),
            "b_aproj": jnp.zeros((1, D), jnp.float32),
            "ln1_g":   jnp.ones((1, D), jnp.float32),
            "ln1_b":   jnp.zeros((1, D), jnp.float32),
            "w_fc":    normal(k3, (D, 4 * D)),
            "b_fc":    jnp.zeros((1, 4 * D), jnp.float32),
            "w_mproj": normal(k4, (4 * D, D)),
            "b_mproj": jnp.zeros((1, D), jnp.float32),
            "ln2_g":   jnp.ones((1, D), jnp.float32),
            "ln2_b":   jnp.zeros((1, D), jnp.float32),
        })

    key, xk = jax.random.split(key)
    x_ids = jax.random.randint(xk, (B, S, K), 0, VOCAB, dtype=jnp.int32)

    out = transformer_forward(x_ids, emb, block_params, H, tq=TQ)
    out = jax.block_until_ready(out)

    ref = _ref_forward(x_ids, emb, block_params, H)
    assert out.shape == (B, S, D)
    # bf16 matmul operands (f32 accumulation) + approx reciprocal -> slightly looser tolerance
    assert jnp.allclose(out, ref, atol=2e-2, rtol=2e-2), "mismatch vs pure-JAX f32 reference"

    print("KERNEL_OK")
</pallas_src>

<mosaic_0001>
module attributes {stable_mosaic.version = 11 : i64} {
  func.func @transformer_block_kernel(%arg0: i32, %arg1: i32, %arg2: memref<1x16x32xf32, #tpu.memory_space<vmem>>, %arg3: memref<1x8x32xf32, #tpu.memory_space<vmem>>, %arg4: memref<32x32xbf16, #tpu.memory_space<vmem>>, %arg5: memref<1x32xf32, #tpu.memory_space<vmem>>, %arg6: memref<32x64xbf16, #tpu.memory_space<vmem>>, %arg7: memref<1x64xf32, #tpu.memory_space<vmem>>, %arg8: memref<32x32xbf16, #tpu.memory_space<vmem>>, %arg9: memref<1x32xf32, #tpu.memory_space<vmem>>, %arg10: memref<1x32xf32, #tpu.memory_space<vmem>>, %arg11: memref<1x32xf32, #tpu.memory_space<vmem>>, %arg12: memref<32x128xbf16, #tpu.memory_space<vmem>>, %arg13: memref<1x128xf32, #tpu.memory_space<vmem>>, %arg14: memref<128x32xbf16, #tpu.memory_space<vmem>>, %arg15: memref<1x32xf32, #tpu.memory_space<vmem>>, %arg16: memref<1x32xf32, #tpu.memory_space<vmem>>, %arg17: memref<1x32xf32, #tpu.memory_space<vmem>>, %arg18: memref<1x8x32xf32, #tpu.memory_space<vmem>>, %arg19: memref<4x16x8xbf16, #tpu.memory_space<vmem>>, %arg20: memref<4x16x8xbf16, #tpu.memory_space<vmem>>) attributes {dimension_semantics = [#tpu.dimension_semantics<parallel>, #tpu.dimension_semantics<arbitrary>], iteration_bounds = array<i64: 2, 2>, scalar_prefetch = 0 : i64, scratch_operands = 2 : i64, tpu.core_type = #tpu.core_type<tc>, window_params = [{transform_indices = @transform_0, window_bounds = array<i64: 1, 16, 32>}, {transform_indices = @transform_1, window_bounds = array<i64: 1, 8, 32>}, {pipeline_mode = #tpu.pipeline_mode<synchronous>, transform_indices = @transform_2, window_bounds = array<i64: 32, 32>}, {pipeline_mode = #tpu.pipeline_mode<synchronous>, transform_indices = @transform_3, window_bounds = array<i64: 1, 32>}, {pipeline_mode = #tpu.pipeline_mode<synchronous>, transform_indices = @transform_4, window_bounds = array<i64: 32, 64>}, {pipeline_mode = #tpu.pipeline_mode<synchronous>, transform_indices = @transform_5, window_bounds = array<i64: 1, 64>}, {pipeline_mode = #tpu.pipeline_mode<synchronous>, transform_indices = @transform_6, window_bounds = array<i64: 32, 32>}, {pipeline_mode = #tpu.pipeline_mode<synchronous>, transform_indices = @transform_7, window_bounds = array<i64: 1, 32>}, {pipeline_mode = #tpu.pipeline_mode<synchronous>, transform_indices = @transform_8, window_bounds = array<i64: 1, 32>}, {pipeline_mode = #tpu.pipeline_mode<synchronous>, transform_indices = @transform_9, window_bounds = array<i64: 1, 32>}, {pipeline_mode = #tpu.pipeline_mode<synchronous>, transform_indices = @transform_10, window_bounds = array<i64: 32, 128>}, {pipeline_mode = #tpu.pipeline_mode<synchronous>, transform_indices = @transform_11, window_bounds = array<i64: 1, 128>}, {pipeline_mode = #tpu.pipeline_mode<synchronous>, transform_indices = @transform_12, window_bounds = array<i64: 128, 32>}, {pipeline_mode = #tpu.pipeline_mode<synchronous>, transform_indices = @transform_13, window_bounds = array<i64: 1, 32>}, {pipeline_mode = #tpu.pipeline_mode<synchronous>, transform_indices = @transform_14, window_bounds = array<i64: 1, 32>}, {pipeline_mode = #tpu.pipeline_mode<synchronous>, transform_indices = @transform_15, window_bounds = array<i64: 1, 32>}, {transform_indices = @transform_16, window_bounds = array<i64: 1, 8, 32>}]} {
    %c0_i32 = arith.constant 0 : i32
    %0 = arith.cmpi eq, %arg1, %c0_i32 : i32
    %1 = arith.extui %0 : i1 to i32
    %c0_i32_0 = arith.constant 0 : i32
    %2 = arith.cmpi ne, %1, %c0_i32_0 : i32
    scf.if %2 {
      %c0_66 = arith.constant 0 : index
      %c0_67 = arith.constant 0 : index
      %c0_68 = arith.constant 0 : index
      %151 = vector.load %arg2[%c0_66, %c0_67, %c0_68] : memref<1x16x32xf32, #tpu.memory_space<vmem>>, vector<1x16x32xf32>
      %152 = vector.shape_cast %151 : vector<1x16x32xf32> to vector<16x32xf32>
      %153 = arith.truncf %152 : vector<16x32xf32> to vector<16x32xbf16>
      %c0_69 = arith.constant 0 : index
      %c0_70 = arith.constant 0 : index
      %154 = vector.load %arg6[%c0_69, %c0_70] : memref<32x64xbf16, #tpu.memory_space<vmem>>, vector<32x64xbf16>
      %cst_71 = arith.constant dense<0.000000e+00> : vector<16x64xf32>
      %155 = tpu.matmul %153, %154, %cst_71 {dimension_numbers = #tpu.dot_dimension_numbers<[1], [0], [0], [1], [0, 0, 1, 1], [], []>} : vector<16x32xbf16>, vector<32x64xbf16>, vector<16x64xf32> -> vector<16x64xf32>
      %c0_72 = arith.constant 0 : index
      %c0_73 = arith.constant 0 : index
      %156 = vector.load %arg7[%c0_72, %c0_73] : memref<1x64xf32, #tpu.memory_space<vmem>>, vector<1x64xf32>
      %157 = vector.broadcast %156 : vector<1x64xf32> to vector<16x64xf32>
      %158 = arith.addf %155, %157 : vector<16x64xf32>
      %159 = vector.extract_strided_slice %158 {offsets = [0, 0], sizes = [16, 8], strides = [1, 1]} : vector<16x64xf32> to vector<16x8xf32>
      %160 = arith.truncf %159 : vector<16x8xf32> to vector<16x8xbf16>
      %c0_74 = arith.constant 0 : index
      %c0_75 = arith.constant 0 : index
      %c0_76 = arith.constant 0 : index
      %161 = vector.load %arg19[%c0_74, %c0_75, %c0_76] : memref<4x16x8xbf16, #tpu.memory_space<vmem>>, vector<1x16x8xbf16>
      %162 = vector.shape_cast %161 : vector<1x16x8xbf16> to vector<16x8xbf16>
      %163 = vector.shape_cast %160 : vector<16x8xbf16> to vector<1x16x8xbf16>
      tpu.vector_store %arg19[%c0_74, %c0_75, %c0_76], %163 {strides = array<i32>} : memref<4x16x8xbf16, #tpu.memory_space<vmem>>, vector<1x16x8xbf16>,
      %164 = vector.extract_strided_slice %158 {offsets = [0, 32], sizes = [16, 8], strides = [1, 1]} : vector<16x64xf32> to vector<16x8xf32>
      %165 = arith.truncf %164 : vector<16x8xf32> to vector<16x8xbf16>
      %c0_77 = arith.constant 0 : index
      %c0_78 = arith.constant 0 : index
      %c0_79 = arith.constant 0 : index
      %166 = vector.load %arg20[%c0_77, %c0_78, %c0_79] : memref<4x16x8xbf16, #tpu.memory_space<vmem>>, vector<1x16x8xbf16>
      %167 = vector.shape_cast %166 : vector<1x16x8xbf16> to vector<16x8xbf16>
      %168 = vector.shape_cast %165 : vector<16x8xbf16> to vector<1x16x8xbf16>
      tpu.vector_store %arg20[%c0_77, %c0_78, %c0_79], %168 {strides = array<i32>} : memref<4x16x8xbf16, #tpu.memory_space<vmem>>, vector<1x16x8xbf16>,
      %169 = vector.extract_strided_slice %158 {offsets = [0, 8], sizes = [16, 8], strides = [1, 1]} : vector<16x64xf32> to vector<16x8xf32>
      %170 = arith.truncf %169 : vector<16x8xf32> to vector<16x8xbf16>
      %c1 = arith.constant 1 : index
      %c0_80 = arith.constant 0 : index
      %c0_81 = arith.constant 0 : index
      %171 = vector.load %arg19[%c1, %c0_80, %c0_81] : memref<4x16x8xbf16, #tpu.memory_space<vmem>>, vector<1x16x8xbf16>
      %172 = vector.shape_cast %171 : vector<1x16x8xbf16> to vector<16x8xbf16>
      %173 = vector.shape_cast %170 : vector<16x8xbf16> to vector<1x16x8xbf16>
      tpu.vector_store %arg19[%c1, %c0_80, %c0_81], %173 {strides = array<i32>} : memref<4x16x8xbf16, #tpu.memory_space<vmem>>, vector<1x16x8xbf16>,
      %174 = vector.extract_strided_slice %158 {offsets = [0, 40], sizes = [16, 8], strides = [1, 1]} : vector<16x64xf32> to vector<16x8xf32>
      %175 = arith.truncf %174 : vector<16x8xf32> to vector<16x8xbf16>
      %c1_82 = arith.constant 1 : index
      %c0_83 = arith.constant 0 : index
      %c0_84 = arith.constant 0 : index
      %176 = vector.load %arg20[%c1_82, %c0_83, %c0_84] : memref<4x16x8xbf16, #tpu.memory_space<vmem>>, vector<1x16x8xbf16>
      %177 = vector.shape_cast %176 : vector<1x16x8xbf16> to vector<16x8xbf16>
      %178 = vector.shape_cast %175 : vector<16x8xbf16> to vector<1x16x8xbf16>
      tpu.vector_store %arg20[%c1_82, %c0_83, %c0_84], %178 {strides = array<i32>} : memref<4x16x8xbf16, #tpu.memory_space<vmem>>, vector<1x16x8xbf16>,
      %179 = vector.extract_strided_slice %158 {offsets = [0, 16], sizes = [16, 8], strides = [1, 1]} : vector<16x64xf32> to vector<16x8xf32>
      %180 = arith.truncf %179 : vector<16x8xf32> to vector<16x8xbf16>
      %c2 = arith.constant 2 : index
      %c0_85 = arith.constant 0 : index
      %c0_86 = arith.constant 0 : index
      %181 = vector.load %arg19[%c2, %c0_85, %c0_86] : memref<4x16x8xbf16, #tpu.memory_space<vmem>>, vector<1x16x8xbf16>
      %182 = vector.shape_cast %181 : vector<1x16x8xbf16> to vector<16x8xbf16>
      %183 = vector.shape_cast %180 : vector<16x8xbf16> to vector<1x16x8xbf16>
      tpu.vector_store %arg19[%c2, %c0_85, %c0_86], %183 {strides = array<i32>} : memref<4x16x8xbf16, #tpu.memory_space<vmem>>, vector<1x16x8xbf16>,
      %184 = vector.extract_strided_slice %158 {offsets = [0, 48], sizes = [16, 8], strides = [1, 1]} : vector<16x64xf32> to vector<16x8xf32>
      %185 = arith.truncf %184 : vector<16x8xf32> to vector<16x8xbf16>
      %c2_87 = arith.constant 2 : index
      %c0_88 = arith.constant 0 : index
      %c0_89 = arith.constant 0 : index
      %186 = vector.load %arg20[%c2_87, %c0_88, %c0_89] : memref<4x16x8xbf16, #tpu.memory_space<vmem>>, vector<1x16x8xbf16>
      %187 = vector.shape_cast %186 : vector<1x16x8xbf16> to vector<16x8xbf16>
      %188 = vector.shape_cast %185 : vector<16x8xbf16> to vector<1x16x8xbf16>
      tpu.vector_store %arg20[%c2_87, %c0_88, %c0_89], %188 {strides = array<i32>} : memref<4x16x8xbf16, #tpu.memory_space<vmem>>, vector<1x16x8xbf16>,
      %189 = vector.extract_strided_slice %158 {offsets = [0, 24], sizes = [16, 8], strides = [1, 1]} : vector<16x64xf32> to vector<16x8xf32>
      %190 = arith.truncf %189 : vector<16x8xf32> to vector<16x8xbf16>
      %c3 = arith.constant 3 : index
      %c0_90 = arith.constant 0 : index
      %c0_91 = arith.constant 0 : index
      %191 = vector.load %arg19[%c3, %c0_90, %c0_91] : memref<4x16x8xbf16, #tpu.memory_space<vmem>>, vector<1x16x8xbf16>
      %192 = vector.shape_cast %191 : vector<1x16x8xbf16> to vector<16x8xbf16>
      %193 = vector.shape_cast %190 : vector<16x8xbf16> to vector<1x16x8xbf16>
      tpu.vector_store %arg19[%c3, %c0_90, %c0_91], %193 {strides = array<i32>} : memref<4x16x8xbf16, #tpu.memory_space<vmem>>, vector<1x16x8xbf16>,
      %194 = vector.extract_strided_slice %158 {offsets = [0, 56], sizes = [16, 8], strides = [1, 1]} : vector<16x64xf32> to vector<16x8xf32>
      %195 = arith.truncf %194 : vector<16x8xf32> to vector<16x8xbf16>
      %c3_92 = arith.constant 3 : index
      %c0_93 = arith.constant 0 : index
      %c0_94 = arith.constant 0 : index
      %196 = vector.load %arg20[%c3_92, %c0_93, %c0_94] : memref<4x16x8xbf16, #tpu.memory_space<vmem>>, vector<1x16x8xbf16>
      %197 = vector.shape_cast %196 : vector<1x16x8xbf16> to vector<16x8xbf16>
      %198 = vector.shape_cast %195 : vector<16x8xbf16> to vector<1x16x8xbf16>
      tpu.vector_store %arg20[%c3_92, %c0_93, %c0_94], %198 {strides = array<i32>} : memref<4x16x8xbf16, #tpu.memory_space<vmem>>, vector<1x16x8xbf16>,
    } else {
    }
    %c0 = arith.constant 0 : index
    %c0_1 = arith.constant 0 : index
    %c0_2 = arith.constant 0 : index
    %3 = vector.load %arg3[%c0, %c0_1, %c0_2] : memref<1x8x32xf32, #tpu.memory_space<vmem>>, vector<1x8x32xf32>
    %4 = vector.shape_cast %3 : vector<1x8x32xf32> to vector<8x32xf32>
    %5 = arith.truncf %4 : vector<8x32xf32> to vector<8x32xbf16>
    %c0_3 = arith.constant 0 : index
    %c0_4 = arith.constant 0 : index
    %6 = vector.load %arg4[%c0_3, %c0_4] : memref<32x32xbf16, #tpu.memory_space<vmem>>, vector<32x32xbf16>
    %cst = arith.constant dense<0.000000e+00> : vector<8x32xf32>
    %7 = tpu.matmul %5, %6, %cst {dimension_numbers = #tpu.dot_dimension_numbers<[1], [0], [0], [1], [0, 0, 1, 1], [], []>} : vector<8x32xbf16>, vector<32x32xbf16>, vector<8x32xf32> -> vector<8x32xf32>
    %c0_5 = arith.constant 0 : index
    %c0_6 = arith.constant 0 : index
    %8 = vector.load %arg5[%c0_5, %c0_6] : memref<1x32xf32, #tpu.memory_space<vmem>>, vector<1x32xf32>
    %9 = vector.broadcast %8 : vector<1x32xf32> to vector<8x32xf32>
    %10 = arith.addf %7, %9 : vector<8x32xf32>
    %cst_7 = arith.constant 0.353553385 : f32
    %11 = vector.broadcast %cst_7 : f32 to vector<8x32xf32>
    %12 = arith.mulf %10, %11 : vector<8x32xf32>
    %13 = arith.truncf %12 : vector<8x32xf32> to vector<8x32xbf16>
    %14 = vector.extract_strided_slice %13 {offsets = [0, 0], sizes = [8, 8], strides = [1, 1]} : vector<8x32xbf16> to vector<8x8xbf16>
    %15 = vector.extract_strided_slice %13 {offsets = [0, 8], sizes = [8, 8], strides = [1, 1]} : vector<8x32xbf16> to vector<8x8xbf16>
    %16 = vector.extract_strided_slice %13 {offsets = [0, 16], sizes = [8, 8], strides = [1, 1]} : vector<8x32xbf16> to vector<8x8xbf16>
    %17 = vector.extract_strided_slice %13 {offsets = [0, 24], sizes = [8, 8], strides = [1, 1]} : vector<8x32xbf16> to vector<8x8xbf16>
    %18 = vector.shape_cast %14 : vector<8x8xbf16> to vector<1x8x8xbf16>
    %19 = vector.shape_cast %15 : vector<8x8xbf16> to vector<1x8x8xbf16>
    %20 = vector.shape_cast %16 : vector<8x8xbf16> to vector<1x8x8xbf16>
    %21 = vector.shape_cast %17 : vector<8x8xbf16> to vector<1x8x8xbf16>
    %22 = tpu.concatenate %18, %19, %20, %21 in 0 : vector<1x8x8xbf16>, vector<1x8x8xbf16>, vector<1x8x8xbf16>, vector<1x8x8xbf16> -> vector<4x8x8xbf16>
    %c0_8 = arith.constant 0 : index
    %c0_9 = arith.constant 0 : index
    %c0_10 = arith.constant 0 : index
    %23 = vector.load %arg19[%c0_8, %c0_9, %c0_10] : memref<4x16x8xbf16, #tpu.memory_space<vmem>>, vector<4x16x8xbf16>
    "tpu.trace_start"() <{level = 10 : i32, message = "hqd,hkd->hqk"}> : () -> ()
    %cst_11 = arith.constant dense<0.000000e+00> : vector<4x8x16xf32>
    %24 = tpu.matmul %22, %23, %cst_11 {dimension_numbers = #tpu.dot_dimension_numbers<[2], [2], [1], [1], [0, 0, 0, 1, 1, 1], [0], [0]>} : vector<4x8x8xbf16>, vector<4x16x8xbf16>, vector<4x8x16xf32> -> vector<4x8x16xf32>
    "tpu.trace_stop"() : () -> ()
    %25 = tpu.iota {dimensions = array<i32: 0>} : vector<8x16xi32>
    %c8_i32 = arith.constant 8 : i32
    %26 = arith.muli %arg1, %c8_i32 : i32
    %27 = vector.broadcast %26 : i32 to vector<8x16xi32>
    %28 = arith.addi %25, %27 : vector<8x16xi32>
    %29 = tpu.iota {dimensions = array<i32: 1>} : vector<8x16xi32>
    %30 = arith.cmpi sge, %28, %29 : vector<8x16xi32>
    %31 = vector.shape_cast %30 : vector<8x16xi1> to vector<1x8x16xi1>
    %cst_12 = arith.constant -1.000000e+09 : f32
    %32 = vector.shape_cast %31 : vector<1x8x16xi1> to vector<1x8x16xi1>
    %33 = vector.broadcast %32 : vector<1x8x16xi1> to vector<4x8x16xi1>
    %34 = vector.broadcast %cst_12 : f32 to vector<4x8x16xf32>
    %35 = arith.select %33, %24, %34 : vector<4x8x16xi1>, vector<4x8x16xf32>
    %cst_13 = arith.constant dense<0xFF800000> : vector<4x8xf32>
    %36 = vector.multi_reduction <maximumf>, %35, %cst_13 [2] : vector<4x8x16xf32> to vector<4x8xf32>
    %37 = vector.shape_cast %36 : vector<4x8xf32> to vector<4x8x1xf32>
    %38 = vector.broadcast %37 : vector<4x8x1xf32> to vector<4x8x16xf32>
    %39 = arith.subf %35, %38 : vector<4x8x16xf32>
    %40 = math.exp %39 : vector<4x8x16xf32>
    %cst_14 = arith.constant dense<0.000000e+00> : vector<4x8xf32>
    %41 = vector.multi_reduction <add>, %40, %cst_14 [2] : vector<4x8x16xf32> to vector<4x8xf32>
    %42 = vector.shape_cast %41 : vector<4x8xf32> to vector<4x8x1xf32>
    %43 = tpu.reciprocal %42 {approx = true} : vector<4x8x1xf32> -> vector<4x8x1xf32>
    %44 = vector.broadcast %43 : vector<4x8x1xf32> to vector<4x8x16xf32>
    %45 = arith.mulf %40, %44 : vector<4x8x16xf32>
    %46 = arith.truncf %45 : vector<4x8x16xf32> to vector<4x8x16xbf16>
    %c0_15 = arith.constant 0 : index
    %c0_16 = arith.constant 0 : index
    %c0_17 = arith.constant 0 : index
    %47 = vector.load %arg20[%c0_15, %c0_16, %c0_17] : memref<4x16x8xbf16, #tpu.memory_space<vmem>>, vector<4x16x8xbf16>
    "tpu.trace_start"() <{level = 10 : i32, message = "hqk,hkd->hqd"}> : () -> ()
    %cst_18 = arith.constant dense<0.000000e+00> : vector<4x8x8xf32>
    %48 = tpu.matmul %46, %47, %cst_18 {dimension_numbers = #tpu.dot_dimension_numbers<[2], [1], [1], [2], [0, 0, 0, 1, 1, 2], [0], [0]>} : vector<4x8x16xbf16>, vector<4x16x8xbf16>, vector<4x8x8xf32> -> vector<4x8x8xf32>
    %cst_19 = arith.constant 0.000000e+00 : f32
    "tpu.trace_stop"() : () -> ()
    %49 = vector.broadcast %cst_19 : f32 to vector<8x32xf32>
    %50 = vector.extract_strided_slice %48 {offsets = [0, 0, 0], sizes = [1, 8, 8], strides = [1, 1, 1]} : vector<4x8x8xf32> to vector<1x8x8xf32>
    %51 = vector.shape_cast %50 : vector<1x8x8xf32> to vector<8x8xf32>
    %52 = arith.truncf %51 : vector<8x8xf32> to vector<8x8xbf16>
    %c0_20 = arith.constant 0 : index
    %c0_21 = arith.constant 0 : index
    %53 = vector.load %arg8[%c0_20, %c0_21] : memref<32x32xbf16, #tpu.memory_space<vmem>>, vector<8x32xbf16>
    %cst_22 = arith.constant dense<0.000000e+00> : vector<8x32xf32>
    %54 = tpu.matmul %52, %53, %cst_22 {dimension_numbers = #tpu.dot_dimension_numbers<[1], [0], [0], [1], [0, 0, 1, 1], [], []>} : vector<8x8xbf16>, vector<8x32xbf16>, vector<8x32xf32> -> vector<8x32xf32>
    %55 = arith.addf %49, %54 : vector<8x32xf32>
    %56 = vector.extract_strided_slice %48 {offsets = [1, 0, 0], sizes = [1, 8, 8], strides = [1, 1, 1]} : vector<4x8x8xf32> to vector<1x8x8xf32>
    %57 = vector.shape_cast %56 : vector<1x8x8xf32> to vector<8x8xf32>
    %58 = arith.truncf %57 : vector<8x8xf32> to vector<8x8xbf16>
    %c8 = arith.constant 8 : index
    %c0_23 = arith.constant 0 : index
    %59 = vector.load %arg8[%c8, %c0_23] : memref<32x32xbf16, #tpu.memory_space<vmem>>, vector<8x32xbf16>
    %cst_24 = arith.constant dense<0.000000e+00> : vector<8x32xf32>
    %60 = tpu.matmul %58, %59, %cst_24 {dimension_numbers = #tpu.dot_dimension_numbers<[1], [0], [0], [1], [0, 0, 1, 1], [], []>} : vector<8x8xbf16>, vector<8x32xbf16>, vector<8x32xf32> -> vector<8x32xf32>
    %61 = arith.addf %55, %60 : vector<8x32xf32>
    %62 = vector.extract_strided_slice %48 {offsets = [2, 0, 0], sizes = [1, 8, 8], strides = [1, 1, 1]} : vector<4x8x8xf32> to vector<1x8x8xf32>
    %63 = vector.shape_cast %62 : vector<1x8x8xf32> to vector<8x8xf32>
    %64 = arith.truncf %63 : vector<8x8xf32> to vector<8x8xbf16>
    %c16 = arith.constant 16 : index
    %c0_25 = arith.constant 0 : index
    %65 = vector.load %arg8[%c16, %c0_25] : memref<32x32xbf16, #tpu.memory_space<vmem>>, vector<8x32xbf16>
    %cst_26 = arith.constant dense<0.000000e+00> : vector<8x32xf32>
    %66 = tpu.matmul %64, %65, %cst_26 {dimension_numbers = #tpu.dot_dimension_numbers<[1], [0], [0], [1], [0, 0, 1, 1], [], []>} : vector<8x8xbf16>, vector<8x32xbf16>, vector<8x32xf32> -> vector<8x32xf32>
    %67 = arith.addf %61, %66 : vector<8x32xf32>
    %68 = vector.extract_strided_slice %48 {offsets = [3, 0, 0], sizes = [1, 8, 8], strides = [1, 1, 1]} : vector<4x8x8xf32> to vector<1x8x8xf32>
    %69 = vector.shape_cast %68 : vector<1x8x8xf32> to vector<8x8xf32>
    %70 = arith.truncf %69 : vector<8x8xf32> to vector<8x8xbf16>
    %c24 = arith.constant 24 : index
    %c0_27 = arith.constant 0 : index
    %71 = vector.load %arg8[%c24, %c0_27] : memref<32x32xbf16, #tpu.memory_space<vmem>>, vector<8x32xbf16>
    %cst_28 = arith.constant dense<0.000000e+00> : vector<8x32xf32>
    %72 = tpu.matmul %70, %71, %cst_28 {dimension_numbers = #tpu.dot_dimension_numbers<[1], [0], [0], [1], [0, 0, 1, 1], [], []>} : vector<8x8xbf16>, vector<8x32xbf16>, vector<8x32xf32> -> vector<8x32xf32>
    %73 = arith.addf %67, %72 : vector<8x32xf32>
    %c0_29 = arith.constant 0 : index
    %c0_30 = arith.constant 0 : index
    %74 = vector.load %arg9[%c0_29, %c0_30] : memref<1x32xf32, #tpu.memory_space<vmem>>, vector<1x32xf32>
    %75 = vector.broadcast %74 : vector<1x32xf32> to vector<8x32xf32>
    %76 = arith.addf %73, %75 : vector<8x32xf32>
    %77 = arith.addf %4, %76 : vector<8x32xf32>
    %c0_31 = arith.constant 0 : index
    %c0_32 = arith.constant 0 : index
    %78 = vector.load %arg10[%c0_31, %c0_32] : memref<1x32xf32, #tpu.memory_space<vmem>>, vector<1x32xf32>
    %c0_33 = arith.constant 0 : index
    %c0_34 = arith.constant 0 : index
    %79 = vector.load %arg11[%c0_33, %c0_34] : memref<1x32xf32, #tpu.memory_space<vmem>>, vector<1x32xf32>
    %cst_35 = arith.constant dense<0.000000e+00> : vector<8xf32>
    %80 = vector.multi_reduction <add>, %77, %cst_35 [1] : vector<8x32xf32> to vector<8xf32>
    %81 = vector.shape_cast %80 : vector<8xf32> to vector<8x1xf32>
    %cst_36 = arith.constant 3.200000e+01 : f32
    %82 = vector.broadcast %cst_36 : f32 to vector<8x1xf32>
    %83 = arith.divf %81, %82 : vector<8x1xf32>
    %84 = vector.broadcast %83 : vector<8x1xf32> to vector<8x32xf32>
    %85 = arith.subf %77, %84 : vector<8x32xf32>
    %86 = arith.mulf %85, %85 : vector<8x32xf32>
    %cst_37 = arith.constant dense<0.000000e+00> : vector<8xf32>
    %87 = vector.multi_reduction <add>, %86, %cst_37 [1] : vector<8x32xf32> to vector<8xf32>
    %88 = vector.shape_cast %87 : vector<8xf32> to vector<8x1xf32>
    %cst_38 = arith.constant 3.200000e+01 : f32
    %89 = vector.broadcast %cst_38 : f32 to vector<8x1xf32>
    %90 = arith.divf %88, %89 : vector<8x1xf32>
    %cst_39 = arith.constant 9.99999974E-6 : f32
    %91 = vector.broadcast %cst_39 : f32 to vector<8x1xf32>
    %92 = arith.addf %90, %91 : vector<8x1xf32>
    %93 = math.rsqrt %92 : vector<8x1xf32>
    %94 = vector.broadcast %93 : vector<8x1xf32> to vector<8x32xf32>
    %95 = arith.mulf %85, %94 : vector<8x32xf32>
    %96 = vector.broadcast %78 : vector<1x32xf32> to vector<8x32xf32>
    %97 = arith.mulf %96, %95 : vector<8x32xf32>
    %98 = vector.broadcast %79 : vector<1x32xf32> to vector<8x32xf32>
    %99 = arith.addf %97, %98 : vector<8x32xf32>
    %100 = arith.truncf %99 : vector<8x32xf32> to vector<8x32xbf16>
    %c0_40 = arith.constant 0 : index
    %c0_41 = arith.constant 0 : index
    %101 = vector.load %arg12[%c0_40, %c0_41] : memref<32x128xbf16, #tpu.memory_space<vmem>>, vector<32x128xbf16>
    %cst_42 = arith.constant dense<0.000000e+00> : vector<8x128xf32>
    %102 = tpu.matmul %100, %101, %cst_42 {dimension_numbers = #tpu.dot_dimension_numbers<[1], [0], [0], [1], [0, 0, 1, 1], [], []>} : vector<8x32xbf16>, vector<32x128xbf16>, vector<8x128xf32> -> vector<8x128xf32>
    %c0_43 = arith.constant 0 : index
    %c0_44 = arith.constant 0 : index
    %103 = vector.load %arg13[%c0_43, %c0_44] : memref<1x128xf32, #tpu.memory_space<vmem>>, vector<1x128xf32>
    %104 = vector.broadcast %103 : vector<1x128xf32> to vector<8x128xf32>
    %105 = arith.addf %102, %104 : vector<8x128xf32>
    %cst_45 = arith.constant 5.000000e-01 : f32
    %106 = vector.broadcast %cst_45 : f32 to vector<8x128xf32>
    %107 = arith.mulf %106, %105 : vector<8x128xf32>
    %cst_46 = arith.constant 4.471500e-02 : f32
    %108 = vector.broadcast %cst_46 : f32 to vector<8x128xf32>
    %109 = arith.mulf %108, %105 : vector<8x128xf32>
    %110 = arith.mulf %109, %105 : vector<8x128xf32>
    %111 = arith.mulf %110, %105 : vector<8x128xf32>
    %112 = arith.addf %105, %111 : vector<8x128xf32>
    %cst_47 = arith.constant 0.797884583 : f32
    %113 = vector.broadcast %cst_47 : f32 to vector<8x128xf32>
    %114 = arith.mulf %113, %112 : vector<8x128xf32>
    %115 = math.tanh %114 : vector<8x128xf32>
    %cst_48 = arith.constant 1.000000e+00 : f32
    %116 = vector.broadcast %cst_48 : f32 to vector<8x128xf32>
    %117 = arith.addf %116, %115 : vector<8x128xf32>
    %118 = arith.mulf %107, %117 : vector<8x128xf32>
    %119 = arith.truncf %118 : vector<8x128xf32> to vector<8x128xbf16>
    %c0_49 = arith.constant 0 : index
    %c0_50 = arith.constant 0 : index
    %120 = vector.load %arg14[%c0_49, %c0_50] : memref<128x32xbf16, #tpu.memory_space<vmem>>, vector<128x32xbf16>
    %cst_51 = arith.constant dense<0.000000e+00> : vector<8x32xf32>
    %121 = tpu.matmul %119, %120, %cst_51 {dimension_numbers = #tpu.dot_dimension_numbers<[1], [0], [0], [1], [0, 0, 1, 1], [], []>} : vector<8x128xbf16>, vector<128x32xbf16>, vector<8x32xf32> -> vector<8x32xf32>
    %c0_52 = arith.constant 0 : index
    %c0_53 = arith.constant 0 : index
    %122 = vector.load %arg15[%c0_52, %c0_53] : memref<1x32xf32, #tpu.memory_space<vmem>>, vector<1x32xf32>
    %123 = vector.broadcast %122 : vector<1x32xf32> to vector<8x32xf32>
    %124 = arith.addf %121, %123 : vector<8x32xf32>
    %125 = arith.addf %99, %124 : vector<8x32xf32>
    %c0_54 = arith.constant 0 : index
    %c0_55 = arith.constant 0 : index
    %126 = vector.load %arg16[%c0_54, %c0_55] : memref<1x32xf32, #tpu.memory_space<vmem>>, vector<1x32xf32>
    %c0_56 = arith.constant 0 : index
    %c0_57 = arith.constant 0 : index
    %127 = vector.load %arg17[%c0_56, %c0_57] : memref<1x32xf32, #tpu.memory_space<vmem>>, vector<1x32xf32>
    %cst_58 = arith.constant dense<0.000000e+00> : vector<8xf32>
    %128 = vector.multi_reduction <add>, %125, %cst_58 [1] : vector<8x32xf32> to vector<8xf32>
    %129 = vector.shape_cast %128 : vector<8xf32> to vector<8x1xf32>
    %cst_59 = arith.constant 3.200000e+01 : f32
    %130 = vector.broadcast %cst_59 : f32 to vector<8x1xf32>
    %131 = arith.divf %129, %130 : vector<8x1xf32>
    %132 = vector.broadcast %131 : vector<8x1xf32> to vector<8x32xf32>
    %133 = arith.subf %125, %132 : vector<8x32xf32>
    %134 = arith.mulf %133, %133 : vector<8x32xf32>
    %cst_60 = arith.constant dense<0.000000e+00> : vector<8xf32>
    %135 = vector.multi_reduction <add>, %134, %cst_60 [1] : vector<8x32xf32> to vector<8xf32>
    %136 = vector.shape_cast %135 : vector<8xf32> to vector<8x1xf32>
    %cst_61 = arith.constant 3.200000e+01 : f32
    %137 = vector.broadcast %cst_61 : f32 to vector<8x1xf32>
    %138 = arith.divf %136, %137 : vector<8x1xf32>
    %cst_62 = arith.constant 9.99999974E-6 : f32
    %139 = vector.broadcast %cst_62 : f32 to vector<8x1xf32>
    %140 = arith.addf %138, %139 : vector<8x1xf32>
    %141 = math.rsqrt %140 : vector<8x1xf32>
    %142 = vector.broadcast %141 : vector<8x1xf32> to vector<8x32xf32>
    %143 = arith.mulf %133, %142 : vector<8x32xf32>
    %144 = vector.broadcast %126 : vector<1x32xf32> to vector<8x32xf32>
    %145 = arith.mulf %144, %143 : vector<8x32xf32>
    %146 = vector.broadcast %127 : vector<1x32xf32> to vector<8x32xf32>
    %147 = arith.addf %145, %146 : vector<8x32xf32>
    %c0_63 = arith.constant 0 : index
    %c0_64 = arith.constant 0 : index
    %c0_65 = arith.constant 0 : index
    %148 = vector.load %arg18[%c0_63, %c0_64, %c0_65] : memref<1x8x32xf32, #tpu.memory_space<vmem>>, vector<1x8x32xf32>
    %149 = vector.shape_cast %148 : vector<1x8x32xf32> to vector<8x32xf32>
    %150 = vector.shape_cast %147 : vector<8x32xf32> to vector<1x8x32xf32>
    tpu.vector_store %arg18[%c0_63, %c0_64, %c0_65], %150 {strides = array<i32>} : memref<1x8x32xf32, #tpu.memory_space<vmem>>, vector<1x8x32xf32>,
    return
  }
  func.func @transform_0(%arg0: i32, %arg1: i32) -> (i32, i32, i32) {
    %c0_i32 = arith.constant 0 : i32
    %c0_i32_0 = arith.constant 0 : i32
    %c0_i32_1 = arith.constant 0 : i32
    return %arg0, %c0_i32, %c0_i32_0 : i32, i32, i32
  }
  func.func @transform_1(%arg0: i32, %arg1: i32) -> (i32, i32, i32) {
    %c0_i32 = arith.constant 0 : i32
    %c0_i32_0 = arith.constant 0 : i32
    return %arg0, %arg1, %c0_i32 : i32, i32, i32
  }
  func.func @transform_2(%arg0: i32, %arg1: i32) -> (i32, i32) {
    %c0_i32 = arith.constant 0 : i32
    %c0_i32_0 = arith.constant 0 : i32
    %c0_i32_1 = arith.constant 0 : i32
    return %c0_i32, %c0_i32_0 : i32, i32
  }
  func.func @transform_3(%arg0: i32, %arg1: i32) -> (i32, i32) {
    %c0_i32 = arith.constant 0 : i32
    %c0_i32_0 = arith.constant 0 : i32
    %c0_i32_1 = arith.constant 0 : i32
    return %c0_i32, %c0_i32_0 : i32, i32
  }
  func.func @transform_4(%arg0: i32, %arg1: i32) -> (i32, i32) {
    %c0_i32 = arith.constant 0 : i32
    %c0_i32_0 = arith.constant 0 : i32
    %c0_i32_1 = arith.constant 0 : i32
    return %c0_i32, %c0_i32_0 : i32, i32
  }
  func.func @transform_5(%arg0: i32, %arg1: i32) -> (i32, i32) {
    %c0_i32 = arith.constant 0 : i32
    %c0_i32_0 = arith.constant 0 : i32
    %c0_i32_1 = arith.constant 0 : i32
    return %c0_i32, %c0_i32_0 : i32, i32
  }
  func.func @transform_6(%arg0: i32, %arg1: i32) -> (i32, i32) {
    %c0_i32 = arith.constant 0 : i32
    %c0_i32_0 = arith.constant 0 : i32
    %c0_i32_1 = arith.constant 0 : i32
    return %c0_i32, %c0_i32_0 : i32, i32
  }
  func.func @transform_7(%arg0: i32, %arg1: i32) -> (i32, i32) {
    %c0_i32 = arith.constant 0 : i32
    %c0_i32_0 = arith.constant 0 : i32
    %c0_i32_1 = arith.constant 0 : i32
    return %c0_i32, %c0_i32_0 : i32, i32
  }
  func.func @transform_8(%arg0: i32, %arg1: i32) -> (i32, i32) {
    %c0_i32 = arith.constant 0 : i32
    %c0_i32_0 = arith.constant 0 : i32
    %c0_i32_1 = arith.constant 0 : i32
    return %c0_i32, %c0_i32_0 : i32, i32
  }
  func.func @transform_9(%arg0: i32, %arg1: i32) -> (i32, i32) {
    %c0_i32 = arith.constant 0 : i32
    %c0_i32_0 = arith.constant 0 : i32
    %c0_i32_1 = arith.constant 0 : i32
    return %c0_i32, %c0_i32_0 : i32, i32
  }
  func.func @transform_10(%arg0: i32, %arg1: i32) -> (i32, i32) {
    %c0_i32 = arith.constant 0 : i32
    %c0_i32_0 = arith.constant 0 : i32
    %c0_i32_1 = arith.constant 0 : i32
    return %c0_i32, %c0_i32_0 : i32, i32
  }
  func.func @transform_11(%arg0: i32, %arg1: i32) -> (i32, i32) {
    %c0_i32 = arith.constant 0 : i32
    %c0_i32_0 = arith.constant 0 : i32
    %c0_i32_1 = arith.constant 0 : i32
    return %c0_i32, %c0_i32_0 : i32, i32
  }
  func.func @transform_12(%arg0: i32, %arg1: i32) -> (i32, i32) {
    %c0_i32 = arith.constant 0 : i32
    %c0_i32_0 = arith.constant 0 : i32
    %c0_i32_1 = arith.constant 0 : i32
    return %c0_i32, %c0_i32_0 : i32, i32
  }
  func.func @transform_13(%arg0: i32, %arg1: i32) -> (i32, i32) {
    %c0_i32 = arith.constant 0 : i32
    %c0_i32_0 = arith.constant 0 : i32
    %c0_i32_1 = arith.constant 0 : i32
    return %c0_i32, %c0_i32_0 : i32, i32
  }
  func.func @transform_14(%arg0: i32, %arg1: i32) -> (i32, i32) {
    %c0_i32 = arith.constant 0 : i32
    %c0_i32_0 = arith.constant 0 : i32
    %c0_i32_1 = arith.constant 0 : i32
    return %c0_i32, %c0_i32_0 : i32, i32
  }
  func.func @transform_15(%arg0: i32, %arg1: i32) -> (i32, i32) {
    %c0_i32 = arith.constant 0 : i32
    %c0_i32_0 = arith.constant 0 : i32
    %c0_i32_1 = arith.constant 0 : i32
    return %c0_i32, %c0_i32_0 : i32, i32
  }
  func.func @transform_16(%arg0: i32, %arg1: i32) -> (i32, i32, i32) {
    %c0_i32 = arith.constant 0 : i32
    %c0_i32_0 = arith.constant 0 : i32
    return %arg0, %arg1, %c0_i32 : i32, i32, i32
  }
}

module attributes {stable_mosaic.version = 11 : i64} {
  func.func @transformer_block_kernel(%arg0: i32, %arg1: i32, %arg2: memref<1x16x32xf32, #tpu.memory_space<vmem>>, %arg3: memref<1x8x32xf32, #tpu.memory_space<vmem>>, %arg4: memref<32x32xbf16, #tpu.memory_space<vmem>>, %arg5: memref<1x32xf32, #tpu.memory_space<vmem>>, %arg6: memref<32x64xbf16, #tpu.memory_space<vmem>>, %arg7: memref<1x64xf32, #tpu.memory_space<vmem>>, %arg8: memref<32x32xbf16, #tpu.memory_space<vmem>>, %arg9: memref<1x32xf32, #tpu.memory_space<vmem>>, %arg10: memref<1x32xf32, #tpu.memory_space<vmem>>, %arg11: memref<1x32xf32, #tpu.memory_space<vmem>>, %arg12: memref<32x128xbf16, #tpu.memory_space<vmem>>, %arg13: memref<1x128xf32, #tpu.memory_space<vmem>>, %arg14: memref<128x32xbf16, #tpu.memory_space<vmem>>, %arg15: memref<1x32xf32, #tpu.memory_space<vmem>>, %arg16: memref<1x32xf32, #tpu.memory_space<vmem>>, %arg17: memref<1x32xf32, #tpu.memory_space<vmem>>, %arg18: memref<1x8x32xf32, #tpu.memory_space<vmem>>, %arg19: memref<4x16x8xbf16, #tpu.memory_space<vmem>>, %arg20: memref<4x16x8xbf16, #tpu.memory_space<vmem>>) attributes {dimension_semantics = [#tpu.dimension_semantics<parallel>, #tpu.dimension_semantics<arbitrary>], iteration_bounds = array<i64: 2, 2>, scalar_prefetch = 0 : i64, scratch_operands = 2 : i64, tpu.core_type = #tpu.core_type<tc>, window_params = [{transform_indices = @transform_0, window_bounds = array<i64: 1, 16, 32>}, {transform_indices = @transform_1, window_bounds = array<i64: 1, 8, 32>}, {pipeline_mode = #tpu.pipeline_mode<synchronous>, transform_indices = @transform_2, window_bounds = array<i64: 32, 32>}, {pipeline_mode = #tpu.pipeline_mode<synchronous>, transform_indices = @transform_3, window_bounds = array<i64: 1, 32>}, {pipeline_mode = #tpu.pipeline_mode<synchronous>, transform_indices = @transform_4, window_bounds = array<i64: 32, 64>}, {pipeline_mode = #tpu.pipeline_mode<synchronous>, transform_indices = @transform_5, window_bounds = array<i64: 1, 64>}, {pipeline_mode = #tpu.pipeline_mode<synchronous>, transform_indices = @transform_6, window_bounds = array<i64: 32, 32>}, {pipeline_mode = #tpu.pipeline_mode<synchronous>, transform_indices = @transform_7, window_bounds = array<i64: 1, 32>}, {pipeline_mode = #tpu.pipeline_mode<synchronous>, transform_indices = @transform_8, window_bounds = array<i64: 1, 32>}, {pipeline_mode = #tpu.pipeline_mode<synchronous>, transform_indices = @transform_9, window_bounds = array<i64: 1, 32>}, {pipeline_mode = #tpu.pipeline_mode<synchronous>, transform_indices = @transform_10, window_bounds = array<i64: 32, 128>}, {pipeline_mode = #tpu.pipeline_mode<synchronous>, transform_indices = @transform_11, window_bounds = array<i64: 1, 128>}, {pipeline_mode = #tpu.pipeline_mode<synchronous>, transform_indices = @transform_12, window_bounds = array<i64: 128, 32>}, {pipeline_mode = #tpu.pipeline_mode<synchronous>, transform_indices = @transform_13, window_bounds = array<i64: 1, 32>}, {pipeline_mode = #tpu.pipeline_mode<synchronous>, transform_indices = @transform_14, window_bounds = array<i64: 1, 32>}, {pipeline_mode = #tpu.pipeline_mode<synchronous>, transform_indices = @transform_15, window_bounds = array<i64: 1, 32>}, {transform_indices = @transform_16, window_bounds = array<i64: 1, 8, 32>}]} {
    %c0_i32 = arith.constant 0 : i32
    %0 = arith.cmpi eq, %arg1, %c0_i32 : i32
    %1 = arith.extui %0 : i1 to i32
    %c0_i32_0 = arith.constant 0 : i32
    %2 = arith.cmpi ne, %1, %c0_i32_0 : i32
    scf.if %2 {
      %c0_66 = arith.constant 0 : index
      %c0_67 = arith.constant 0 : index
      %c0_68 = arith.constant 0 : index
      %151 = vector.load %arg2[%c0_66, %c0_67, %c0_68] : memref<1x16x32xf32, #tpu.memory_space<vmem>>, vector<1x16x32xf32>
      %152 = vector.shape_cast %151 : vector<1x16x32xf32> to vector<16x32xf32>
      %153 = arith.truncf %152 : vector<16x32xf32> to vector<16x32xbf16>
      %c0_69 = arith.constant 0 : index
      %c0_70 = arith.constant 0 : index
      %154 = vector.load %arg6[%c0_69, %c0_70] : memref<32x64xbf16, #tpu.memory_space<vmem>>, vector<32x64xbf16>
      %cst_71 = arith.constant dense<0.000000e+00> : vector<16x64xf32>
      %155 = tpu.matmul %153, %154, %cst_71 {dimension_numbers = #tpu.dot_dimension_numbers<[1], [0], [0], [1], [0, 0, 1, 1], [], []>} : vector<16x32xbf16>, vector<32x64xbf16>, vector<16x64xf32> -> vector<16x64xf32>
      %c0_72 = arith.constant 0 : index
      %c0_73 = arith.constant 0 : index
      %156 = vector.load %arg7[%c0_72, %c0_73] : memref<1x64xf32, #tpu.memory_space<vmem>>, vector<1x64xf32>
      %157 = vector.broadcast %156 : vector<1x64xf32> to vector<16x64xf32>
      %158 = arith.addf %155, %157 : vector<16x64xf32>
      %159 = vector.extract_strided_slice %158 {offsets = [0, 0], sizes = [16, 8], strides = [1, 1]} : vector<16x64xf32> to vector<16x8xf32>
      %160 = arith.truncf %159 : vector<16x8xf32> to vector<16x8xbf16>
      %c0_74 = arith.constant 0 : index
      %c0_75 = arith.constant 0 : index
      %c0_76 = arith.constant 0 : index
      %161 = vector.load %arg19[%c0_74, %c0_75, %c0_76] : memref<4x16x8xbf16, #tpu.memory_space<vmem>>, vector<1x16x8xbf16>
      %162 = vector.shape_cast %161 : vector<1x16x8xbf16> to vector<16x8xbf16>
      %163 = vector.shape_cast %160 : vector<16x8xbf16> to vector<1x16x8xbf16>
      tpu.vector_store %arg19[%c0_74, %c0_75, %c0_76], %163 {strides = array<i32>} : memref<4x16x8xbf16, #tpu.memory_space<vmem>>, vector<1x16x8xbf16>,
      %164 = vector.extract_strided_slice %158 {offsets = [0, 32], sizes = [16, 8], strides = [1, 1]} : vector<16x64xf32> to vector<16x8xf32>
      %165 = arith.truncf %164 : vector<16x8xf32> to vector<16x8xbf16>
      %c0_77 = arith.constant 0 : index
      %c0_78 = arith.constant 0 : index
      %c0_79 = arith.constant 0 : index
      %166 = vector.load %arg20[%c0_77, %c0_78, %c0_79] : memref<4x16x8xbf16, #tpu.memory_space<vmem>>, vector<1x16x8xbf16>
      %167 = vector.shape_cast %166 : vector<1x16x8xbf16> to vector<16x8xbf16>
      %168 = vector.shape_cast %165 : vector<16x8xbf16> to vector<1x16x8xbf16>
      tpu.vector_store %arg20[%c0_77, %c0_78, %c0_79], %168 {strides = array<i32>} : memref<4x16x8xbf16, #tpu.memory_space<vmem>>, vector<1x16x8xbf16>,
      %169 = vector.extract_strided_slice %158 {offsets = [0, 8], sizes = [16, 8], strides = [1, 1]} : vector<16x64xf32> to vector<16x8xf32>
      %170 = arith.truncf %169 : vector<16x8xf32> to vector<16x8xbf16>
      %c1 = arith.constant 1 : index
      %c0_80 = arith.constant 0 : index
      %c0_81 = arith.constant 0 : index
      %171 = vector.load %arg19[%c1, %c0_80, %c0_81] : memref<4x16x8xbf16, #tpu.memory_space<vmem>>, vector<1x16x8xbf16>
      %172 = vector.shape_cast %171 : vector<1x16x8xbf16> to vector<16x8xbf16>
      %173 = vector.shape_cast %170 : vector<16x8xbf16> to vector<1x16x8xbf16>
      tpu.vector_store %arg19[%c1, %c0_80, %c0_81], %173 {strides = array<i32>} : memref<4x16x8xbf16, #tpu.memory_space<vmem>>, vector<1x16x8xbf16>,
      %174 = vector.extract_strided_slice %158 {offsets = [0, 40], sizes = [16, 8], strides = [1, 1]} : vector<16x64xf32> to vector<16x8xf32>
      %175 = arith.truncf %174 : vector<16x8xf32> to vector<16x8xbf16>
      %c1_82 = arith.constant 1 : index
      %c0_83 = arith.constant 0 : index
      %c0_84 = arith.constant 0 : index
      %176 = vector.load %arg20[%c1_82, %c0_83, %c0_84] : memref<4x16x8xbf16, #tpu.memory_space<vmem>>, vector<1x16x8xbf16>
      %177 = vector.shape_cast %176 : vector<1x16x8xbf16> to vector<16x8xbf16>
      %178 = vector.shape_cast %175 : vector<16x8xbf16> to vector<1x16x8xbf16>
      tpu.vector_store %arg20[%c1_82, %c0_83, %c0_84], %178 {strides = array<i32>} : memref<4x16x8xbf16, #tpu.memory_space<vmem>>, vector<1x16x8xbf16>,
      %179 = vector.extract_strided_slice %158 {offsets = [0, 16], sizes = [16, 8], strides = [1, 1]} : vector<16x64xf32> to vector<16x8xf32>
      %180 = arith.truncf %179 : vector<16x8xf32> to vector<16x8xbf16>
      %c2 = arith.constant 2 : index
      %c0_85 = arith.constant 0 : index
      %c0_86 = arith.constant 0 : index
      %181 = vector.load %arg19[%c2, %c0_85, %c0_86] : memref<4x16x8xbf16, #tpu.memory_space<vmem>>, vector<1x16x8xbf16>
      %182 = vector.shape_cast %181 : vector<1x16x8xbf16> to vector<16x8xbf16>
      %183 = vector.shape_cast %180 : vector<16x8xbf16> to vector<1x16x8xbf16>
      tpu.vector_store %arg19[%c2, %c0_85, %c0_86], %183 {strides = array<i32>} : memref<4x16x8xbf16, #tpu.memory_space<vmem>>, vector<1x16x8xbf16>,
      %184 = vector.extract_strided_slice %158 {offsets = [0, 48], sizes = [16, 8], strides = [1, 1]} : vector<16x64xf32> to vector<16x8xf32>
      %185 = arith.truncf %184 : vector<16x8xf32> to vector<16x8xbf16>
      %c2_87 = arith.constant 2 : index
      %c0_88 = arith.constant 0 : index
      %c0_89 = arith.constant 0 : index
      %186 = vector.load %arg20[%c2_87, %c0_88, %c0_89] : memref<4x16x8xbf16, #tpu.memory_space<vmem>>, vector<1x16x8xbf16>
      %187 = vector.shape_cast %186 : vector<1x16x8xbf16> to vector<16x8xbf16>
      %188 = vector.shape_cast %185 : vector<16x8xbf16> to vector<1x16x8xbf16>
      tpu.vector_store %arg20[%c2_87, %c0_88, %c0_89], %188 {strides = array<i32>} : memref<4x16x8xbf16, #tpu.memory_space<vmem>>, vector<1x16x8xbf16>,
      %189 = vector.extract_strided_slice %158 {offsets = [0, 24], sizes = [16, 8], strides = [1, 1]} : vector<16x64xf32> to vector<16x8xf32>
      %190 = arith.truncf %189 : vector<16x8xf32> to vector<16x8xbf16>
      %c3 = arith.constant 3 : index
      %c0_90 = arith.constant 0 : index
      %c0_91 = arith.constant 0 : index
      %191 = vector.load %arg19[%c3, %c0_90, %c0_91] : memref<4x16x8xbf16, #tpu.memory_space<vmem>>, vector<1x16x8xbf16>
      %192 = vector.shape_cast %191 : vector<1x16x8xbf16> to vector<16x8xbf16>
      %193 = vector.shape_cast %190 : vector<16x8xbf16> to vector<1x16x8xbf16>
      tpu.vector_store %arg19[%c3, %c0_90, %c0_91], %193 {strides = array<i32>} : memref<4x16x8xbf16, #tpu.memory_space<vmem>>, vector<1x16x8xbf16>,
      %194 = vector.extract_strided_slice %158 {offsets = [0, 56], sizes = [16, 8], strides = [1, 1]} : vector<16x64xf32> to vector<16x8xf32>
      %195 = arith.truncf %194 : vector<16x8xf32> to vector<16x8xbf16>
      %c3_92 = arith.constant 3 : index
      %c0_93 = arith.constant 0 : index
      %c0_94 = arith.constant 0 : index
      %196 = vector.load %arg20[%c3_92, %c0_93, %c0_94] : memref<4x16x8xbf16, #tpu.memory_space<vmem>>, vector<1x16x8xbf16>
      %197 = vector.shape_cast %196 : vector<1x16x8xbf16> to vector<16x8xbf16>
      %198 = vector.shape_cast %195 : vector<16x8xbf16> to vector<1x16x8xbf16>
      tpu.vector_store %arg20[%c3_92, %c0_93, %c0_94], %198 {strides = array<i32>} : memref<4x16x8xbf16, #tpu.memory_space<vmem>>, vector<1x16x8xbf16>,
    } else {
    }
    %c0 = arith.constant 0 : index
    %c0_1 = arith.constant 0 : index
    %c0_2 = arith.constant 0 : index
    %3 = vector.load %arg3[%c0, %c0_1, %c0_2] : memref<1x8x32xf32, #tpu.memory_space<vmem>>, vector<1x8x32xf32>
    %4 = vector.shape_cast %3 : vector<1x8x32xf32> to vector<8x32xf32>
    %5 = arith.truncf %4 : vector<8x32xf32> to vector<8x32xbf16>
    %c0_3 = arith.constant 0 : index
    %c0_4 = arith.constant 0 : index
    %6 = vector.load %arg4[%c0_3, %c0_4] : memref<32x32xbf16, #tpu.memory_space<vmem>>, vector<32x32xbf16>
    %cst = arith.constant dense<0.000000e+00> : vector<8x32xf32>
    %7 = tpu.matmul %5, %6, %cst {dimension_numbers = #tpu.dot_dimension_numbers<[1], [0], [0], [1], [0, 0, 1, 1], [], []>} : vector<8x32xbf16>, vector<32x32xbf16>, vector<8x32xf32> -> vector<8x32xf32>
    %c0_5 = arith.constant 0 : index
    %c0_6 = arith.constant 0 : index
    %8 = vector.load %arg5[%c0_5, %c0_6] : memref<1x32xf32, #tpu.memory_space<vmem>>, vector<1x32xf32>
    %9 = vector.broadcast %8 : vector<1x32xf32> to vector<8x32xf32>
    %10 = arith.addf %7, %9 : vector<8x32xf32>
    %cst_7 = arith.constant 0.353553385 : f32
    %11 = vector.broadcast %cst_7 : f32 to vector<8x32xf32>
    %12 = arith.mulf %10, %11 : vector<8x32xf32>
    %13 = arith.truncf %12 : vector<8x32xf32> to vector<8x32xbf16>
    %14 = vector.extract_strided_slice %13 {offsets = [0, 0], sizes = [8, 8], strides = [1, 1]} : vector<8x32xbf16> to vector<8x8xbf16>
    %15 = vector.extract_strided_slice %13 {offsets = [0, 8], sizes = [8, 8], strides = [1, 1]} : vector<8x32xbf16> to vector<8x8xbf16>
    %16 = vector.extract_strided_slice %13 {offsets = [0, 16], sizes = [8, 8], strides = [1, 1]} : vector<8x32xbf16> to vector<8x8xbf16>
    %17 = vector.extract_strided_slice %13 {offsets = [0, 24], sizes = [8, 8], strides = [1, 1]} : vector<8x32xbf16> to vector<8x8xbf16>
    %18 = vector.shape_cast %14 : vector<8x8xbf16> to vector<1x8x8xbf16>
    %19 = vector.shape_cast %15 : vector<8x8xbf16> to vector<1x8x8xbf16>
    %20 = vector.shape_cast %16 : vector<8x8xbf16> to vector<1x8x8xbf16>
    %21 = vector.shape_cast %17 : vector<8x8xbf16> to vector<1x8x8xbf16>
    %22 = tpu.concatenate %18, %19, %20, %21 in 0 : vector<1x8x8xbf16>, vector<1x8x8xbf16>, vector<1x8x8xbf16>, vector<1x8x8xbf16> -> vector<4x8x8xbf16>
    %c0_8 = arith.constant 0 : index
    %c0_9 = arith.constant 0 : index
    %c0_10 = arith.constant 0 : index
    %23 = vector.load %arg19[%c0_8, %c0_9, %c0_10] : memref<4x16x8xbf16, #tpu.memory_space<vmem>>, vector<4x16x8xbf16>
    "tpu.trace_start"() <{level = 10 : i32, message = "hqd,hkd->hqk"}> : () -> ()
    %cst_11 = arith.constant dense<0.000000e+00> : vector<4x8x16xf32>
    %24 = tpu.matmul %22, %23, %cst_11 {dimension_numbers = #tpu.dot_dimension_numbers<[2], [2], [1], [1], [0, 0, 0, 1, 1, 1], [0], [0]>} : vector<4x8x8xbf16>, vector<4x16x8xbf16>, vector<4x8x16xf32> -> vector<4x8x16xf32>
    "tpu.trace_stop"() : () -> ()
    %25 = tpu.iota {dimensions = array<i32: 0>} : vector<8x16xi32>
    %c8_i32 = arith.constant 8 : i32
    %26 = arith.muli %arg1, %c8_i32 : i32
    %27 = vector.broadcast %26 : i32 to vector<8x16xi32>
    %28 = arith.addi %25, %27 : vector<8x16xi32>
    %29 = tpu.iota {dimensions = array<i32: 1>} : vector<8x16xi32>
    %30 = arith.cmpi sge, %28, %29 : vector<8x16xi32>
    %31 = vector.shape_cast %30 : vector<8x16xi1> to vector<1x8x16xi1>
    %cst_12 = arith.constant -1.000000e+09 : f32
    %32 = vector.shape_cast %31 : vector<1x8x16xi1> to vector<1x8x16xi1>
    %33 = vector.broadcast %32 : vector<1x8x16xi1> to vector<4x8x16xi1>
    %34 = vector.broadcast %cst_12 : f32 to vector<4x8x16xf32>
    %35 = arith.select %33, %24, %34 : vector<4x8x16xi1>, vector<4x8x16xf32>
    %cst_13 = arith.constant dense<0xFF800000> : vector<4x8xf32>
    %36 = vector.multi_reduction <maximumf>, %35, %cst_13 [2] : vector<4x8x16xf32> to vector<4x8xf32>
    %37 = vector.shape_cast %36 : vector<4x8xf32> to vector<4x8x1xf32>
    %38 = vector.broadcast %37 : vector<4x8x1xf32> to vector<4x8x16xf32>
    %39 = arith.subf %35, %38 : vector<4x8x16xf32>
    %40 = math.exp %39 : vector<4x8x16xf32>
    %cst_14 = arith.constant dense<0.000000e+00> : vector<4x8xf32>
    %41 = vector.multi_reduction <add>, %40, %cst_14 [2] : vector<4x8x16xf32> to vector<4x8xf32>
    %42 = vector.shape_cast %41 : vector<4x8xf32> to vector<4x8x1xf32>
    %43 = tpu.reciprocal %42 {approx = true} : vector<4x8x1xf32> -> vector<4x8x1xf32>
    %44 = vector.broadcast %43 : vector<4x8x1xf32> to vector<4x8x16xf32>
    %45 = arith.mulf %40, %44 : vector<4x8x16xf32>
    %46 = arith.truncf %45 : vector<4x8x16xf32> to vector<4x8x16xbf16>
    %c0_15 = arith.constant 0 : index
    %c0_16 = arith.constant 0 : index
    %c0_17 = arith.constant 0 : index
    %47 = vector.load %arg20[%c0_15, %c0_16, %c0_17] : memref<4x16x8xbf16, #tpu.memory_space<vmem>>, vector<4x16x8xbf16>
    "tpu.trace_start"() <{level = 10 : i32, message = "hqk,hkd->hqd"}> : () -> ()
    %cst_18 = arith.constant dense<0.000000e+00> : vector<4x8x8xf32>
    %48 = tpu.matmul %46, %47, %cst_18 {dimension_numbers = #tpu.dot_dimension_numbers<[2], [1], [1], [2], [0, 0, 0, 1, 1, 2], [0], [0]>} : vector<4x8x16xbf16>, vector<4x16x8xbf16>, vector<4x8x8xf32> -> vector<4x8x8xf32>
    %cst_19 = arith.constant 0.000000e+00 : f32
    "tpu.trace_stop"() : () -> ()
    %49 = vector.broadcast %cst_19 : f32 to vector<8x32xf32>
    %50 = vector.extract_strided_slice %48 {offsets = [0, 0, 0], sizes = [1, 8, 8], strides = [1, 1, 1]} : vector<4x8x8xf32> to vector<1x8x8xf32>
    %51 = vector.shape_cast %50 : vector<1x8x8xf32> to vector<8x8xf32>
    %52 = arith.truncf %51 : vector<8x8xf32> to vector<8x8xbf16>
    %c0_20 = arith.constant 0 : index
    %c0_21 = arith.constant 0 : index
    %53 = vector.load %arg8[%c0_20, %c0_21] : memref<32x32xbf16, #tpu.memory_space<vmem>>, vector<8x32xbf16>
    %cst_22 = arith.constant dense<0.000000e+00> : vector<8x32xf32>
    %54 = tpu.matmul %52, %53, %cst_22 {dimension_numbers = #tpu.dot_dimension_numbers<[1], [0], [0], [1], [0, 0, 1, 1], [], []>} : vector<8x8xbf16>, vector<8x32xbf16>, vector<8x32xf32> -> vector<8x32xf32>
    %55 = arith.addf %49, %54 : vector<8x32xf32>
    %56 = vector.extract_strided_slice %48 {offsets = [1, 0, 0], sizes = [1, 8, 8], strides = [1, 1, 1]} : vector<4x8x8xf32> to vector<1x8x8xf32>
    %57 = vector.shape_cast %56 : vector<1x8x8xf32> to vector<8x8xf32>
    %58 = arith.truncf %57 : vector<8x8xf32> to vector<8x8xbf16>
    %c8 = arith.constant 8 : index
    %c0_23 = arith.constant 0 : index
    %59 = vector.load %arg8[%c8, %c0_23] : memref<32x32xbf16, #tpu.memory_space<vmem>>, vector<8x32xbf16>
    %cst_24 = arith.constant dense<0.000000e+00> : vector<8x32xf32>
    %60 = tpu.matmul %58, %59, %cst_24 {dimension_numbers = #tpu.dot_dimension_numbers<[1], [0], [0], [1], [0, 0, 1, 1], [], []>} : vector<8x8xbf16>, vector<8x32xbf16>, vector<8x32xf32> -> vector<8x32xf32>
    %61 = arith.addf %55, %60 : vector<8x32xf32>
    %62 = vector.extract_strided_slice %48 {offsets = [2, 0, 0], sizes = [1, 8, 8], strides = [1, 1, 1]} : vector<4x8x8xf32> to vector<1x8x8xf32>
    %63 = vector.shape_cast %62 : vector<1x8x8xf32> to vector<8x8xf32>
    %64 = arith.truncf %63 : vector<8x8xf32> to vector<8x8xbf16>
    %c16 = arith.constant 16 : index
    %c0_25 = arith.constant 0 : index
    %65 = vector.load %arg8[%c16, %c0_25] : memref<32x32xbf16, #tpu.memory_space<vmem>>, vector<8x32xbf16>
    %cst_26 = arith.constant dense<0.000000e+00> : vector<8x32xf32>
    %66 = tpu.matmul %64, %65, %cst_26 {dimension_numbers = #tpu.dot_dimension_numbers<[1], [0], [0], [1], [0, 0, 1, 1], [], []>} : vector<8x8xbf16>, vector<8x32xbf16>, vector<8x32xf32> -> vector<8x32xf32>
    %67 = arith.addf %61, %66 : vector<8x32xf32>
    %68 = vector.extract_strided_slice %48 {offsets = [3, 0, 0], sizes = [1, 8, 8], strides = [1, 1, 1]} : vector<4x8x8xf32> to vector<1x8x8xf32>
    %69 = vector.shape_cast %68 : vector<1x8x8xf32> to vector<8x8xf32>
    %70 = arith.truncf %69 : vector<8x8xf32> to vector<8x8xbf16>
    %c24 = arith.constant 24 : index
    %c0_27 = arith.constant 0 : index
    %71 = vector.load %arg8[%c24, %c0_27] : memref<32x32xbf16, #tpu.memory_space<vmem>>, vector<8x32xbf16>
    %cst_28 = arith.constant dense<0.000000e+00> : vector<8x32xf32>
    %72 = tpu.matmul %70, %71, %cst_28 {dimension_numbers = #tpu.dot_dimension_numbers<[1], [0], [0], [1], [0, 0, 1, 1], [], []>} : vector<8x8xbf16>, vector<8x32xbf16>, vector<8x32xf32> -> vector<8x32xf32>
    %73 = arith.addf %67, %72 : vector<8x32xf32>
    %c0_29 = arith.constant 0 : index
    %c0_30 = arith.constant 0 : index
    %74 = vector.load %arg9[%c0_29, %c0_30] : memref<1x32xf32, #tpu.memory_space<vmem>>, vector<1x32xf32>
    %75 = vector.broadcast %74 : vector<1x32xf32> to vector<8x32xf32>
    %76 = arith.addf %73, %75 : vector<8x32xf32>
    %77 = arith.addf %4, %76 : vector<8x32xf32>
    %c0_31 = arith.constant 0 : index
    %c0_32 = arith.constant 0 : index
    %78 = vector.load %arg10[%c0_31, %c0_32] : memref<1x32xf32, #tpu.memory_space<vmem>>, vector<1x32xf32>
    %c0_33 = arith.constant 0 : index
    %c0_34 = arith.constant 0 : index
    %79 = vector.load %arg11[%c0_33, %c0_34] : memref<1x32xf32, #tpu.memory_space<vmem>>, vector<1x32xf32>
    %cst_35 = arith.constant dense<0.000000e+00> : vector<8xf32>
    %80 = vector.multi_reduction <add>, %77, %cst_35 [1] : vector<8x32xf32> to vector<8xf32>
    %81 = vector.shape_cast %80 : vector<8xf32> to vector<8x1xf32>
    %cst_36 = arith.constant 3.200000e+01 : f32
    %82 = vector.broadcast %cst_36 : f32 to vector<8x1xf32>
    %83 = arith.divf %81, %82 : vector<8x1xf32>
    %84 = vector.broadcast %83 : vector<8x1xf32> to vector<8x32xf32>
    %85 = arith.subf %77, %84 : vector<8x32xf32>
    %86 = arith.mulf %85, %85 : vector<8x32xf32>
    %cst_37 = arith.constant dense<0.000000e+00> : vector<8xf32>
    %87 = vector.multi_reduction <add>, %86, %cst_37 [1] : vector<8x32xf32> to vector<8xf32>
    %88 = vector.shape_cast %87 : vector<8xf32> to vector<8x1xf32>
    %cst_38 = arith.constant 3.200000e+01 : f32
    %89 = vector.broadcast %cst_38 : f32 to vector<8x1xf32>
    %90 = arith.divf %88, %89 : vector<8x1xf32>
    %cst_39 = arith.constant 9.99999974E-6 : f32
    %91 = vector.broadcast %cst_39 : f32 to vector<8x1xf32>
    %92 = arith.addf %90, %91 : vector<8x1xf32>
    %93 = math.rsqrt %92 : vector<8x1xf32>
    %94 = vector.broadcast %93 : vector<8x1xf32> to vector<8x32xf32>
    %95 = arith.mulf %85, %94 : vector<8x32xf32>
    %96 = vector.broadcast %78 : vector<1x32xf32> to vector<8x32xf32>
    %97 = arith.mulf %96, %95 : vector<8x32xf32>
    %98 = vector.broadcast %79 : vector<1x32xf32> to vector<8x32xf32>
    %99 = arith.addf %97, %98 : vector<8x32xf32>
    %100 = arith.truncf %99 : vector<8x32xf32> to vector<8x32xbf16>
    %c0_40 = arith.constant 0 : index
    %c0_41 = arith.constant 0 : index
    %101 = vector.load %arg12[%c0_40, %c0_41] : memref<32x128xbf16, #tpu.memory_space<vmem>>, vector<32x128xbf16>
    %cst_42 = arith.constant dense<0.000000e+00> : vector<8x128xf32>
    %102 = tpu.matmul %100, %101, %cst_42 {dimension_numbers = #tpu.dot_dimension_numbers<[1], [0], [0], [1], [0, 0, 1, 1], [], []>} : vector<8x32xbf16>, vector<32x128xbf16>, vector<8x128xf32> -> vector<8x128xf32>
    %c0_43 = arith.constant 0 : index
    %c0_44 = arith.constant 0 : index
    %103 = vector.load %arg13[%c0_43, %c0_44] : memref<1x128xf32, #tpu.memory_space<vmem>>, vector<1x128xf32>
    %104 = vector.broadcast %103 : vector<1x128xf32> to vector<8x128xf32>
    %105 = arith.addf %102, %104 : vector<8x128xf32>
    %cst_45 = arith.constant 5.000000e-01 : f32
    %106 = vector.broadcast %cst_45 : f32 to vector<8x128xf32>
    %107 = arith.mulf %106, %105 : vector<8x128xf32>
    %cst_46 = arith.constant 4.471500e-02 : f32
    %108 = vector.broadcast %cst_46 : f32 to vector<8x128xf32>
    %109 = arith.mulf %108, %105 : vector<8x128xf32>
    %110 = arith.mulf %109, %105 : vector<8x128xf32>
    %111 = arith.mulf %110, %105 : vector<8x128xf32>
    %112 = arith.addf %105, %111 : vector<8x128xf32>
    %cst_47 = arith.constant 0.797884583 : f32
    %113 = vector.broadcast %cst_47 : f32 to vector<8x128xf32>
    %114 = arith.mulf %113, %112 : vector<8x128xf32>
    %115 = math.tanh %114 : vector<8x128xf32>
    %cst_48 = arith.constant 1.000000e+00 : f32
    %116 = vector.broadcast %cst_48 : f32 to vector<8x128xf32>
    %117 = arith.addf %116, %115 : vector<8x128xf32>
    %118 = arith.mulf %107, %117 : vector<8x128xf32>
    %119 = arith.truncf %118 : vector<8x128xf32> to vector<8x128xbf16>
    %c0_49 = arith.constant 0 : index
    %c0_50 = arith.constant 0 : index
    %120 = vector.load %arg14[%c0_49, %c0_50] : memref<128x32xbf16, #tpu.memory_space<vmem>>, vector<128x32xbf16>
    %cst_51 = arith.constant dense<0.000000e+00> : vector<8x32xf32>
    %121 = tpu.matmul %119, %120, %cst_51 {dimension_numbers = #tpu.dot_dimension_numbers<[1], [0], [0], [1], [0, 0, 1, 1], [], []>} : vector<8x128xbf16>, vector<128x32xbf16>, vector<8x32xf32> -> vector<8x32xf32>
    %c0_52 = arith.constant 0 : index
    %c0_53 = arith.constant 0 : index
    %122 = vector.load %arg15[%c0_52, %c0_53] : memref<1x32xf32, #tpu.memory_space<vmem>>, vector<1x32xf32>
    %123 = vector.broadcast %122 : vector<1x32xf32> to vector<8x32xf32>
    %124 = arith.addf %121, %123 : vector<8x32xf32>
    %125 = arith.addf %99, %124 : vector<8x32xf32>
    %c0_54 = arith.constant 0 : index
    %c0_55 = arith.constant 0 : index
    %126 = vector.load %arg16[%c0_54, %c0_55] : memref<1x32xf32, #tpu.memory_space<vmem>>, vector<1x32xf32>
    %c0_56 = arith.constant 0 : index
    %c0_57 = arith.constant 0 : index
    %127 = vector.load %arg17[%c0_56, %c0_57] : memref<1x32xf32, #tpu.memory_space<vmem>>, vector<1x32xf32>
    %cst_58 = arith.constant dense<0.000000e+00> : vector<8xf32>
    %128 = vector.multi_reduction <add>, %125, %cst_58 [1] : vector<8x32xf32> to vector<8xf32>
    %129 = vector.shape_cast %128 : vector<8xf32> to vector<8x1xf32>
    %cst_59 = arith.constant 3.200000e+01 : f32
    %130 = vector.broadcast %cst_59 : f32 to vector<8x1xf32>
    %131 = arith.divf %129, %130 : vector<8x1xf32>
    %132 = vector.broadcast %131 : vector<8x1xf32> to vector<8x32xf32>
    %133 = arith.subf %125, %132 : vector<8x32xf32>
    %134 = arith.mulf %133, %133 : vector<8x32xf32>
    %cst_60 = arith.constant dense<0.000000e+00> : vector<8xf32>
    %135 = vector.multi_reduction <add>, %134, %cst_60 [1] : vector<8x32xf32> to vector<8xf32>
    %136 = vector.shape_cast %135 : vector<8xf32> to vector<8x1xf32>
    %cst_61 = arith.constant 3.200000e+01 : f32
    %137 = vector.broadcast %cst_61 : f32 to vector<8x1xf32>
    %138 = arith.divf %136, %137 : vector<8x1xf32>
    %cst_62 = arith.constant 9.99999974E-6 : f32
    %139 = vector.broadcast %cst_62 : f32 to vector<8x1xf32>
    %140 = arith.addf %138, %139 : vector<8x1xf32>
    %141 = math.rsqrt %140 : vector<8x1xf32>
    %142 = vector.broadcast %141 : vector<8x1xf32> to vector<8x32xf32>
    %143 = arith.mulf %133, %142 : vector<8x32xf32>
    %144 = vector.broadcast %126 : vector<1x32xf32> to vector<8x32xf32>
    %145 = arith.mulf %144, %143 : vector<8x32xf32>
    %146 = vector.broadcast %127 : vector<1x32xf32> to vector<8x32xf32>
    %147 = arith.addf %145, %146 : vector<8x32xf32>
    %c0_63 = arith.constant 0 : index
    %c0_64 = arith.constant 0 : index
    %c0_65 = arith.constant 0 : index
    %148 = vector.load %arg18[%c0_63, %c0_64, %c0_65] : memref<1x8x32xf32, #tpu.memory_space<vmem>>, vector<1x8x32xf32>
    %149 = vector.shape_cast %148 : vector<1x8x32xf32> to vector<8x32xf32>
    %150 = vector.shape_cast %147 : vector<8x32xf32> to vector<1x8x32xf32>
    tpu.vector_store %arg18[%c0_63, %c0_64, %c0_65], %150 {strides = array<i32>} : memref<1x8x32xf32, #tpu.memory_space<vmem>>, vector<1x8x32xf32>,
    return
  }
  func.func @transform_0(%arg0: i32, %arg1: i32) -> (i32, i32, i32) {
    %c0_i32 = arith.constant 0 : i32
    %c0_i32_0 = arith.constant 0 : i32
    %c0_i32_1 = arith.constant 0 : i32
    return %arg0, %c0_i32, %c0_i32_0 : i32, i32, i32
  }
  func.func @transform_1(%arg0: i32, %arg1: i32) -> (i32, i32, i32) {
    %c0_i32 = arith.constant 0 : i32
    %c0_i32_0 = arith.constant 0 : i32
    return %arg0, %arg1, %c0_i32 : i32, i32, i32
  }
  func.func @transform_2(%arg0: i32, %arg1: i32) -> (i32, i32) {
    %c0_i32 = arith.constant 0 : i32
    %c0_i32_0 = arith.constant 0 : i32
    %c0_i32_1 = arith.constant 0 : i32
    return %c0_i32, %c0_i32_0 : i32, i32
  }
  func.func @transform_3(%arg0: i32, %arg1: i32) -> (i32, i32) {
    %c0_i32 = arith.constant 0 : i32
    %c0_i32_0 = arith.constant 0 : i32
    %c0_i32_1 = arith.constant 0 : i32
    return %c0_i32, %c0_i32_0 : i32, i32
  }
  func.func @transform_4(%arg0: i32, %arg1: i32) -> (i32, i32) {
    %c0_i32 = arith.constant 0 : i32
    %c0_i32_0 = arith.constant 0 : i32
    %c0_i32_1 = arith.constant 0 : i32
    return %c0_i32, %c0_i32_0 : i32, i32
  }
  func.func @transform_5(%arg0: i32, %arg1: i32) -> (i32, i32) {
    %c0_i32 = arith.constant 0 : i32
    %c0_i32_0 = arith.constant 0 : i32
    %c0_i32_1 = arith.constant 0 : i32
    return %c0_i32, %c0_i32_0 : i32, i32
  }
  func.func @transform_6(%arg0: i32, %arg1: i32) -> (i32, i32) {
    %c0_i32 = arith.constant 0 : i32
    %c0_i32_0 = arith.constant 0 : i32
    %c0_i32_1 = arith.constant 0 : i32
    return %c0_i32, %c0_i32_0 : i32, i32
  }
  func.func @transform_7(%arg0: i32, %arg1: i32) -> (i32, i32) {
    %c0_i32 = arith.constant 0 : i32
    %c0_i32_0 = arith.constant 0 : i32
    %c0_i32_1 = arith.constant 0 : i32
    return %c0_i32, %c0_i32_0 : i32, i32
  }
  func.func @transform_8(%arg0: i32, %arg1: i32) -> (i32, i32) {
    %c0_i32 = arith.constant 0 : i32
    %c0_i32_0 = arith.constant 0 : i32
    %c0_i32_1 = arith.constant 0 : i32
    return %c0_i32, %c0_i32_0 : i32, i32
  }
  func.func @transform_9(%arg0: i32, %arg1: i32) -> (i32, i32) {
    %c0_i32 = arith.constant 0 : i32
    %c0_i32_0 = arith.constant 0 : i32
    %c0_i32_1 = arith.constant 0 : i32
    return %c0_i32, %c0_i32_0 : i32, i32
  }
  func.func @transform_10(%arg0: i32, %arg1: i32) -> (i32, i32) {
    %c0_i32 = arith.constant 0 : i32
    %c0_i32_0 = arith.constant 0 : i32
    %c0_i32_1 = arith.constant 0 : i32
    return %c0_i32, %c0_i32_0 : i32, i32
  }
  func.func @transform_11(%arg0: i32, %arg1: i32) -> (i32, i32) {
    %c0_i32 = arith.constant 0 : i32
    %c0_i32_0 = arith.constant 0 : i32
    %c0_i32_1 = arith.constant 0 : i32
    return %c0_i32, %c0_i32_0 : i32, i32
  }
  func.func @transform_12(%arg0: i32, %arg1: i32) -> (i32, i32) {
    %c0_i32 = arith.constant 0 : i32
    %c0_i32_0 = arith.constant 0 : i32
    %c0_i32_1 = arith.constant 0 : i32
    return %c0_i32, %c0_i32_0 : i32, i32
  }
  func.func @transform_13(%arg0: i32, %arg1: i32) -> (i32, i32) {
    %c0_i32 = arith.constant 0 : i32
    %c0_i32_0 = arith.constant 0 : i32
    %c0_i32_1 = arith.constant 0 : i32
    return %c0_i32, %c0_i32_0 : i32, i32
  }
  func.func @transform_14(%arg0: i32, %arg1: i32) -> (i32, i32) {
    %c0_i32 = arith.constant 0 : i32
    %c0_i32_0 = arith.constant 0 : i32
    %c0_i32_1 = arith.constant 0 : i32
    return %c0_i32, %c0_i32_0 : i32, i32
  }
  func.func @transform_15(%arg0: i32, %arg1: i32) -> (i32, i32) {
    %c0_i32 = arith.constant 0 : i32
    %c0_i32_0 = arith.constant 0 : i32
    %c0_i32_1 = arith.constant 0 : i32
    return %c0_i32, %c0_i32_0 : i32, i32
  }
  func.func @transform_16(%arg0: i32, %arg1: i32) -> (i32, i32, i32) {
    %c0_i32 = arith.constant 0 : i32
    %c0_i32_0 = arith.constant 0 : i32
    return %arg0, %arg1, %c0_i32 : i32, i32, i32
  }
}

</mosaic_0001>

<llo_original>
// kernel: tpu_custom_call.1
$region0: #{tpu_custom_call.1}
  #allocation0 [shape = 'u32[]', space=smem, size = 0x4, offset = 0x4, fixed_abs, tag = 'smem constant byte address 0x4 - core index']
  #allocation1 [shape = 'u32[72,128]{1,0:T(1,128)}', space=vmem, size = 0x9000, scoped, tag = 'internal scratch']
  #allocation2 [shape = 'bf16[4,16,8]{2,1,0:T(8,128)(2,1)}', space=vmem, size = 0x4000, scoped, tag = 'scratch operand']
  #allocation3 [shape = 'bf16[4,16,8]{2,1,0:T(8,128)(2,1)}', space=vmem, size = 0x4000, scoped, tag = 'scratch operand']
  %s0 = inlined_call_operand.vmem [shape: f32[2,16,32], index: 0, kind: input, shape index: {}]
  %s1 = inlined_call_operand.vmem [shape: f32[2,16,32], index: 1, kind: input, shape index: {}]
  %s2 = inlined_call_operand.vmem [shape: bf16[32,32], index: 2, kind: input, shape index: {}]
  %s3 = inlined_call_operand.vmem [shape: f32[1,32], index: 3, kind: input, shape index: {}]
  %s4 = inlined_call_operand.hbm [shape: bf16[32,64], index: 4, kind: input, shape index: {}]
  %s5 = inlined_call_operand.vmem [shape: f32[1,64], index: 5, kind: input, shape index: {}]
  %s6 = inlined_call_operand.hbm [shape: bf16[32,32], index: 6, kind: input, shape index: {}]
  %s7 = inlined_call_operand.vmem [shape: f32[1,32], index: 7, kind: input, shape index: {}]
  %s8 = inlined_call_operand.vmem [shape: f32[1,32], index: 8, kind: input, shape index: {}]
  %s9 = inlined_call_operand.vmem [shape: f32[1,32], index: 9, kind: input, shape index: {}]
  %s10 = inlined_call_operand.hbm [shape: bf16[32,128], index: 10, kind: input, shape index: {}]
  %s11 = inlined_call_operand.vmem [shape: f32[1,128], index: 11, kind: input, shape index: {}]
  %s12 = inlined_call_operand.vmem [shape: bf16[128,32], index: 12, kind: input, shape index: {}]
  %s13 = inlined_call_operand.vmem [shape: f32[1,32], index: 13, kind: input, shape index: {}]
  %s14 = inlined_call_operand.vmem [shape: f32[1,32], index: 14, kind: input, shape index: {}]
  %s15 = inlined_call_operand.vmem [shape: f32[1,32], index: 15, kind: input, shape index: {}]
  %s16 = inlined_call_operand.hbm [shape: f32[2,16,32], index: 16, kind: output, shape index: {}]
  %s17 = sld [smem:[#allocation0]]
  $region113: #{tpu_custom_call.1} parent=0
    _
  %s19 = ssub.s32 1, %s17
  %s20 = scalar_select 0, %s19, %s17
  $region1: #{tpu_custom_call.1} parent=0
    #allocation4 [shape = 'u8[8192]{0}', space=vmem, size = 0x2000, scoped, tag = 'input window, operand 4, single buffered']
    #allocation5 [shape = 's32[2]{0}', space=sflag, size = 0x8, scoped, tag = 'scoped memory for tpu_custom_call.1']
    #allocation6 [shape = 's32[2]{0}', space=sflag, size = 0x8, scoped, tag = 'scoped memory for tpu_custom_call.1']
    #allocation7 [shape = 'u8[8192]{0}', space=vmem, size = 0x2000, scoped, tag = 'input window, operand 6, single buffered']
    #allocation8 [shape = 's32[1]{0}', space=sflag, size = 0x4, scoped, tag = 'scoped memory for tpu_custom_call.1']
    #allocation9 [shape = 'u8[8192]{0}', space=vmem, size = 0x2000, scoped, tag = 'input window, operand 10, single buffered']
    #allocation10 [shape = 'u8[8192]{0}', space=vmem, size = 0x2000, scoped, tag = 'output window, operand 0']
    %21 = vsyncpa [#allocation5], 0
    %22 = vsyncpa [#allocation8], 0
    %23 = vsyncpa [#allocation6], 0
    %s24 = scalar_lea.sflag [#allocation6], 1
    %25 = vsyncpa %s24, 0
    loop: start=0, step=1, limit=6
    $region2: #{tpu_custom_call.1} parent=1 // loop_pre_header
      _
    $region3: #{tpu_custom_call.1} parent=1 // loop_header
      %s27 = sphi 0, %s31
      %p28 = scmp.ge.s32.totalorder %s27, 6
      %s34 = sphi 0, %s46
      %s35 = sphi 0, %s42
      %s36 = sphi 0, %s34
      %s37 = sphi 0, %s35
      %s38 = sphi 0, %s36
      %s39 = sphi 0, %s37
      %s49 = sphi 0, %s51
      %s52 = sphi 0, %s49
      %s53 = sphi 0, %s52
      %s69 = sphi 0, %s53
      %s77 = sphi 0, %s79
      %s80 = sphi 0, %s77
      %s81 = sphi 0, %s80
      %s97 = sphi 0, %s81
      %s101 = sphi 0, %s101
      %s103 = sphi 0, %s101
      %s104 = sphi 0, %s103
      %s118 = sphi 0, %s104
      %s122 = sphi 0, %s122
      %s124 = sphi 0, %s122
      %s125 = sphi 0, %s124
      %s139 = sphi 0, %s125
      %s143 = sphi 0, %s143
      %s145 = sphi 0, %s143
      %s146 = sphi 0, %s145
      %s160 = sphi 0, %s146
      %s164 = sphi 0, %s164
      %s166 = sphi 0, %s164
      %s167 = sphi 0, %s166
      %s181 = sphi 0, %s167
      %s185 = sphi 0, %s185
      %s187 = sphi 0, %s185
      %s188 = sphi 0, %s187
      %s202 = sphi 0, %s188
      %s206 = sphi 0, %s206
      %s208 = sphi 0, %s206
      %s209 = sphi 0, %s208
      %s223 = sphi 0, %s209
      %s227 = sphi 0, %s227
      %s229 = sphi 0, %s227
      %s230 = sphi 0, %s229
      %s244 = sphi 0, %s230
      %s248 = sphi 0, %s248
      %s250 = sphi 0, %s248
      %s251 = sphi 0, %s250
      %s265 = sphi 0, %s251
      %s269 = sphi 0, %s269
      %s271 = sphi 0, %s269
      %s272 = sphi 0, %s271
      %s286 = sphi 0, %s272
      %s290 = sphi 0, %s290
      %s292 = sphi 0, %s290
      %s293 = sphi 0, %s292
      %s307 = sphi 0, %s293
      %s311 = sphi 0, %s311
      %s313 = sphi 0, %s311
      %s314 = sphi 0, %s313
      %s328 = sphi 0, %s314
      %s332 = sphi 0, %s332
      %s334 = sphi 0, %s332
      %s335 = sphi 0, %s334
      %s349 = sphi 0, %s335
      %s353 = sphi 0, %s353
      %s355 = sphi 0, %s353
      %s356 = sphi 0, %s355
      %s370 = sphi 0, %s356
      %s374 = sphi 0, %s374
      %s376 = sphi 0, %s374
      %s377 = sphi 0, %s376
      %s391 = sphi 0, %s377
      %s399 = sphi 0, %s401
      %s402 = sphi 0, %s399
      %s403 = sphi 0, %s402
      %s419 = sphi 0, %s403
    $region4: #{tpu_custom_call.1} parent=1 // loop_header_branch
      %30 = sbr.rel (%p28) target = $region8
    $region5: #{tpu_custom_call.1} parent=1 // loop_body
      %s32 = ssub.s32 %s27, 1
      %s33 = ssub.s32 %s27, 2
      %s40 = sadd.s32 1, %s35
      %p41 = scmp.ge.s32.totalorder %s40, 2
      %s42 = scalar_select %p41, 0, %s40
      %s43 = sadd.s32 1, %s34
      %s44 = scalar_select %p41, %s43, %s34
      %p45 = scmp.ge.s32.totalorder %s44, 2
      %s46 = scalar_select %p45, 0, %s44
      %s47 = ssub.s32 %s34, %s46
      %p48 = scmp.eq.s32.totalorder %s47, 0
      %s50 = sadd.s32 %s49, 1
      %s51 = scalar_select %p48, %s49, %s50
      %p54 = pneg %p48
      %p55 = scmp.eq.s32.totalorder %s27, 3
      %p56 = por %p54, %p55
      %p57 = scmp.ne.s32.totalorder %s49, %s52
      %p58 = scmp.eq.s32.totalorder %s27, 0
      %p59 = por %p57, %p58
      %p60 = scmp.ne.s32.totalorder %s49, %s52
      %p61 = scmp.eq.s32.totalorder %s32, 3
      %p62 = por %p60, %p61
      %p63 = scmp.ne.s32.totalorder %s52, %s53
      %p64 = scmp.eq.s32.totalorder %s32, 0
      %p65 = por %p63, %p64
      %p66 = scmp.ne.s32.totalorder %s52, %s53
      %p67 = scmp.eq.s32.totalorder %s33, 3
      %p68 = por %p66, %p67
      %p70 = scmp.ne.s32.totalorder %s53, %s69
      %p71 = scmp.eq.s32.totalorder %s33, 0
      %p72 = por %p70, %p71
      %s73 = ssub.s32 %s34, %s46
      %s74 = ssub.s32 %s35, %s42
      %s75 = sor.u32 %s73, %s74
      %p76 = scmp.eq.s32.totalorder %s75, 0
      %s78 = sadd.s32 %s77, 1
      %s79 = scalar_select %p76, %s77, %s78
      %p82 = pneg %p76
      %p83 = scmp.eq.s32.totalorder %s27, 3
      %p84 = por %p82, %p83
      %p85 = scmp.ne.s32.totalorder %s77, %s80
      %p86 = scmp.eq.s32.totalorder %s27, 0
      %p87 = por %p85, %p86
      %p88 = scmp.ne.s32.totalorder %s77, %s80
      %p89 = scmp.eq.s32.totalorder %s32, 3
      %p90 = por %p88, %p89
      %p91 = scmp.ne.s32.totalorder %s80, %s81
      %p92 = scmp.eq.s32.totalorder %s32, 0
      %p93 = por %p91, %p92
      %p94 = scmp.ne.s32.totalorder %s80, %s81
      %p95 = scmp.eq.s32.totalorder %s33, 3
      %p96 = por %p94, %p95
      %p98 = scmp.ne.s32.totalorder %s81, %s97
      %p99 = scmp.eq.s32.totalorder %s33, 0
      %p100 = por %p98, %p99
      %s102 = sadd.s32 %s101, 1
      %p105 = scmp.eq.s32.totalorder %s27, 3
      %p106 = scmp.ne.s32.totalorder %s101, %s103
      %p107 = scmp.eq.s32.totalorder %s27, 0
      %p108 = por %p106, %p107
      %p109 = scmp.ne.s32.totalorder %s101, %s103
      %p110 = scmp.eq.s32.totalorder %s32, 3
      %p111 = por %p109, %p110
      %p112 = scmp.ne.s32.totalorder %s103, %s104
      %p113 = scmp.eq.s32.totalorder %s32, 0
      %p114 = por %p112, %p113
      %p115 = scmp.ne.s32.totalorder %s103, %s104
      %p116 = scmp.eq.s32.totalorder %s33, 3
      %p117 = por %p115, %p116
      %p119 = scmp.ne.s32.totalorder %s104, %s118
      %p120 = scmp.eq.s32.totalorder %s33, 0
      %p121 = por %p119, %p120
      %s123 = sadd.s32 %s122, 1
      %p126 = scmp.eq.s32.totalorder %s27, 3
      %p127 = scmp.ne.s32.totalorder %s122, %s124
      %p128 = scmp.eq.s32.totalorder %s27, 0
      %p129 = por %p127, %p128
      %p130 = scmp.ne.s32.totalorder %s122, %s124
      %p131 = scmp.eq.s32.totalorder %s32, 3
      %p132 = por %p130, %p131
      %p133 = scmp.ne.s32.totalorder %s124, %s125
      %p134 = scmp.eq.s32.totalorder %s32, 0
      %p135 = por %p133, %p134
      %p136 = scmp.ne.s32.totalorder %s124, %s125
      %p137 = scmp.eq.s32.totalorder %s33, 3
      %p138 = por %p136, %p137
      %p140 = scmp.ne.s32.totalorder %s125, %s139
      %p141 = scmp.eq.s32.totalorder %s33, 0
      %p142 = por %p140, %p141
      %s144 = sadd.s32 %s143, 1
      %p147 = scmp.eq.s32.totalorder %s27, 3
      %p148 = scmp.ne.s32.totalorder %s143, %s145
      %p149 = scmp.eq.s32.totalorder %s27, 0
      %p150 = por %p148, %p149
      %p151 = scmp.ne.s32.totalorder %s143, %s145
      %p152 = scmp.eq.s32.totalorder %s32, 3
      %p153 = por %p151, %p152
      %p154 = scmp.ne.s32.totalorder %s145, %s146
      %p155 = scmp.eq.s32.totalorder %s32, 0
      %p156 = por %p154, %p155
      %p157 = scmp.ne.s32.totalorder %s145, %s146
      %p158 = scmp.eq.s32.totalorder %s33, 3
      %p159 = por %p157, %p158
      %p161 = scmp.ne.s32.totalorder %s146, %s160
      %p162 = scmp.eq.s32.totalorder %s33, 0
      %p163 = por %p161, %p162
      %s165 = sadd.s32 %s164, 1
      %p168 = scmp.eq.s32.totalorder %s27, 3
      %p169 = scmp.ne.s32.totalorder %s164, %s166
      %p170 = scmp.eq.s32.totalorder %s27, 0
      %p171 = por %p169, %p170
      %p172 = scmp.ne.s32.totalorder %s164, %s166
      %p173 = scmp.eq.s32.totalorder %s32, 3
      %p174 = por %p172, %p173
      %p175 = scmp.ne.s32.totalorder %s166, %s167
      %p176 = scmp.eq.s32.totalorder %s32, 0
      %p177 = por %p175, %p176
      %p178 = scmp.ne.s32.totalorder %s166, %s167
      %p179 = scmp.eq.s32.totalorder %s33, 3
      %p180 = por %p178, %p179
      %p182 = scmp.ne.s32.totalorder %s167, %s181
      %p183 = scmp.eq.s32.totalorder %s33, 0
      %p184 = por %p182, %p183
      %s186 = sadd.s32 %s185, 1
      %p189 = scmp.eq.s32.totalorder %s27, 3
      %p190 = scmp.ne.s32.totalorder %s185, %s187
      %p191 = scmp.eq.s32.totalorder %s27, 0
      %p192 = por %p190, %p191
      %p193 = scmp.ne.s32.totalorder %s185, %s187
      %p194 = scmp.eq.s32.totalorder %s32, 3
      %p195 = por %p193, %p194
      %p196 = scmp.ne.s32.totalorder %s187, %s188
      %p197 = scmp.eq.s32.totalorder %s32, 0
      %p198 = por %p196, %p197
      %p199 = scmp.ne.s32.totalorder %s187, %s188
      %p200 = scmp.eq.s32.totalorder %s33, 3
      %p201 = por %p199, %p200
      %p203 = scmp.ne.s32.totalorder %s188, %s202
      %p204 = scmp.eq.s32.totalorder %s33, 0
      %p205 = por %p203, %p204
      %s207 = sadd.s32 %s206, 1
      %p210 = scmp.eq.s32.totalorder %s27, 3
      %p211 = scmp.ne.s32.totalorder %s206, %s208
      %p212 = scmp.eq.s32.totalorder %s27, 0
      %p213 = por %p211, %p212
      %p214 = scmp.ne.s32.totalorder %s206, %s208
      %p215 = scmp.eq.s32.totalorder %s32, 3
      %p216 = por %p214, %p215
      %p217 = scmp.ne.s32.totalorder %s208, %s209
      %p218 = scmp.eq.s32.totalorder %s32, 0
      %p219 = por %p217, %p218
      %p220 = scmp.ne.s32.totalorder %s208, %s209
      %p221 = scmp.eq.s32.totalorder %s33, 3
      %p222 = por %p220, %p221
      %p224 = scmp.ne.s32.totalorder %s209, %s223
      %p225 = scmp.eq.s32.totalorder %s33, 0
      %p226 = por %p224, %p225
      %s228 = sadd.s32 %s227, 1
      %p231 = scmp.eq.s32.totalorder %s27, 3
      %p232 = scmp.ne.s32.totalorder %s227, %s229
      %p233 = scmp.eq.s32.totalorder %s27, 0
      %p234 = por %p232, %p233
      %p235 = scmp.ne.s32.totalorder %s227, %s229
      %p236 = scmp.eq.s32.totalorder %s32, 3
      %p237 = por %p235, %p236
      %p238 = scmp.ne.s32.totalorder %s229, %s230
      %p239 = scmp.eq.s32.totalorder %s32, 0
      %p240 = por %p238, %p239
      %p241 = scmp.ne.s32.totalorder %s229, %s230
      %p242 = scmp.eq.s32.totalorder %s33, 3
      %p243 = por %p241, %p242
      %p245 = scmp.ne.s32.totalorder %s230, %s244
      %p246 = scmp.eq.s32.totalorder %s33, 0
      %p247 = por %p245, %p246
      %s249 = sadd.s32 %s248, 1
      %p252 = scmp.eq.s32.totalorder %s27, 3
      %p253 = scmp.ne.s32.totalorder %s248, %s250
      %p254 = scmp.eq.s32.totalorder %s27, 0
      %p255 = por %p253, %p254
      %p256 = scmp.ne.s32.totalorder %s248, %s250
      %p257 = scmp.eq.s32.totalorder %s32, 3
      %p258 = por %p256, %p257
      %p259 = scmp.ne.s32.totalorder %s250, %s251
      %p260 = scmp.eq.s32.totalorder %s32, 0
      %p261 = por %p259, %p260
      %p262 = scmp.ne.s32.totalorder %s250, %s251
      %p263 = scmp.eq.s32.totalorder %s33, 3
      %p264 = por %p262, %p263
      %p266 = scmp.ne.s32.totalorder %s251, %s265
      %p267 = scmp.eq.s32.totalorder %s33, 0
      %p268 = por %p266, %p267
      %s270 = sadd.s32 %s269, 1
      %p273 = scmp.eq.s32.totalorder %s27, 3
      %p274 = scmp.ne.s32.totalorder %s269, %s271
      %p275 = scmp.eq.s32.totalorder %s27, 0
      %p276 = por %p274, %p275
      %p277 = scmp.ne.s32.totalorder %s269, %s271
      %p278 = scmp.eq.s32.totalorder %s32, 3
      %p279 = por %p277, %p278
      %p280 = scmp.ne.s32.totalorder %s271, %s272
      %p281 = scmp.eq.s32.totalorder %s32, 0
      %p282 = por %p280, %p281
      %p283 = scmp.ne.s32.totalorder %s271, %s272
      %p284 = scmp.eq.s32.totalorder %s33, 3
      %p285 = por %p283, %p284
      %p287 = scmp.ne.s32.totalorder %s272, %s286
      %p288 = scmp.eq.s32.totalorder %s33, 0
      %p289 = por %p287, %p288
      %s291 = sadd.s32 %s290, 1
      %p294 = scmp.eq.s32.totalorder %s27, 3
      %p295 = scmp.ne.s32.totalorder %s290, %s292
      %p296 = scmp.eq.s32.totalorder %s27, 0
      %p297 = por %p295, %p296
      %p298 = scmp.ne.s32.totalorder %s290, %s292
      %p299 = scmp.eq.s32.totalorder %s32, 3
      %p300 = por %p298, %p299
      %p301 = scmp.ne.s32.totalorder %s292, %s293
      %p302 = scmp.eq.s32.totalorder %s32, 0
      %p303 = por %p301, %p302
      %p304 = scmp.ne.s32.totalorder %s292, %s293
      %p305 = scmp.eq.s32.totalorder %s33, 3
      %p306 = por %p304, %p305
      %p308 = scmp.ne.s32.totalorder %s293, %s307
      %p309 = scmp.eq.s32.totalorder %s33, 0
      %p310 = por %p308, %p309
      %s312 = sadd.s32 %s311, 1
      %p315 = scmp.eq.s32.totalorder %s27, 3
      %p316 = scmp.ne.s32.totalorder %s311, %s313
      %p317 = scmp.eq.s32.totalorder %s27, 0
      %p318 = por %p316, %p317
      %p319 = scmp.ne.s32.totalorder %s311, %s313
      %p320 = scmp.eq.s32.totalorder %s32, 3
      %p321 = por %p319, %p320
      %p322 = scmp.ne.s32.totalorder %s313, %s314
      %p323 = scmp.eq.s32.totalorder %s32, 0
      %p324 = por %p322, %p323
      %p325 = scmp.ne.s32.totalorder %s313, %s314
      %p326 = scmp.eq.s32.totalorder %s33, 3
      %p327 = por %p325, %p326
      %p329 = scmp.ne.s32.totalorder %s314, %s328
      %p330 = scmp.eq.s32.totalorder %s33, 0
      %p331 = por %p329, %p330
      %s333 = sadd.s32 %s332, 1
      %p336 = scmp.eq.s32.totalorder %s27, 3
      %p337 = scmp.ne.s32.totalorder %s332, %s334
      %p338 = scmp.eq.s32.totalorder %s27, 0
      %p339 = por %p337, %p338
      %p340 = scmp.ne.s32.totalorder %s332, %s334
      %p341 = scmp.eq.s32.totalorder %s32, 3
      %p342 = por %p340, %p341
      %p343 = scmp.ne.s32.totalorder %s334, %s335
      %p344 = scmp.eq.s32.totalorder %s32, 0
      %p345 = por %p343, %p344
      %p346 = scmp.ne.s32.totalorder %s334, %s335
      %p347 = scmp.eq.s32.totalorder %s33, 3
      %p348 = por %p346, %p347
      %p350 = scmp.ne.s32.totalorder %s335, %s349
      %p351 = scmp.eq.s32.totalorder %s33, 0
      %p352 = por %p350, %p351
      %s354 = sadd.s32 %s353, 1
      %p357 = scmp.eq.s32.totalorder %s27, 3
      %p358 = scmp.ne.s32.totalorder %s353, %s355
      %p359 = scmp.eq.s32.totalorder %s27, 0
      %p360 = por %p358, %p359
      %p361 = scmp.ne.s32.totalorder %s353, %s355
      %p362 = scmp.eq.s32.totalorder %s32, 3
      %p363 = por %p361, %p362
      %p364 = scmp.ne.s32.totalorder %s355, %s356
      %p365 = scmp.eq.s32.totalorder %s32, 0
      %p366 = por %p364, %p365
      %p367 = scmp.ne.s32.totalorder %s355, %s356
      %p368 = scmp.eq.s32.totalorder %s33, 3
      %p369 = por %p367, %p368
      %p371 = scmp.ne.s32.totalorder %s356, %s370
      %p372 = scmp.eq.s32.totalorder %s33, 0
      %p373 = por %p371, %p372
      %s375 = sadd.s32 %s374, 1
      %p378 = scmp.eq.s32.totalorder %s27, 3
      %p379 = scmp.ne.s32.totalorder %s374, %s376
      %p380 = scmp.eq.s32.totalorder %s27, 0
      %p381 = por %p379, %p380
      %p382 = scmp.ne.s32.totalorder %s374, %s376
      %p383 = scmp.eq.s32.totalorder %s32, 3
      %p384 = por %p382, %p383
      %p385 = scmp.ne.s32.totalorder %s376, %s377
      %p386 = scmp.eq.s32.totalorder %s32, 0
      %p387 = por %p385, %p386
      %p388 = scmp.ne.s32.totalorder %s376, %s377
      %p389 = scmp.eq.s32.totalorder %s33, 3
      %p390 = por %p388, %p389
      %p392 = scmp.ne.s32.totalorder %s377, %s391
      %p393 = scmp.eq.s32.totalorder %s33, 0
      %p394 = por %p392, %p393
      %s395 = ssub.s32 %s34, %s46
      %s396 = ssub.s32 %s35, %s42
      %s397 = sor.u32 %s395, %s396
      %p398 = scmp.eq.s32.totalorder %s397, 0
      %s400 = sadd.s32 %s399, 1
      %s401 = scalar_select %p398, %s399, %s400
      %p404 = pneg %p398
      %p405 = scmp.eq.s32.totalorder %s27, 3
      %p406 = por %p404, %p405
      %p407 = scmp.ne.s32.totalorder %s399, %s402
      %p408 = scmp.eq.s32.totalorder %s27, 0
      %p409 = por %p407, %p408
      %p410 = scmp.ne.s32.totalorder %s399, %s402
      %p411 = scmp.eq.s32.totalorder %s32, 3
      %p412 = por %p410, %p411
      %p413 = scmp.ne.s32.totalorder %s402, %s403
      %p414 = scmp.eq.s32.totalorder %s32, 0
      %p415 = por %p413, %p414
      %p416 = scmp.ne.s32.totalorder %s402, %s403
      %p417 = scmp.eq.s32.totalorder %s33, 3
      %p418 = por %p416, %p417
      %p420 = scmp.ne.s32.totalorder %s403, %s419
      %p421 = scmp.eq.s32.totalorder %s33, 0
      %p422 = por %p420, %p421
      %p423 = scmp.le.s32.totalorder 1, %s27
      %p424 = scmp.lt.s32.totalorder %s27, 5
      %p425 = pnand %p423, %p424
      %p426 = pneg %p425
      // Predicated region
      $region9: #{tpu_custom_call.1} parent=5 // pred_check
        _
      $region10: #{tpu_custom_call.1} parent=5 // pred_check_branch
        %428 = sbr.rel (%p425) target = $region12
      $region11: #{tpu_custom_call.1} parent=5 // pred_region
        %s429 = ssub.s32 %s27, 1
        // Predicated region
        $region13: #{tpu_custom_call.1} parent=11 // pred_check
          %p430 = pneg %p114
        $region14: #{tpu_custom_call.1} parent=11 // pred_check_branch
          %432 = sbr.rel (%p430) target = $region16
        $region15: #{tpu_custom_call.1} parent=11 // pred_region
          _
        $region16: #{tpu_custom_call.1} parent=11 // pred_fallthru
          _
        // Predicated region
        $region17: #{tpu_custom_call.1} parent=11 // pred_check
          %p433 = pneg %p135
        $region18: #{tpu_custom_call.1} parent=11 // pred_check_branch
          %435 = sbr.rel (%p433) target = $region20
        $region19: #{tpu_custom_call.1} parent=11 // pred_region
          _
        $region20: #{tpu_custom_call.1} parent=11 // pred_fallthru
          _
        // Predicated region
        $region21: #{tpu_custom_call.1} parent=11 // pred_check
          %p436 = pneg %p156
        $region22: #{tpu_custom_call.1} parent=11 // pred_check_branch
          %438 = sbr.rel (%p436) target = $region24
        $region23: #{tpu_custom_call.1} parent=11 // pred_region
          %440 = vsyncadd [#allocation5], 0
          %s441 = sshll.u32 %s4, 4
          %s442 = int_to_ptr.hbm [resolvable:$true] %s441
          %s443 = sshll.u32 [#allocation4], 4
          %s444 = int_to_ptr.vmem [resolvable:$true] %s443
          %449 = dma.hbm_to_vmem [thread:$0]  %s442, 256, %s444, [#allocation5], 64, 64, 4
        $region24: #{tpu_custom_call.1} parent=11 // pred_fallthru
          _
        // Predicated region
        $region25: #{tpu_custom_call.1} parent=11 // pred_check
          %p450 = pneg %p177
        $region26: #{tpu_custom_call.1} parent=11 // pred_check_branch
          %452 = sbr.rel (%p450) target = $region28
        $region27: #{tpu_custom_call.1} parent=11 // pred_region
          _
        $region28: #{tpu_custom_call.1} parent=11 // pred_fallthru
          _
        // Predicated region
        $region29: #{tpu_custom_call.1} parent=11 // pred_check
          %p453 = pneg %p198
        $region30: #{tpu_custom_call.1} parent=11 // pred_check_branch
          %455 = sbr.rel (%p453) target = $region32
        $region31: #{tpu_custom_call.1} parent=11 // pred_region
          %457 = vsyncadd [#allocation8], 0
          %s458 = sshll.u32 %s6, 4
          %s459 = int_to_ptr.hbm [resolvable:$true] %s458
          %s460 = sshll.u32 [#allocation7], 4
          %s461 = int_to_ptr.vmem [resolvable:$true] %s460
          %466 = dma.hbm_to_vmem [thread:$0]  %s459, 256, %s461, [#allocation8], 64, 64, 4
        $region32: #{tpu_custom_call.1} parent=11 // pred_fallthru
          _
        // Predicated region
        $region33: #{tpu_custom_call.1} parent=11 // pred_check
          %p467 = pneg %p219
        $region34: #{tpu_custom_call.1} parent=11 // pred_check_branch
          %469 = sbr.rel (%p467) target = $region36
        $region35: #{tpu_custom_call.1} parent=11 // pred_region
          _
        $region36: #{tpu_custom_call.1} parent=11 // pred_fallthru
          _
        // Predicated region
        $region37: #{tpu_custom_call.1} parent=11 // pred_check
          %p470 = pneg %p240
        $region38: #{tpu_custom_call.1} parent=11 // pred_check_branch
          %472 = sbr.rel (%p470) target = $region40
        $region39: #{tpu_custom_call.1} parent=11 // pred_region
          _
        $region40: #{tpu_custom_call.1} parent=11 // pred_fallthru
          _
        // Predicated region
        $region41: #{tpu_custom_call.1} parent=11 // pred_check
          %p473 = pneg %p261
        $region42: #{tpu_custom_call.1} parent=11 // pred_check_branch
          %475 = sbr.rel (%p473) target = $region44
        $region43: #{tpu_custom_call.1} parent=11 // pred_region
          _
        $region44: #{tpu_custom_call.1} parent=11 // pred_fallthru
          _
        // Predicated region
        $region45: #{tpu_custom_call.1} parent=11 // pred_check
          %p476 = pneg %p282
        $region46: #{tpu_custom_call.1} parent=11 // pred_check_branch
          %478 = sbr.rel (%p476) target = $region48
        $region47: #{tpu_custom_call.1} parent=11 // pred_region
          %480 = vsyncadd [#allocation8], 0
          %s481 = sshll.u32 %s10, 4
          %s482 = int_to_ptr.hbm [resolvable:$true] %s481
          %s483 = sshll.u32 [#allocation9], 4
          %s484 = int_to_ptr.vmem [resolvable:$true] %s483
          %489 = dma.hbm_to_vmem [thread:$0]  %s482, 256, %s484, [#allocation8], 64, 64, 4
        $region48: #{tpu_custom_call.1} parent=11 // pred_fallthru
          _
        // Predicated region
        $region49: #{tpu_custom_call.1} parent=11 // pred_check
          %p490 = pneg %p303
        $region50: #{tpu_custom_call.1} parent=11 // pred_check_branch
          %492 = sbr.rel (%p490) target = $region52
        $region51: #{tpu_custom_call.1} parent=11 // pred_region
          _
        $region52: #{tpu_custom_call.1} parent=11 // pred_fallthru
          _
        // Predicated region
        $region53: #{tpu_custom_call.1} parent=11 // pred_check
          %p493 = pneg %p324
        $region54: #{tpu_custom_call.1} parent=11 // pred_check_branch
          %495 = sbr.rel (%p493) target = $region56
        $region55: #{tpu_custom_call.1} parent=11 // pred_region
          _
        $region56: #{tpu_custom_call.1} parent=11 // pred_fallthru
          _
        // Predicated region
        $region57: #{tpu_custom_call.1} parent=11 // pred_check
          %p496 = pneg %p345
        $region58: #{tpu_custom_call.1} parent=11 // pred_check_branch
          %498 = sbr.rel (%p496) target = $region60
        $region59: #{tpu_custom_call.1} parent=11 // pred_region
          _
        $region60: #{tpu_custom_call.1} parent=11 // pred_fallthru
          _
        // Predicated region
        $region61: #{tpu_custom_call.1} parent=11 // pred_check
          %p499 = pneg %p366
        $region62: #{tpu_custom_call.1} parent=11 // pred_check_branch
          %501 = sbr.rel (%p499) target = $region64
        $region63: #{tpu_custom_call.1} parent=11 // pred_region
          _
        $region64: #{tpu_custom_call.1} parent=11 // pred_fallthru
          _
        // Predicated region
        $region65: #{tpu_custom_call.1} parent=11 // pred_check
          %p502 = pneg %p387
        $region66: #{tpu_custom_call.1} parent=11 // pred_check_branch
          %504 = sbr.rel (%p502) target = $region68
        $region67: #{tpu_custom_call.1} parent=11 // pred_region
          _
        $region68: #{tpu_custom_call.1} parent=11 // pred_fallthru
          _
      $region12: #{tpu_custom_call.1} parent=5 // pred_fallthru
        _
      %p505 = scmp.lt.s32.totalorder %s27, 4
      // Predicated region
      $region69: #{tpu_custom_call.1} parent=5 // pred_check
        %p506 = pneg %p505
      $region70: #{tpu_custom_call.1} parent=5 // pred_check_branch
        %508 = sbr.rel (%p506) target = $region72
      $region71: #{tpu_custom_call.1} parent=5 // pred_region
        // Predicated region
        $region73: #{tpu_custom_call.1} parent=71 // pred_check
          %p509 = pneg %p59
        $region74: #{tpu_custom_call.1} parent=71 // pred_check_branch
          %511 = sbr.rel (%p509) target = $region76
        $region75: #{tpu_custom_call.1} parent=71 // pred_region
          %p512 = scmp.lt.s32.totalorder %s34, 1
          %s513 = scalar_select %p512, %s34, 1
          %s514 = smul.addr %s513, 2
          %s515 = smul.addr %s514, 8
          %s516 = scalar_lea.vmem %s0, %s515
        $region76: #{tpu_custom_call.1} parent=71 // pred_fallthru
          _
        // Predicated region
        $region77: #{tpu_custom_call.1} parent=71 // pred_check
          %p517 = pneg %p87
        $region78: #{tpu_custom_call.1} parent=71 // pred_check_branch
          %519 = sbr.rel (%p517) target = $region80
        $region79: #{tpu_custom_call.1} parent=71 // pred_region
          %p520 = scmp.lt.s32.totalorder %s34, 1
          %s521 = scalar_select %p520, %s34, 1
          %p522 = scmp.lt.s32.totalorder %s35, 1
          %s523 = scalar_select %p522, %s35, 1
          %s524 = smul.addr %s521, 2
          %s525 = sadd.s32 %s523, %s524
          %s526 = smul.addr %s525, 8
          %s527 = scalar_lea.vmem %s1, %s526
        $region80: #{tpu_custom_call.1} parent=71 // pred_fallthru
          _
      $region72: #{tpu_custom_call.1} parent=5 // pred_fallthru
        _
      %p528 = scmp.le.s32.totalorder 1, %s27
      %p529 = scmp.lt.s32.totalorder %s27, 5
      %p530 = pnand %p528, %p529
      %p531 = pneg %p530
      // Predicated region
      $region81: #{tpu_custom_call.1} parent=5 // pred_check
        _
      $region82: #{tpu_custom_call.1} parent=5 // pred_check_branch
        %533 = sbr.rel (%p530) target = $region84
      $region83: #{tpu_custom_call.1} parent=5 // pred_region
        %s534 = ssub.s32 %s27, 1
        // Predicated region
        $region85: #{tpu_custom_call.1} parent=83 // pred_check
          %p535 = pneg %p156
        $region86: #{tpu_custom_call.1} parent=83 // pred_check_branch
          %537 = sbr.rel (%p535) target = $region88
        $region87: #{tpu_custom_call.1} parent=83 // pred_region
          %539 = dma.done [#allocation5], 256
        $region88: #{tpu_custom_call.1} parent=83 // pred_fallthru
          _
        // Predicated region
        $region89: #{tpu_custom_call.1} parent=83 // pred_check
          %p540 = pneg %p198
        $region90: #{tpu_custom_call.1} parent=83 // pred_check_branch
          %542 = sbr.rel (%p540) target = $region92
        $region91: #{tpu_custom_call.1} parent=83 // pred_region
          %544 = dma.done [#allocation8], 256
        $region92: #{tpu_custom_call.1} parent=83 // pred_fallthru
          _
        // Predicated region
        $region93: #{tpu_custom_call.1} parent=83 // pred_check
          %p545 = pneg %p282
        $region94: #{tpu_custom_call.1} parent=83 // pred_check_branch
          %547 = sbr.rel (%p545) target = $region96
        $region95: #{tpu_custom_call.1} parent=83 // pred_region
          %549 = dma.done [#allocation8], 256
        $region96: #{tpu_custom_call.1} parent=83 // pred_fallthru
          _
        %p550 = scmp.lt.s32.totalorder %s36, 1
        %s551 = scalar_select %p550, %s36, 1
        %s552 = smul.addr %s551, 2
        %s553 = smul.addr %s552, 8
        %s554 = scalar_lea.vmem %s0, %s553
        %p555 = pneg %p65
        %p556 = pneg %p62
        %p557 = scmp.lt.s32.totalorder %s36, 1
        %s558 = scalar_select %p557, %s36, 1
        %p559 = scmp.lt.s32.totalorder %s37, 1
        %s560 = scalar_select %p559, %s37, 1
        %s561 = smul.addr %s558, 2
        %s562 = sadd.s32 %s560, %s561
        %s563 = smul.addr %s562, 8
        %s564 = scalar_lea.vmem %s1, %s563
        %p565 = pneg %p93
        %p566 = pneg %p90
        %p567 = pneg %p114
        %p568 = pneg %p111
        %p569 = pneg %p135
        %p570 = pneg %p132
        %p571 = pneg %p156
        %p572 = pneg %p153
        %p573 = pneg %p177
        %p574 = pneg %p174
        %p575 = pneg %p198
        %p576 = pneg %p195
        %p577 = pneg %p219
        %p578 = pneg %p216
        %p579 = pneg %p240
        %p580 = pneg %p237
        %p581 = pneg %p261
        %p582 = pneg %p258
        %p583 = pneg %p282
        %p584 = pneg %p279
        %p585 = pneg %p303
        %p586 = pneg %p300
        %p587 = pneg %p324
        %p588 = pneg %p321
        %p589 = pneg %p345
        %p590 = pneg %p342
        %p591 = pneg %p366
        %p592 = pneg %p363
        %p593 = pneg %p387
        %p594 = pneg %p384
        %p595 = pneg %p415
        %p596 = pneg %p412
        %s597 = sand.u32 %s402, 1
        %s598 = scalar_lea.sflag [#allocation6], %s597
        %s599 = sand.u32 %s402, 1
        %s600 = smul.addr %s599, 8
        %s601 = scalar_lea.vmem [#allocation10], %s600
        %p602 = scmp.lt.s32.totalorder %s36, 1
        %s603 = scalar_select %p602, %s36, 1
        %s604 = smul.addr %s603, 2
        %s605 = smul.addr %s604, 8
        %s606 = scalar_lea.vmem %s0, %s605
        %p607 = scmp.lt.s32.totalorder %s36, 1
        %s608 = scalar_select %p607, %s36, 1
        %p609 = scmp.lt.s32.totalorder %s37, 1
        %s610 = scalar_select %p609, %s37, 1
        %s611 = smul.addr %s608, 2
        %s612 = sadd.s32 %s610, %s611
        %s613 = smul.addr %s612, 8
        %s614 = scalar_lea.vmem %s1, %s613
        %p616 = scmp.eq.s32.totalorder %s37, 0
        // Predicated region
        $region97: #{tpu_custom_call.1} parent=83 // pred_check
          %p617 = pneg %p616
        $region98: #{tpu_custom_call.1} parent=83 // pred_check_branch
          %619 = sbr.rel (%p617) target = $region100
        $region99: #{tpu_custom_call.1} parent=83 // pred_region
          %v620 = vld [vmem:[%s606] sm:$0xff]
          %v621 = vld [vmem:[%s606 + $0x8] sm:$0xff]
          %v622 = vpack.c.bf16 %v621, %v620
          %v623 = vld [vmem:[#allocation4] sm:$0xf]
          %v624 = vld [vmem:[#allocation4 + $0x4] sm:$0xf]
          %v625 = vld [vmem:[#allocation4 + $0x8] sm:$0xf]
          %v626 = vld [vmem:[#allocation4 + $0xc] sm:$0xf]
          %v627 = vld [vmem:[%s5] sm:$0x1]
          %v629 = vperm.slane %v627, 0
          %v635 = vunpack.c.l.b16 %v623
          %v636 = vunpack.c.l.b16 %v624
          %v637 = vunpack.c.l.b16 %v625
          %v638 = vunpack.c.l.b16 %v626
          %v639 = vpack.c.b16 %v636, %v635
          %v640 = vpack.c.b16 %v638, %v637
          %vm643 = vcmask 261120
          %v645 = vsel %vm643, %v622, 0
          %647 = vmatpush.bf16.msra.mxu0 0
          %648 = vmatpush.bf16.msra.mxu0 0
          %649 = vmatpush.bf16.msra.mxu0 0
          %650 = vmatpush.bf16.msra.mxu0 0
          %651 = vmatpush.bf16.msra.mxu0 0
          %652 = vmatpush.bf16.msra.mxu0 0
          %653 = vmatpush.bf16.msra.mxu0 %v640
          %654 = vmatpush.bf16.msra.mxu0 %v639
          %655 = vmatmul.bf16.gmra.mxu0 %v645
          %v656 = vpop.f32.mrf.mxu0
          %v657 = vadd.f32 %v629, %v656
          %v658 = vpop.f32.mrf.mxu0
          %v659 = vadd.f32 %v629, %v658
          %660 = vdwg.mxu0
          %v661 = vpack.c.bf16 %v657, %v657
          %v662 = vpack.c.bf16 %v659, %v659
          %vm663 = vcmask 60416
          %664 = vst.msk [vmem:[#allocation2] sm:$0xf] %vm663, %v661
          %665 = vst.msk [vmem:[#allocation2 + $0x4] sm:$0xf] %vm663, %v662
          %668 = vrot.lane.b32.xlu0 %v661, 96
          %v669 = vpop.permute.xlu0 %668
          %670 = vrot.lane.b32.xlu0 %v662, 96
          %v671 = vpop.permute.xlu0 %670
          %674 = vst.msk [vmem:[#allocation3] sm:$0xf] %vm663, %v669
          %675 = vst.msk [vmem:[#allocation3 + $0x4] sm:$0xf] %vm663, %v671
          %676 = vrot.lane.b32.xlu0 %v661, 120
          %v677 = vpop.permute.xlu0 %676
          %678 = vrot.lane.b32.xlu0 %v662, 120
          %v679 = vpop.permute.xlu0 %678
          %s682 = scalar_lea.vmem [#allocation2], 8
          %683 = vst.msk [vmem:[%s682] sm:$0xf] %vm663, %v677
          %684 = vst.msk [vmem:[%s682 + $0x4] sm:$0xf] %vm663, %v679
          %685 = vrot.lane.b32.xlu0 %v661, 88
          %v686 = vpop.permute.xlu0 %685
          %687 = vrot.lane.b32.xlu0 %v662, 88
          %v688 = vpop.permute.xlu0 %687
          %s691 = scalar_lea.vmem [#allocation3], 8
          %692 = vst.msk [vmem:[%s691] sm:$0xf] %vm663, %v686
          %693 = vst.msk [vmem:[%s691 + $0x4] sm:$0xf] %vm663, %v688
          %694 = vrot.lane.b32.xlu0 %v661, 112
          %v695 = vpop.permute.xlu0 %694
          %696 = vrot.lane.b32.xlu0 %v662, 112
          %v697 = vpop.permute.xlu0 %696
          %s700 = scalar_lea.vmem [#allocation2], 16
          %701 = vst.msk [vmem:[%s700] sm:$0xf] %vm663, %v695
          %702 = vst.msk [vmem:[%s700 + $0x4] sm:$0xf] %vm663, %v697
          %703 = vrot.lane.b32.xlu0 %v661, 80
          %v704 = vpop.permute.xlu0 %703
          %705 = vrot.lane.b32.xlu0 %v662, 80
          %v706 = vpop.permute.xlu0 %705
          %s709 = scalar_lea.vmem [#allocation3], 16
          %710 = vst.msk [vmem:[%s709] sm:$0xf] %vm663, %v704
          %711 = vst.msk [vmem:[%s709 + $0x4] sm:$0xf] %vm663, %v706
          %712 = vrot.lane.b32.xlu0 %v661, 104
          %v713 = vpop.permute.xlu0 %712
          %714 = vrot.lane.b32.xlu0 %v662, 104
          %v715 = vpop.permute.xlu0 %714
          %s718 = scalar_lea.vmem [#allocation2], 24
          %719 = vst.msk [vmem:[%s718] sm:$0xf] %vm663, %v713
          %720 = vst.msk [vmem:[%s718 + $0x4] sm:$0xf] %vm663, %v715
          %721 = vrot.lane.b32.xlu0 %v661, 72
          %v722 = vpop.permute.xlu0 %721
          %723 = vrot.lane.b32.xlu0 %v662, 72
          %v724 = vpop.permute.xlu0 %723
          %s727 = scalar_lea.vmem [#allocation3], 24
          %728 = vst.msk [vmem:[%s727] sm:$0xf] %vm663, %v722
          %729 = vst.msk [vmem:[%s727 + $0x4] sm:$0xf] %vm663, %v724
        $region100: #{tpu_custom_call.1} parent=83 // pred_fallthru
          _
        %v730 = vld [vmem:[%s614] sm:$0xff]
        %v731 = vpack.c.bf16 %v730, %v730
        %v732 = vld [vmem:[%s2] sm:$0xf]
        %v733 = vld [vmem:[%s2 + $0x4] sm:$0xf]
        %v734 = vld [vmem:[%s2 + $0x8] sm:$0xf]
        %v735 = vld [vmem:[%s2 + $0xc] sm:$0xf]
        %v736 = vld [vmem:[%s3] sm:$0x1]
        %v738 = vperm.slane %v736, 0
        %v744 = vunpack.c.l.b16 %v732
        %v745 = vunpack.c.l.b16 %v733
        %v746 = vunpack.c.l.b16 %v734
        %v747 = vunpack.c.l.b16 %v735
        %v748 = vpack.c.b16 %v745, %v744
        %v749 = vpack.c.b16 %v747, %v746
        %vm752 = vcmask 261120
        %v754 = vsel %vm752, %v731, 0
        %756 = vmatpush.bf16.msra.mxu0 0
        %757 = vmatpush.bf16.msra.mxu0 0
        %758 = vmatpush.bf16.msra.mxu0 0
        %759 = vmatpush.bf16.msra.mxu0 0
        %760 = vmatpush.bf16.msra.mxu0 0
        %761 = vmatpush.bf16.msra.mxu0 0
        %762 = vmatpush.bf16.msra.mxu0 %v749
        %763 = vmatpush.bf16.msra.mxu0 %v748
        %764 = vmatmul.bf16.gmra.mxu0 %v754
        %v765 = vpop.f32.mrf.mxu0
        %v766 = vadd.f32 %v738, %v765
        %v767 = vpop.f32.mrf.mxu0
        %768 = vdwg.mxu0
        %v769 = vmul.f32 %v766, 0.35355338
        %v770 = vpack.c.bf16 %v769, %v769
        %772 = vrot.lane.b32.xlu0 %v770, 120
        %v773 = vpop.permute.xlu0 %772
        %774 = vrot.lane.b32.xlu0 %v770, 112
        %v775 = vpop.permute.xlu0 %774
        %776 = vrot.lane.b32.xlu0 %v770, 104
        %v777 = vpop.permute.xlu0 %776
        %v778 = vld [vmem:[#allocation2] sm:$0xf]
        %v779 = vld [vmem:[#allocation2 + $0x4] sm:$0xf]
        %v780 = vld [vmem:[#allocation2 + $0x8] sm:$0xf]
        %v781 = vld [vmem:[#allocation2 + $0xc] sm:$0xf]
        %v782 = vld [vmem:[#allocation2 + $0x10] sm:$0xf]
        %v783 = vld [vmem:[#allocation2 + $0x14] sm:$0xf]
        %v784 = vld [vmem:[#allocation2 + $0x18] sm:$0xf]
        %v785 = vld [vmem:[#allocation2 + $0x1c] sm:$0xf]
        %v788 = vunpack.c.l.b16 %v778
        %v789 = vunpack.c.l.b16 %v779
        %v790 = vpack.c.b16 %v789, %v788
        %vm791 = vcmask 64512
        %v793 = vsel %vm791, %v770, 0
        %v796 = vsel %vm791, %v790, 0
        %798 = vmatpush.bf16.xpose.msra.mxu0 0
        %799 = vmatpush.bf16.xpose.msra.mxu0 0
        %800 = vmatpush.bf16.xpose.msra.mxu0 0
        %801 = vmatpush.bf16.xpose.msra.mxu0 0
        %802 = vmatpush.bf16.xpose.msra.mxu0 0
        %803 = vmatpush.bf16.xpose.msra.mxu0 0
        %804 = vmatpush.bf16.xpose.msra.mxu0 0
        %805 = vmatpush.bf16.xpose.msra.mxu0 %v796
        %806 = vmatmul.bf16.gmra.mxu0 %v793
        %v807 = vpop.f32.mrf.mxu0
        %v808 = vadd.f32 0.0, %v807
        %v809 = vpop.f32.mrf.mxu0
        %810 = vdwg.mxu0
        %v813 = vunpack.c.l.b16 %v780
        %v814 = vunpack.c.l.b16 %v781
        %v815 = vpack.c.b16 %v814, %v813
        %v817 = vsel %vm791, %v773, 0
        %v820 = vsel %vm791, %v815, 0
        %822 = vmatpush.bf16.xpose.msra.mxu0 0
        %823 = vmatpush.bf16.xpose.msra.mxu0 0
        %824 = vmatpush.bf16.xpose.msra.mxu0 0
        %825 = vmatpush.bf16.xpose.msra.mxu0 0
        %826 = vmatpush.bf16.xpose.msra.mxu0 0
        %827 = vmatpush.bf16.xpose.msra.mxu0 0
        %828 = vmatpush.bf16.xpose.msra.mxu0 0
        %829 = vmatpush.bf16.xpose.msra.mxu0 %v820
        %830 = vmatmul.bf16.gmra.mxu0 %v817
        %v831 = vpop.f32.mrf.mxu0
        %v832 = vadd.f32 0.0, %v831
        %v833 = vpop.f32.mrf.mxu0
        %834 = vdwg.mxu0
        %v837 = vunpack.c.l.b16 %v782
        %v838 = vunpack.c.l.b16 %v783
        %v839 = vpack.c.b16 %v838, %v837
        %v841 = vsel %vm791, %v775, 0
        %v844 = vsel %vm791, %v839, 0
        %846 = vmatpush.bf16.xpose.msra.mxu0 0
        %847 = vmatpush.bf16.xpose.msra.mxu0 0
        %848 = vmatpush.bf16.xpose.msra.mxu0 0
        %849 = vmatpush.bf16.xpose.msra.mxu0 0
        %850 = vmatpush.bf16.xpose.msra.mxu0 0
        %851 = vmatpush.bf16.xpose.msra.mxu0 0
        %852 = vmatpush.bf16.xpose.msra.mxu0 0
        %853 = vmatpush.bf16.xpose.msra.mxu0 %v844
        %854 = vmatmul.bf16.gmra.mxu0 %v841
        %v855 = vpop.f32.mrf.mxu0
        %v856 = vadd.f32 0.0, %v855
        %v857 = vpop.f32.mrf.mxu0
        %858 = vdwg.mxu0
        %v861 = vunpack.c.l.b16 %v784
        %v862 = vunpack.c.l.b16 %v785
        %v863 = vpack.c.b16 %v862, %v861
        %v865 = vsel %vm791, %v777, 0
        %v868 = vsel %vm791, %v863, 0
        %870 = vmatpush.bf16.xpose.msra.mxu0 0
        %871 = vmatpush.bf16.xpose.msra.mxu0 0
        %872 = vmatpush.bf16.xpose.msra.mxu0 0
        %873 = vmatpush.bf16.xpose.msra.mxu0 0
        %874 = vmatpush.bf16.xpose.msra.mxu0 0
        %875 = vmatpush.bf16.xpose.msra.mxu0 0
        %876 = vmatpush.bf16.xpose.msra.mxu0 0
        %877 = vmatpush.bf16.xpose.msra.mxu0 %v868
        %878 = vmatmul.bf16.gmra.mxu0 %v865
        %v879 = vpop.f32.mrf.mxu0
        %v880 = vadd.f32 0.0, %v879
        %v881 = vpop.f32.mrf.mxu0
        %882 = vdwg.mxu0
        %v883 = vlaneseq
        %v884 = vshrl.u32 %v883, 7
        %s885 = smul.u32 %s37, 8
        %v886 = vstv %s885
        %v887 = vadd.s32 %v884, %v886
        %v888 = vlaneseq
        %v889 = vand.u32 %v888, 127
        %vm890 = vcmp.ge.s32.totalorder %v887, %v889
        %v891 = vsel %vm890, 1, 0
        %vm892 = vcmp.eq.s32.totalorder %v891, 1
        %v893 = vsel %vm892, %v808, -1e+09
        %v894 = vsel %vm892, %v832, -1e+09
        %v895 = vsel %vm892, %v856, -1e+09
        %v896 = vsel %vm892, %v880, -1e+09
        %vm897 = vcmask 130048
        %v898 = vsel %vm897, %v893, -inf
        %899 = vmax.xlane.f32.xlu0 %v898
        %v900 = vpop.xlane.xlu0 %899
        %v901 = vsel %vm897, %v894, -inf
        %902 = vmax.xlane.f32.xlu0 %v901
        %v903 = vpop.xlane.xlu0 %902
        %v904 = vsel %vm897, %v895, -inf
        %905 = vmax.xlane.f32.xlu0 %v904
        %v906 = vpop.xlane.xlu0 %905
        %v907 = vsel %vm897, %v896, -inf
        %908 = vmax.xlane.f32.xlu0 %v907
        %v909 = vpop.xlane.xlu0 %908
        %v910 = vsub.f32 %v893, %v900
        %v911 = vsub.f32 %v894, %v903
        %v912 = vsub.f32 %v895, %v906
        %v913 = vsub.f32 %v896, %v909
        %v914 = vmul.f32 %v910, 1.442695
        %v915 = vpow.pop %v914
        %v916 = vmul.f32 %v911, 1.442695
        %v917 = vpow.pop %v916
        %v918 = vmul.f32 %v912, 1.442695
        %v919 = vpow.pop %v918
        %v920 = vmul.f32 %v913, 1.442695
        %v921 = vpow.pop %v920
        %v922 = vsel %vm897, %v915, 0.0
        %923 = vadd.xlane.f32.xlu0 %v922
        %v924 = vpop.xlane.xlu0 %923
        %v925 = vsel %vm897, %v917, 0.0
        %926 = vadd.xlane.f32.xlu0 %v925
        %v927 = vpop.xlane.xlu0 %926
        %v928 = vsel %vm897, %v919, 0.0
        %929 = vadd.xlane.f32.xlu0 %v928
        %v930 = vpop.xlane.xlu0 %929
        %v931 = vsel %vm897, %v921, 0.0
        %932 = vadd.xlane.f32.xlu0 %v931
        %v933 = vpop.xlane.xlu0 %932
        %v934 = vrcp.pop %v924
        %v935 = vrcp.pop %v927
        %v936 = vrcp.pop %v930
        %v937 = vrcp.pop %v933
        %v938 = vmul.f32 %v915, %v934
        %v939 = vmul.f32 %v917, %v935
        %v940 = vmul.f32 %v919, %v936
        %v941 = vmul.f32 %v921, %v937
        %v942 = vpack.c.bf16 %v938, %v938
        %v943 = vpack.c.bf16 %v939, %v939
        %v944 = vpack.c.bf16 %v940, %v940
        %v945 = vpack.c.bf16 %v941, %v941
        %v946 = vld [vmem:[#allocation3] sm:$0xf]
        %v947 = vld [vmem:[#allocation3 + $0x4] sm:$0xf]
        %v948 = vld [vmem:[#allocation3 + $0x8] sm:$0xf]
        %v949 = vld [vmem:[#allocation3 + $0xc] sm:$0xf]
        %v950 = vld [vmem:[#allocation3 + $0x10] sm:$0xf]
        %v951 = vld [vmem:[#allocation3 + $0x14] sm:$0xf]
        %v952 = vld [vmem:[#allocation3 + $0x18] sm:$0xf]
        %v953 = vld [vmem:[#allocation3 + $0x1c] sm:$0xf]
        %v956 = vunpack.c.l.b16 %v946
        %v957 = vunpack.c.l.b16 %v947
        %v958 = vpack.c.b16 %v957, %v956
        %v961 = vsel %vm897, %v942, 0
        %963 = vmatpush.bf16.msra.mxu0 0
        %964 = vmatpush.bf16.msra.mxu0 0
        %965 = vmatpush.bf16.msra.mxu0 0
        %966 = vmatpush.bf16.msra.mxu0 0
        %967 = vmatpush.bf16.msra.mxu0 0
        %968 = vmatpush.bf16.msra.mxu0 0
        %969 = vmatpush.bf16.msra.mxu0 0
        %970 = vmatpush.bf16.msra.mxu0 %v958
        %971 = vmatmul.bf16.gmra.mxu0 %v961
        %v972 = vpop.f32.mrf.mxu0
        %v973 = vadd.f32 0.0, %v972
        %v974 = vpop.f32.mrf.mxu0
        %975 = vdwg.mxu0
        %v978 = vunpack.c.l.b16 %v948
        %v979 = vunpack.c.l.b16 %v949
        %v980 = vpack.c.b16 %v979, %v978
        %v983 = vsel %vm897, %v943, 0
        %985 = vmatpush.bf16.msra.mxu0 0
        %986 = vmatpush.bf16.msra.mxu0 0
        %987 = vmatpush.bf16.msra.mxu0 0
        %988 = vmatpush.bf16.msra.mxu0 0
        %989 = vmatpush.bf16.msra.mxu0 0
        %990 = vmatpush.bf16.msra.mxu0 0
        %991 = vmatpush.bf16.msra.mxu0 0
        %992 = vmatpush.bf16.msra.mxu0 %v980
        %993 = vmatmul.bf16.gmra.mxu0 %v983
        %v994 = vpop.f32.mrf.mxu0
        %v995 = vadd.f32 0.0, %v994
        %v996 = vpop.f32.mrf.mxu0
        %997 = vdwg.mxu0
        %v1000 = vunpack.c.l.b16 %v950
        %v1001 = vunpack.c.l.b16 %v951
        %v1002 = vpack.c.b16 %v1001, %v1000
        %v1005 = vsel %vm897, %v944, 0
        %1007 = vmatpush.bf16.msra.mxu0 0
        %1008 = vmatpush.bf16.msra.mxu0 0
        %1009 = vmatpush.bf16.msra.mxu0 0
        %1010 = vmatpush.bf16.msra.mxu0 0
        %1011 = vmatpush.bf16.msra.mxu0 0
        %1012 = vmatpush.bf16.msra.mxu0 0
        %1013 = vmatpush.bf16.msra.mxu0 0
        %1014 = vmatpush.bf16.msra.mxu0 %v1002
        %1015 = vmatmul.bf16.gmra.mxu0 %v1005
        %v1016 = vpop.f32.mrf.mxu0
        %v1017 = vadd.f32 0.0, %v1016
        %v1018 = vpop.f32.mrf.mxu0
        %1019 = vdwg.mxu0
        %v1022 = vunpack.c.l.b16 %v952
        %v1023 = vunpack.c.l.b16 %v953
        %v1024 = vpack.c.b16 %v1023, %v1022
        %v1027 = vsel %vm897, %v945, 0
        %1029 = vmatpush.bf16.msra.mxu0 0
        %1030 = vmatpush.bf16.msra.mxu0 0
        %1031 = vmatpush.bf16.msra.mxu0 0
        %1032 = vmatpush.bf16.msra.mxu0 0
        %1033 = vmatpush.bf16.msra.mxu0 0
        %1034 = vmatpush.bf16.msra.mxu0 0
        %1035 = vmatpush.bf16.msra.mxu0 0
        %1036 = vmatpush.bf16.msra.mxu0 %v1024
        %1037 = vmatmul.bf16.gmra.mxu0 %v1027
        %v1038 = vpop.f32.mrf.mxu0
        %v1039 = vadd.f32 0.0, %v1038
        %v1040 = vpop.f32.mrf.mxu0
        %1041 = vdwg.mxu0
        %v1042 = vpack.c.bf16 %v973, %v973
        %v1043 = vld [vmem:[#allocation7] sm:$0xf]
        %v1044 = vpack.c.bf16 %v995, %v995
        %v1045 = vld [vmem:[#allocation7 + $0x4] sm:$0xf]
        %v1047 = vsel %vm791, %v1044, 0
        %vm1049 = vcmask 1043456
        %v1051 = vsel %vm1049, %v1045, 0
        %1053 = vmatpush.bf16.msra.mxu0 0
        %1054 = vmatpush.bf16.msra.mxu0 0
        %1055 = vmatpush.bf16.msra.mxu0 0
        %1056 = vmatpush.bf16.msra.mxu0 0
        %1057 = vmatpush.bf16.msra.mxu0 0
        %1058 = vmatpush.bf16.msra.mxu0 0
        %1059 = vmatpush.bf16.msra.mxu0 0
        %1060 = vmatpush.bf16.msra.mxu0 %v1051
        %1061 = vmatmul.bf16.gmra.mxu0 %v1047
        %v1062 = vpop.f32.mrf.mxu0
        %v1063 = vadd.f32 0.0, %v1062
        %v1064 = vpop.f32.mrf.mxu0
        %1065 = vdwg.mxu0
        %v1067 = vsel %vm791, %v1042, 0
        %v1070 = vsel %vm1049, %v1043, 0
        %1072 = vmatpush.bf16.msra.mxu0 0
        %1073 = vmatpush.bf16.msra.mxu0 0
        %1074 = vmatpush.bf16.msra.mxu0 0
        %1075 = vmatpush.bf16.msra.mxu0 0
        %1076 = vmatpush.bf16.msra.mxu0 0
        %1077 = vmatpush.bf16.msra.mxu0 0
        %1078 = vmatpush.bf16.msra.mxu0 0
        %1079 = vmatpush.bf16.msra.mxu0 %v1070
        %1080 = vmatmul.bf16.gmra.mxu0 %v1067
        %v1081 = vpop.f32.mrf.mxu0
        %v1082 = vadd.f32 %v1063, %v1081
        %v1083 = vpop.f32.mrf.mxu0
        %1084 = vdwg.mxu0
        %v1085 = vpack.c.bf16 %v1017, %v1017
        %v1086 = vld [vmem:[#allocation7 + $0x8] sm:$0xf]
        %v1088 = vsel %vm791, %v1085, 0
        %v1091 = vsel %vm1049, %v1086, 0
        %1093 = vmatpush.bf16.msra.mxu0 0
        %1094 = vmatpush.bf16.msra.mxu0 0
        %1095 = vmatpush.bf16.msra.mxu0 0
        %1096 = vmatpush.bf16.msra.mxu0 0
        %1097 = vmatpush.bf16.msra.mxu0 0
        %1098 = vmatpush.bf16.msra.mxu0 0
        %1099 = vmatpush.bf16.msra.mxu0 0
        %1100 = vmatpush.bf16.msra.mxu0 %v1091
        %1101 = vmatmul.bf16.gmra.mxu0 %v1088
        %v1102 = vpop.f32.mrf.mxu0
        %v1103 = vadd.f32 0.0, %v1102
        %v1104 = vpop.f32.mrf.mxu0
        %1105 = vdwg.mxu0
        %v1106 = vadd.f32 %v1082, %v1103
        %v1107 = vpack.c.bf16 %v1039, %v1039
        %v1108 = vld [vmem:[#allocation7 + $0xc] sm:$0xf]
        %v1110 = vsel %vm791, %v1107, 0
        %v1113 = vsel %vm1049, %v1108, 0
        %1115 = vmatpush.bf16.msra.mxu0 0
        %1116 = vmatpush.bf16.msra.mxu0 0
        %1117 = vmatpush.bf16.msra.mxu0 0
        %1118 = vmatpush.bf16.msra.mxu0 0
        %1119 = vmatpush.bf16.msra.mxu0 0
        %1120 = vmatpush.bf16.msra.mxu0 0
        %1121 = vmatpush.bf16.msra.mxu0 0
        %1122 = vmatpush.bf16.msra.mxu0 %v1113
        %1123 = vmatmul.bf16.gmra.mxu0 %v1110
        %v1124 = vpop.f32.mrf.mxu0
        %v1125 = vadd.f32 0.0, %v1124
        %v1126 = vpop.f32.mrf.mxu0
        %1127 = vdwg.mxu0
        %v1128 = vadd.f32 %v1106, %v1125
        %v1129 = vld [vmem:[%s7] sm:$0x1]
        %v1131 = vperm.slane %v1129, 0
        %v1133 = vadd.f32 %v1128, %v1131
        %v1134 = vadd.f32 %v730, %v1133
        %v1135 = vld [vmem:[%s8] sm:$0x1]
        %v1136 = vld [vmem:[%s9] sm:$0x1]
        %v1137 = vsel %vm752, %v1134, 0.0
        %1138 = vadd.xlane.f32.xlu0 %v1137
        %v1139 = vpop.xlane.xlu0 %1138
        %v1140 = vrcp.pop 32.0
        %v1141 = vmul.f32 32.0, %v1140
        %v1142 = vsub.f32 1.0, %v1141
        %v1143 = vmul.f32 %v1140, %v1142
        %v1144 = vadd.f32 %v1140, %v1143
        %vm1145 = vweird.f32 %v1140
        %v1146 = vsel %vm1145, %v1140, %v1144
        %v1147 = vmul.f32 %v1139, %v1146
        %v1148 = vsub.f32 %v1134, %v1147
        %v1149 = vmul.f32 %v1148, %v1148
        %v1150 = vsel %vm752, %v1149, 0.0
        %1151 = vadd.xlane.f32.xlu0 %v1150
        %v1152 = vpop.xlane.xlu0 %1151
        %v1153 = vmul.f32 %v1152, %v1146
        %v1154 = vadd.f32 %v1153, 1e-05
        %v1155 = vrsqrt.pop %v1154
        %v1156 = vmul.f32 %v1155, %v1154
        %v1157 = vmul.f32 %v1156, %v1155
        %v1158 = vmul.f32 0.5, %v1157
        %v1159 = vsub.f32 1.5, %v1158
        %v1160 = vmul.f32 %v1155, %v1159
        %vm1161 = vweird.f32 %v1154
        %vm1162 = vweird.f32 %v1155
        %vm1163 = vmor %vm1161, %vm1162
        %v1164 = vsel %vm1163, %v1155, %v1160
        %v1165 = vmul.f32 %v1148, %v1164
        %v1167 = vperm.slane %v1135, 0
        %v1169 = vmul.f32 %v1167, %v1165
        %v1171 = vperm.slane %v1136, 0
        %v1173 = vadd.f32 %v1169, %v1171
        %v1174 = vpack.c.bf16 %v1173, %v1173
        %v1175 = vld [vmem:[#allocation9] sm:$0xf]
        %v1176 = vld [vmem:[#allocation9 + $0x4] sm:$0xf]
        %v1177 = vld [vmem:[#allocation9 + $0x8] sm:$0xf]
        %v1178 = vld [vmem:[#allocation9 + $0xc] sm:$0xf]
        %v1179 = vld [vmem:[%s11] sm:$0x1]
        %v1181 = vperm.slane %v1179, 0
        %v1187 = vunpack.c.l.b16 %v1175
        %v1188 = vunpack.c.l.b16 %v1176
        %v1189 = vunpack.c.l.b16 %v1177
        %v1190 = vunpack.c.l.b16 %v1178
        %v1191 = vpack.c.b16 %v1188, %v1187
        %v1192 = vpack.c.b16 %v1190, %v1189
        %v1196 = vsel %vm752, %v1174, 0
        %1198 = vmatpush.bf16.msra.mxu0 0
        %1199 = vmatpush.bf16.msra.mxu0 0
        %1200 = vmatpush.bf16.msra.mxu0 0
        %1201 = vmatpush.bf16.msra.mxu0 0
        %1202 = vmatpush.bf16.msra.mxu0 0
        %1203 = vmatpush.bf16.msra.mxu0 0
        %1204 = vmatpush.bf16.msra.mxu0 %v1192
        %1205 = vmatpush.bf16.msra.mxu0 %v1191
        %1206 = vmatmul.bf16.gmra.mxu0 %v1196
        %v1207 = vpop.f32.mrf.mxu0
        %v1208 = vadd.f32 %v1181, %v1207
        %v1209 = vpop.f32.mrf.mxu0
        %1210 = vdwg.mxu0
        %v1211 = vmul.f32 %v1208, 0.5
        %v1212 = vmul.f32 %v1208, 0.044715
        %v1213 = vmul.f32 %v1212, %v1208
        %v1214 = vmul.f32 %v1213, %v1208
        %v1215 = vadd.f32 %v1208, %v1214
        %v1216 = vmul.f32 %v1215, 0.7978846
        %v1217 = vtanh.pop %v1216
        %v1218 = vadd.f32 %v1217, 1.0
        %v1219 = vmul.f32 %v1211, %v1218
        %v1220 = vpack.c.bf16 %v1219, %v1219
        %v1221 = vld [vmem:[%s12] sm:$0xf]
        %v1222 = vld [vmem:[%s12 + $0x4] sm:$0xf]
        %v1223 = vld [vmem:[%s12 + $0x8] sm:$0xf]
        %v1224 = vld [vmem:[%s12 + $0xc] sm:$0xf]
        %v1225 = vld [vmem:[%s12 + $0x10] sm:$0xf]
        %v1226 = vld [vmem:[%s12 + $0x14] sm:$0xf]
        %v1227 = vld [vmem:[%s12 + $0x18] sm:$0xf]
        %v1228 = vld [vmem:[%s12 + $0x1c] sm:$0xf]
        %v1229 = vld [vmem:[%s12 + $0x20] sm:$0xf]
        %v1230 = vld [vmem:[%s12 + $0x24] sm:$0xf]
        %v1231 = vld [vmem:[%s12 + $0x28] sm:$0xf]
        %v1232 = vld [vmem:[%s12 + $0x2c] sm:$0xf]
        %v1233 = vld [vmem:[%s12 + $0x30] sm:$0xf]
        %v1234 = vld [vmem:[%s12 + $0x34] sm:$0xf]
        %v1235 = vld [vmem:[%s12 + $0x38] sm:$0xf]
        %v1236 = vld [vmem:[%s12 + $0x3c] sm:$0xf]
        %v1237 = vld [vmem:[%s13] sm:$0x1]
        %v1239 = vperm.slane %v1237, 0
        %v1257 = vunpack.c.l.b16 %v1221
        %v1258 = vunpack.c.l.b16 %v1222
        %v1259 = vunpack.c.l.b16 %v1223
        %v1260 = vunpack.c.l.b16 %v1224
        %v1261 = vunpack.c.l.b16 %v1225
        %v1262 = vunpack.c.l.b16 %v1226
        %v1263 = vunpack.c.l.b16 %v1227
        %v1264 = vunpack.c.l.b16 %v1228
        %v1265 = vunpack.c.l.b16 %v1229
        %v1266 = vunpack.c.l.b16 %v1230
        %v1267 = vunpack.c.l.b16 %v1231
        %v1268 = vunpack.c.l.b16 %v1232
        %v1269 = vunpack.c.l.b16 %v1233
        %v1270 = vunpack.c.l.b16 %v1234
        %v1271 = vunpack.c.l.b16 %v1235
        %v1272 = vunpack.c.l.b16 %v1236
        %v1273 = vpack.c.b16 %v1258, %v1257
        %v1274 = vpack.c.b16 %v1260, %v1259
        %v1275 = vpack.c.b16 %v1262, %v1261
        %v1276 = vpack.c.b16 %v1264, %v1263
        %v1277 = vpack.c.b16 %v1266, %v1265
        %v1278 = vpack.c.b16 %v1268, %v1267
        %v1279 = vpack.c.b16 %v1270, %v1269
        %v1280 = vpack.c.b16 %v1272, %v1271
        %1289 = vmatpush.bf16.msra.mxu0 %v1280
        %1290 = vmatpush.bf16.msra.mxu0 %v1279
        %1291 = vmatpush.bf16.msra.mxu0 %v1278
        %1292 = vmatpush.bf16.msra.mxu0 %v1277
        %1293 = vmatpush.bf16.msra.mxu0 %v1276
        %1294 = vmatpush.bf16.msra.mxu0 %v1275
        %1295 = vmatpush.bf16.msra.mxu0 %v1274
        %1296 = vmatpush.bf16.msra.mxu0 %v1273
        %1297 = vmatmul.bf16.gmra.mxu0 %v1220
        %v1298 = vpop.f32.mrf.mxu0
        %v1299 = vadd.f32 %v1239, %v1298
        %v1300 = vpop.f32.mrf.mxu0
        %1301 = vdwg.mxu0
        %v1302 = vadd.f32 %v1173, %v1299
        %v1303 = vld [vmem:[%s14] sm:$0x1]
        %v1304 = vld [vmem:[%s15] sm:$0x1]
        %v1305 = vsel %vm752, %v1302, 0.0
        %1306 = vadd.xlane.f32.xlu0 %v1305
        %v1307 = vpop.xlane.xlu0 %1306
        %v1308 = vmul.f32 %v1307, %v1146
        %v1309 = vsub.f32 %v1302, %v1308
        %v1310 = vmul.f32 %v1309, %v1309
        %v1311 = vsel %vm752, %v1310, 0.0
        %1312 = vadd.xlane.f32.xlu0 %v1311
        %v1313 = vpop.xlane.xlu0 %1312
        %v1314 = vmul.f32 %v1313, %v1146
        %v1315 = vadd.f32 %v1314, 1e-05
        %v1316 = vrsqrt.pop %v1315
        %v1317 = vmul.f32 %v1316, %v1315
        %v1318 = vmul.f32 %v1317, %v1316
        %v1319 = vmul.f32 0.5, %v1318
        %v1320 = vsub.f32 1.5, %v1319
        %v1321 = vmul.f32 %v1316, %v1320
        %vm1322 = vweird.f32 %v1315
        %vm1323 = vweird.f32 %v1316
        %vm1324 = vmor %vm1322, %vm1323
        %v1325 = vsel %vm1324, %v1316, %v1321
        %v1326 = vmul.f32 %v1309, %v1325
        %v1328 = vperm.slane %v1303, 0
        %v1330 = vmul.f32 %v1328, %v1326
        %v1332 = vperm.slane %v1304, 0
        %v1334 = vadd.f32 %v1330, %v1332
        %1335 = vst.msk [vmem:[%s601] sm:$0xff] %vm752, %v1334
        %s1336 = sand.u32 %s402, 1
        %s1337 = scalar_lea.sflag [#allocation6], %s1336
        %s1338 = sand.u32 %s402, 1
        %s1339 = smul.addr %s1338, 8
        %s1340 = scalar_lea.vmem [#allocation10], %s1339
        // Predicated region
        $region101: #{tpu_custom_call.1} parent=83 // pred_check
          %p1341 = pneg %p412
        $region102: #{tpu_custom_call.1} parent=83 // pred_check_branch
          %1343 = sbr.rel (%p1341) target = $region104
        $region103: #{tpu_custom_call.1} parent=83 // pred_region
          %1345 = vsyncadd %s1337, 0
          %s1346 = smul.addr %s36, 2
          %s1347 = sadd.s32 %s37, %s1346
          %s1348 = smul.addr %s1347, 8
          %s1349 = scalar_lea.hbm %s16, %s1348
          %s1351 = sshll.u32 %s1340, 4
          %s1352 = int_to_ptr.vmem [resolvable:$true] %s1351
          %s1353 = sshll.u32 %s1349, 4
          %s1354 = int_to_ptr.hbm [resolvable:$true] %s1353
          %1356 = dma.vmem_to_hbm [thread:$0]  %s1352, 128, %s1354, %s1337
        $region104: #{tpu_custom_call.1} parent=83 // pred_fallthru
          _
      $region84: #{tpu_custom_call.1} parent=5 // pred_fallthru
        _
      %p1357 = scmp.le.s32.totalorder 2, %s27
      // Predicated region
      $region105: #{tpu_custom_call.1} parent=5 // pred_check
        %p1358 = pneg %p1357
      $region106: #{tpu_custom_call.1} parent=5 // pred_check_branch
        %1360 = sbr.rel (%p1358) target = $region108
      $region107: #{tpu_custom_call.1} parent=5 // pred_region
        %s1361 = ssub.s32 %s27, 2
        // Predicated region
        $region109: #{tpu_custom_call.1} parent=107 // pred_check
          %p1362 = pneg %p418
        $region110: #{tpu_custom_call.1} parent=107 // pred_check_branch
          %1364 = sbr.rel (%p1362) target = $region112
        $region111: #{tpu_custom_call.1} parent=107 // pred_region
          %s1365 = sand.u32 %s403, 1
          %s1366 = scalar_lea.sflag [#allocation6], %s1365
          %s1367 = sand.u32 %s403, 1
          %s1368 = smul.addr %s1367, 8
          %s1369 = scalar_lea.vmem [#allocation10], %s1368
          %1371 = dma.done %s1366, 128
        $region112: #{tpu_custom_call.1} parent=107 // pred_fallthru
          _
      $region108: #{tpu_custom_call.1} parent=5 // pred_fallthru
        _
    $region6: #{tpu_custom_call.1} parent=1 // loop_footer
      %s31 = sadd.s32 1, %s27
    $region7: #{tpu_custom_call.1} parent=1 // loop_footer_branch
      %26 = sbr.rel target = $region3
    $region8: #{tpu_custom_call.1} parent=1 // loop_exit
      _
    %1372 = vsyncpa [#allocation5], 1
    %s1373 = scalar_lea.sflag [#allocation5], 1
    %1374 = vsyncpa %s1373, 1
    %1375 = vsyncpa [#allocation8], 1
    %1376 = vsyncpa [#allocation6], 1
    %s1377 = scalar_lea.sflag [#allocation6], 1
    %1378 = vsyncpa %s1377, 1

// kernel: tpu_custom_call.1
$region0: #{tpu_custom_call.1}
  #allocation0 [shape = 'u32[]', space=smem, size = 0x4, offset = 0x4, fixed_abs, tag = 'smem constant byte address 0x4 - core index']
  #allocation1 [shape = 'u32[72,128]{1,0:T(1,128)}', space=vmem, size = 0x9000, scoped, tag = 'internal scratch']
  #allocation2 [shape = 'bf16[4,16,8]{2,1,0:T(8,128)(2,1)}', space=vmem, size = 0x4000, scoped, tag = 'scratch operand']
  #allocation3 [shape = 'bf16[4,16,8]{2,1,0:T(8,128)(2,1)}', space=vmem, size = 0x4000, scoped, tag = 'scratch operand']
  %s0 = inlined_call_operand.vmem [shape: f32[2,16,32], index: 0, kind: input, shape index: {}]
  %s1 = inlined_call_operand.vmem [shape: f32[2,16,32], index: 1, kind: input, shape index: {}]
  %s2 = inlined_call_operand.vmem [shape: bf16[32,32], index: 2, kind: input, shape index: {}]
  %s3 = inlined_call_operand.vmem [shape: f32[1,32], index: 3, kind: input, shape index: {}]
  %s4 = inlined_call_operand.hbm [shape: bf16[32,64], index: 4, kind: input, shape index: {}]
  %s5 = inlined_call_operand.vmem [shape: f32[1,64], index: 5, kind: input, shape index: {}]
  %s6 = inlined_call_operand.hbm [shape: bf16[32,32], index: 6, kind: input, shape index: {}]
  %s7 = inlined_call_operand.vmem [shape: f32[1,32], index: 7, kind: input, shape index: {}]
  %s8 = inlined_call_operand.vmem [shape: f32[1,32], index: 8, kind: input, shape index: {}]
  %s9 = inlined_call_operand.vmem [shape: f32[1,32], index: 9, kind: input, shape index: {}]
  %s10 = inlined_call_operand.hbm [shape: bf16[32,128], index: 10, kind: input, shape index: {}]
  %s11 = inlined_call_operand.vmem [shape: f32[1,128], index: 11, kind: input, shape index: {}]
  %s12 = inlined_call_operand.vmem [shape: bf16[128,32], index: 12, kind: input, shape index: {}]
  %s13 = inlined_call_operand.vmem [shape: f32[1,32], index: 13, kind: input, shape index: {}]
  %s14 = inlined_call_operand.vmem [shape: f32[1,32], index: 14, kind: input, shape index: {}]
  %s15 = inlined_call_operand.vmem [shape: f32[1,32], index: 15, kind: input, shape index: {}]
  %s16 = inlined_call_operand.hbm [shape: f32[2,16,32], index: 16, kind: output, shape index: {}]
  %s17 = sld [smem:[#allocation0]]
  $region113: #{tpu_custom_call.1} parent=0
    _
  %s19 = ssub.s32 1, %s17
  %s20 = scalar_select 0, %s19, %s17
  $region1: #{tpu_custom_call.1} parent=0
    #allocation4 [shape = 'u8[8192]{0}', space=vmem, size = 0x2000, scoped, tag = 'input window, operand 4, single buffered']
    #allocation5 [shape = 's32[2]{0}', space=sflag, size = 0x8, scoped, tag = 'scoped memory for tpu_custom_call.1']
    #allocation6 [shape = 's32[2]{0}', space=sflag, size = 0x8, scoped, tag = 'scoped memory for tpu_custom_call.1']
    #allocation7 [shape = 'u8[8192]{0}', space=vmem, size = 0x2000, scoped, tag = 'input window, operand 6, single buffered']
    #allocation8 [shape = 's32[1]{0}', space=sflag, size = 0x4, scoped, tag = 'scoped memory for tpu_custom_call.1']
    #allocation9 [shape = 'u8[8192]{0}', space=vmem, size = 0x2000, scoped, tag = 'input window, operand 10, single buffered']
    #allocation10 [shape = 'u8[8192]{0}', space=vmem, size = 0x2000, scoped, tag = 'output window, operand 0']
    %21 = vsyncpa [#allocation5], 0
    %22 = vsyncpa [#allocation8], 0
    %23 = vsyncpa [#allocation6], 0
    %s24 = scalar_lea.sflag [#allocation6], 1
    %25 = vsyncpa %s24, 0
    loop: start=0, step=1, limit=6
    $region2: #{tpu_custom_call.1} parent=1 // loop_pre_header
      _
    $region3: #{tpu_custom_call.1} parent=1 // loop_header
      %s27 = sphi 0, %s31
      %p28 = scmp.ge.s32.totalorder %s27, 6
      %s34 = sphi 0, %s46
      %s35 = sphi 0, %s42
      %s36 = sphi 0, %s34
      %s37 = sphi 0, %s35
      %s38 = sphi 0, %s36
      %s39 = sphi 0, %s37
      %s49 = sphi 0, %s51
      %s52 = sphi 0, %s49
      %s53 = sphi 0, %s52
      %s69 = sphi 0, %s53
      %s77 = sphi 0, %s79
      %s80 = sphi 0, %s77
      %s81 = sphi 0, %s80
      %s97 = sphi 0, %s81
      %s101 = sphi 0, %s101
      %s103 = sphi 0, %s101
      %s104 = sphi 0, %s103
      %s118 = sphi 0, %s104
      %s122 = sphi 0, %s122
      %s124 = sphi 0, %s122
      %s125 = sphi 0, %s124
      %s139 = sphi 0, %s125
      %s143 = sphi 0, %s143
      %s145 = sphi 0, %s143
      %s146 = sphi 0, %s145
      %s160 = sphi 0, %s146
      %s164 = sphi 0, %s164
      %s166 = sphi 0, %s164
      %s167 = sphi 0, %s166
      %s181 = sphi 0, %s167
      %s185 = sphi 0, %s185
      %s187 = sphi 0, %s185
      %s188 = sphi 0, %s187
      %s202 = sphi 0, %s188
      %s206 = sphi 0, %s206
      %s208 = sphi 0, %s206
      %s209 = sphi 0, %s208
      %s223 = sphi 0, %s209
      %s227 = sphi 0, %s227
      %s229 = sphi 0, %s227
      %s230 = sphi 0, %s229
      %s244 = sphi 0, %s230
      %s248 = sphi 0, %s248
      %s250 = sphi 0, %s248
      %s251 = sphi 0, %s250
      %s265 = sphi 0, %s251
      %s269 = sphi 0, %s269
      %s271 = sphi 0, %s269
      %s272 = sphi 0, %s271
      %s286 = sphi 0, %s272
      %s290 = sphi 0, %s290
      %s292 = sphi 0, %s290
      %s293 = sphi 0, %s292
      %s307 = sphi 0, %s293
      %s311 = sphi 0, %s311
      %s313 = sphi 0, %s311
      %s314 = sphi 0, %s313
      %s328 = sphi 0, %s314
      %s332 = sphi 0, %s332
      %s334 = sphi 0, %s332
      %s335 = sphi 0, %s334
      %s349 = sphi 0, %s335
      %s353 = sphi 0, %s353
      %s355 = sphi 0, %s353
      %s356 = sphi 0, %s355
      %s370 = sphi 0, %s356
      %s374 = sphi 0, %s374
      %s376 = sphi 0, %s374
      %s377 = sphi 0, %s376
      %s391 = sphi 0, %s377
      %s399 = sphi 0, %s401
      %s402 = sphi 0, %s399
      %s403 = sphi 0, %s402
      %s419 = sphi 0, %s403
    $region4: #{tpu_custom_call.1} parent=1 // loop_header_branch
      %30 = sbr.rel (%p28) target = $region8
    $region5: #{tpu_custom_call.1} parent=1 // loop_body
      %s32 = ssub.s32 %s27, 1
      %s33 = ssub.s32 %s27, 2
      %s40 = sadd.s32 1, %s35
      %p41 = scmp.ge.s32.totalorder %s40, 2
      %s42 = scalar_select %p41, 0, %s40
      %s43 = sadd.s32 1, %s34
      %s44 = scalar_select %p41, %s43, %s34
      %p45 = scmp.ge.s32.totalorder %s44, 2
      %s46 = scalar_select %p45, 0, %s44
      %s47 = ssub.s32 %s34, %s46
      %p48 = scmp.eq.s32.totalorder %s47, 0
      %s50 = sadd.s32 %s49, 1
      %s51 = scalar_select %p48, %s49, %s50
      %p54 = pneg %p48
      %p55 = scmp.eq.s32.totalorder %s27, 3
      %p56 = por %p54, %p55
      %p57 = scmp.ne.s32.totalorder %s49, %s52
      %p58 = scmp.eq.s32.totalorder %s27, 0
      %p59 = por %p57, %p58
      %p60 = scmp.ne.s32.totalorder %s49, %s52
      %p61 = scmp.eq.s32.totalorder %s32, 3
      %p62 = por %p60, %p61
      %p63 = scmp.ne.s32.totalorder %s52, %s53
      %p64 = scmp.eq.s32.totalorder %s32, 0
      %p65 = por %p63, %p64
      %p66 = scmp.ne.s32.totalorder %s52, %s53
      %p67 = scmp.eq.s32.totalorder %s33, 3
      %p68 = por %p66, %p67
      %p70 = scmp.ne.s32.totalorder %s53, %s69
      %p71 = scmp.eq.s32.totalorder %s33, 0
      %p72 = por %p70, %p71
      %s73 = ssub.s32 %s34, %s46
      %s74 = ssub.s32 %s35, %s42
      %s75 = sor.u32 %s73, %s74
      %p76 = scmp.eq.s32.totalorder %s75, 0
      %s78 = sadd.s32 %s77, 1
      %s79 = scalar_select %p76, %s77, %s78
      %p82 = pneg %p76
      %p83 = scmp.eq.s32.totalorder %s27, 3
      %p84 = por %p82, %p83
      %p85 = scmp.ne.s32.totalorder %s77, %s80
      %p86 = scmp.eq.s32.totalorder %s27, 0
      %p87 = por %p85, %p86
      %p88 = scmp.ne.s32.totalorder %s77, %s80
      %p89 = scmp.eq.s32.totalorder %s32, 3
      %p90 = por %p88, %p89
      %p91 = scmp.ne.s32.totalorder %s80, %s81
      %p92 = scmp.eq.s32.totalorder %s32, 0
      %p93 = por %p91, %p92
      %p94 = scmp.ne.s32.totalorder %s80, %s81
      %p95 = scmp.eq.s32.totalorder %s33, 3
      %p96 = por %p94, %p95
      %p98 = scmp.ne.s32.totalorder %s81, %s97
      %p99 = scmp.eq.s32.totalorder %s33, 0
      %p100 = por %p98, %p99
      %s102 = sadd.s32 %s101, 1
      %p105 = scmp.eq.s32.totalorder %s27, 3
      %p106 = scmp.ne.s32.totalorder %s101, %s103
      %p107 = scmp.eq.s32.totalorder %s27, 0
      %p108 = por %p106, %p107
      %p109 = scmp.ne.s32.totalorder %s101, %s103
      %p110 = scmp.eq.s32.totalorder %s32, 3
      %p111 = por %p109, %p110
      %p112 = scmp.ne.s32.totalorder %s103, %s104
      %p113 = scmp.eq.s32.totalorder %s32, 0
      %p114 = por %p112, %p113
      %p115 = scmp.ne.s32.totalorder %s103, %s104
      %p116 = scmp.eq.s32.totalorder %s33, 3
      %p117 = por %p115, %p116
      %p119 = scmp.ne.s32.totalorder %s104, %s118
      %p120 = scmp.eq.s32.totalorder %s33, 0
      %p121 = por %p119, %p120
      %s123 = sadd.s32 %s122, 1
      %p126 = scmp.eq.s32.totalorder %s27, 3
      %p127 = scmp.ne.s32.totalorder %s122, %s124
      %p128 = scmp.eq.s32.totalorder %s27, 0
      %p129 = por %p127, %p128
      %p130 = scmp.ne.s32.totalorder %s122, %s124
      %p131 = scmp.eq.s32.totalorder %s32, 3
      %p132 = por %p130, %p131
      %p133 = scmp.ne.s32.totalorder %s124, %s125
      %p134 = scmp.eq.s32.totalorder %s32, 0
      %p135 = por %p133, %p134
      %p136 = scmp.ne.s32.totalorder %s124, %s125
      %p137 = scmp.eq.s32.totalorder %s33, 3
      %p138 = por %p136, %p137
      %p140 = scmp.ne.s32.totalorder %s125, %s139
      %p141 = scmp.eq.s32.totalorder %s33, 0
      %p142 = por %p140, %p141
      %s144 = sadd.s32 %s143, 1
      %p147 = scmp.eq.s32.totalorder %s27, 3
      %p148 = scmp.ne.s32.totalorder %s143, %s145
      %p149 = scmp.eq.s32.totalorder %s27, 0
      %p150 = por %p148, %p149
      %p151 = scmp.ne.s32.totalorder %s143, %s145
      %p152 = scmp.eq.s32.totalorder %s32, 3
      %p153 = por %p151, %p152
      %p154 = scmp.ne.s32.totalorder %s145, %s146
      %p155 = scmp.eq.s32.totalorder %s32, 0
      %p156 = por %p154, %p155
      %p157 = scmp.ne.s32.totalorder %s145, %s146
      %p158 = scmp.eq.s32.totalorder %s33, 3
      %p159 = por %p157, %p158
      %p161 = scmp.ne.s32.totalorder %s146, %s160
      %p162 = scmp.eq.s32.totalorder %s33, 0
      %p163 = por %p161, %p162
      %s165 = sadd.s32 %s164, 1
      %p168 = scmp.eq.s32.totalorder %s27, 3
      %p169 = scmp.ne.s32.totalorder %s164, %s166
      %p170 = scmp.eq.s32.totalorder %s27, 0
      %p171 = por %p169, %p170
      %p172 = scmp.ne.s32.totalorder %s164, %s166
      %p173 = scmp.eq.s32.totalorder %s32, 3
      %p174 = por %p172, %p173
      %p175 = scmp.ne.s32.totalorder %s166, %s167
      %p176 = scmp.eq.s32.totalorder %s32, 0
      %p177 = por %p175, %p176
      %p178 = scmp.ne.s32.totalorder %s166, %s167
      %p179 = scmp.eq.s32.totalorder %s33, 3
      %p180 = por %p178, %p179
      %p182 = scmp.ne.s32.totalorder %s167, %s181
      %p183 = scmp.eq.s32.totalorder %s33, 0
      %p184 = por %p182, %p183
      %s186 = sadd.s32 %s185, 1
      %p189 = scmp.eq.s32.totalorder %s27, 3
      %p190 = scmp.ne.s32.totalorder %s185, %s187
      %p191 = scmp.eq.s32.totalorder %s27, 0
      %p192 = por %p190, %p191
      %p193 = scmp.ne.s32.totalorder %s185, %s187
      %p194 = scmp.eq.s32.totalorder %s32, 3
      %p195 = por %p193, %p194
      %p196 = scmp.ne.s32.totalorder %s187, %s188
      %p197 = scmp.eq.s32.totalorder %s32, 0
      %p198 = por %p196, %p197
      %p199 = scmp.ne.s32.totalorder %s187, %s188
      %p200 = scmp.eq.s32.totalorder %s33, 3
      %p201 = por %p199, %p200
      %p203 = scmp.ne.s32.totalorder %s188, %s202
      %p204 = scmp.eq.s32.totalorder %s33, 0
      %p205 = por %p203, %p204
      %s207 = sadd.s32 %s206, 1
      %p210 = scmp.eq.s32.totalorder %s27, 3
      %p211 = scmp.ne.s32.totalorder %s206, %s208
      %p212 = scmp.eq.s32.totalorder %s27, 0
      %p213 = por %p211, %p212
      %p214 = scmp.ne.s32.totalorder %s206, %s208
      %p215 = scmp.eq.s32.totalorder %s32, 3
      %p216 = por %p214, %p215
      %p217 = scmp.ne.s32.totalorder %s208, %s209
      %p218 = scmp.eq.s32.totalorder %s32, 0
      %p219 = por %p217, %p218
      %p220 = scmp.ne.s32.totalorder %s208, %s209
      %p221 = scmp.eq.s32.totalorder %s33, 3
      %p222 = por %p220, %p221
      %p224 = scmp.ne.s32.totalorder %s209, %s223
      %p225 = scmp.eq.s32.totalorder %s33, 0
      %p226 = por %p224, %p225
      %s228 = sadd.s32 %s227, 1
      %p231 = scmp.eq.s32.totalorder %s27, 3
      %p232 = scmp.ne.s32.totalorder %s227, %s229
      %p233 = scmp.eq.s32.totalorder %s27, 0
      %p234 = por %p232, %p233
      %p235 = scmp.ne.s32.totalorder %s227, %s229
      %p236 = scmp.eq.s32.totalorder %s32, 3
      %p237 = por %p235, %p236
      %p238 = scmp.ne.s32.totalorder %s229, %s230
      %p239 = scmp.eq.s32.totalorder %s32, 0
      %p240 = por %p238, %p239
      %p241 = scmp.ne.s32.totalorder %s229, %s230
      %p242 = scmp.eq.s32.totalorder %s33, 3
      %p243 = por %p241, %p242
      %p245 = scmp.ne.s32.totalorder %s230, %s244
      %p246 = scmp.eq.s32.totalorder %s33, 0
      %p247 = por %p245, %p246
      %s249 = sadd.s32 %s248, 1
      %p252 = scmp.eq.s32.totalorder %s27, 3
      %p253 = scmp.ne.s32.totalorder %s248, %s250
      %p254 = scmp.eq.s32.totalorder %s27, 0
      %p255 = por %p253, %p254
      %p256 = scmp.ne.s32.totalorder %s248, %s250
      %p257 = scmp.eq.s32.totalorder %s32, 3
      %p258 = por %p256, %p257
      %p259 = scmp.ne.s32.totalorder %s250, %s251
      %p260 = scmp.eq.s32.totalorder %s32, 0
      %p261 = por %p259, %p260
      %p262 = scmp.ne.s32.totalorder %s250, %s251
      %p263 = scmp.eq.s32.totalorder %s33, 3
      %p264 = por %p262, %p263
      %p266 = scmp.ne.s32.totalorder %s251, %s265
      %p267 = scmp.eq.s32.totalorder %s33, 0
      %p268 = por %p266, %p267
      %s270 = sadd.s32 %s269, 1
      %p273 = scmp.eq.s32.totalorder %s27, 3
      %p274 = scmp.ne.s32.totalorder %s269, %s271
      %p275 = scmp.eq.s32.totalorder %s27, 0
      %p276 = por %p274, %p275
      %p277 = scmp.ne.s32.totalorder %s269, %s271
      %p278 = scmp.eq.s32.totalorder %s32, 3
      %p279 = por %p277, %p278
      %p280 = scmp.ne.s32.totalorder %s271, %s272
      %p281 = scmp.eq.s32.totalorder %s32, 0
      %p282 = por %p280, %p281
      %p283 = scmp.ne.s32.totalorder %s271, %s272
      %p284 = scmp.eq.s32.totalorder %s33, 3
      %p285 = por %p283, %p284
      %p287 = scmp.ne.s32.totalorder %s272, %s286
      %p288 = scmp.eq.s32.totalorder %s33, 0
      %p289 = por %p287, %p288
      %s291 = sadd.s32 %s290, 1
      %p294 = scmp.eq.s32.totalorder %s27, 3
      %p295 = scmp.ne.s32.totalorder %s290, %s292
      %p296 = scmp.eq.s32.totalorder %s27, 0
      %p297 = por %p295, %p296
      %p298 = scmp.ne.s32.totalorder %s290, %s292
      %p299 = scmp.eq.s32.totalorder %s32, 3
      %p300 = por %p298, %p299
      %p301 = scmp.ne.s32.totalorder %s292, %s293
      %p302 = scmp.eq.s32.totalorder %s32, 0
      %p303 = por %p301, %p302
      %p304 = scmp.ne.s32.totalorder %s292, %s293
      %p305 = scmp.eq.s32.totalorder %s33, 3
      %p306 = por %p304, %p305
      %p308 = scmp.ne.s32.totalorder %s293, %s307
      %p309 = scmp.eq.s32.totalorder %s33, 0
      %p310 = por %p308, %p309
      %s312 = sadd.s32 %s311, 1
      %p315 = scmp.eq.s32.totalorder %s27, 3
      %p316 = scmp.ne.s32.totalorder %s311, %s313
      %p317 = scmp.eq.s32.totalorder %s27, 0
      %p318 = por %p316, %p317
      %p319 = scmp.ne.s32.totalorder %s311, %s313
      %p320 = scmp.eq.s32.totalorder %s32, 3
      %p321 = por %p319, %p320
      %p322 = scmp.ne.s32.totalorder %s313, %s314
      %p323 = scmp.eq.s32.totalorder %s32, 0
      %p324 = por %p322, %p323
      %p325 = scmp.ne.s32.totalorder %s313, %s314
      %p326 = scmp.eq.s32.totalorder %s33, 3
      %p327 = por %p325, %p326
      %p329 = scmp.ne.s32.totalorder %s314, %s328
      %p330 = scmp.eq.s32.totalorder %s33, 0
      %p331 = por %p329, %p330
      %s333 = sadd.s32 %s332, 1
      %p336 = scmp.eq.s32.totalorder %s27, 3
      %p337 = scmp.ne.s32.totalorder %s332, %s334
      %p338 = scmp.eq.s32.totalorder %s27, 0
      %p339 = por %p337, %p338
      %p340 = scmp.ne.s32.totalorder %s332, %s334
      %p341 = scmp.eq.s32.totalorder %s32, 3
      %p342 = por %p340, %p341
      %p343 = scmp.ne.s32.totalorder %s334, %s335
      %p344 = scmp.eq.s32.totalorder %s32, 0
      %p345 = por %p343, %p344
      %p346 = scmp.ne.s32.totalorder %s334, %s335
      %p347 = scmp.eq.s32.totalorder %s33, 3
      %p348 = por %p346, %p347
      %p350 = scmp.ne.s32.totalorder %s335, %s349
      %p351 = scmp.eq.s32.totalorder %s33, 0
      %p352 = por %p350, %p351
      %s354 = sadd.s32 %s353, 1
      %p357 = scmp.eq.s32.totalorder %s27, 3
      %p358 = scmp.ne.s32.totalorder %s353, %s355
      %p359 = scmp.eq.s32.totalorder %s27, 0
      %p360 = por %p358, %p359
      %p361 = scmp.ne.s32.totalorder %s353, %s355
      %p362 = scmp.eq.s32.totalorder %s32, 3
      %p363 = por %p361, %p362
      %p364 = scmp.ne.s32.totalorder %s355, %s356
      %p365 = scmp.eq.s32.totalorder %s32, 0
      %p366 = por %p364, %p365
      %p367 = scmp.ne.s32.totalorder %s355, %s356
      %p368 = scmp.eq.s32.totalorder %s33, 3
      %p369 = por %p367, %p368
      %p371 = scmp.ne.s32.totalorder %s356, %s370
      %p372 = scmp.eq.s32.totalorder %s33, 0
      %p373 = por %p371, %p372
      %s375 = sadd.s32 %s374, 1
      %p378 = scmp.eq.s32.totalorder %s27, 3
      %p379 = scmp.ne.s32.totalorder %s374, %s376
      %p380 = scmp.eq.s32.totalorder %s27, 0
      %p381 = por %p379, %p380
      %p382 = scmp.ne.s32.totalorder %s374, %s376
      %p383 = scmp.eq.s32.totalorder %s32, 3
      %p384 = por %p382, %p383
      %p385 = scmp.ne.s32.totalorder %s376, %s377
      %p386 = scmp.eq.s32.totalorder %s32, 0
      %p387 = por %p385, %p386
      %p388 = scmp.ne.s32.totalorder %s376, %s377
      %p389 = scmp.eq.s32.totalorder %s33, 3
      %p390 = por %p388, %p389
      %p392 = scmp.ne.s32.totalorder %s377, %s391
      %p393 = scmp.eq.s32.totalorder %s33, 0
      %p394 = por %p392, %p393
      %s395 = ssub.s32 %s34, %s46
      %s396 = ssub.s32 %s35, %s42
      %s397 = sor.u32 %s395, %s396
      %p398 = scmp.eq.s32.totalorder %s397, 0
      %s400 = sadd.s32 %s399, 1
      %s401 = scalar_select %p398, %s399, %s400
      %p404 = pneg %p398
      %p405 = scmp.eq.s32.totalorder %s27, 3
      %p406 = por %p404, %p405
      %p407 = scmp.ne.s32.totalorder %s399, %s402
      %p408 = scmp.eq.s32.totalorder %s27, 0
      %p409 = por %p407, %p408
      %p410 = scmp.ne.s32.totalorder %s399, %s402
      %p411 = scmp.eq.s32.totalorder %s32, 3
      %p412 = por %p410, %p411
      %p413 = scmp.ne.s32.totalorder %s402, %s403
      %p414 = scmp.eq.s32.totalorder %s32, 0
      %p415 = por %p413, %p414
      %p416 = scmp.ne.s32.totalorder %s402, %s403
      %p417 = scmp.eq.s32.totalorder %s33, 3
      %p418 = por %p416, %p417
      %p420 = scmp.ne.s32.totalorder %s403, %s419
      %p421 = scmp.eq.s32.totalorder %s33, 0
      %p422 = por %p420, %p421
      %p423 = scmp.le.s32.totalorder 1, %s27
      %p424 = scmp.lt.s32.totalorder %s27, 5
      %p425 = pnand %p423, %p424
      %p426 = pneg %p425
      // Predicated region
      $region9: #{tpu_custom_call.1} parent=5 // pred_check
        _
      $region10: #{tpu_custom_call.1} parent=5 // pred_check_branch
        %428 = sbr.rel (%p425) target = $region12
      $region11: #{tpu_custom_call.1} parent=5 // pred_region
        %s429 = ssub.s32 %s27, 1
        // Predicated region
        $region13: #{tpu_custom_call.1} parent=11 // pred_check
          %p430 = pneg %p114
        $region14: #{tpu_custom_call.1} parent=11 // pred_check_branch
          %432 = sbr.rel (%p430) target = $region16
        $region15: #{tpu_custom_call.1} parent=11 // pred_region
          _
        $region16: #{tpu_custom_call.1} parent=11 // pred_fallthru
          _
        // Predicated region
        $region17: #{tpu_custom_call.1} parent=11 // pred_check
          %p433 = pneg %p135
        $region18: #{tpu_custom_call.1} parent=11 // pred_check_branch
          %435 = sbr.rel (%p433) target = $region20
        $region19: #{tpu_custom_call.1} parent=11 // pred_region
          _
        $region20: #{tpu_custom_call.1} parent=11 // pred_fallthru
          _
        // Predicated region
        $region21: #{tpu_custom_call.1} parent=11 // pred_check
          %p436 = pneg %p156
        $region22: #{tpu_custom_call.1} parent=11 // pred_check_branch
          %438 = sbr.rel (%p436) target = $region24
        $region23: #{tpu_custom_call.1} parent=11 // pred_region
          %440 = vsyncadd [#allocation5], 0
          %s441 = sshll.u32 %s4, 4
          %s442 = int_to_ptr.hbm [resolvable:$true] %s441
          %s443 = sshll.u32 [#allocation4], 4
          %s444 = int_to_ptr.vmem [resolvable:$true] %s443
          %449 = dma.hbm_to_vmem [thread:$0]  %s442, 256, %s444, [#allocation5], 64, 64, 4
        $region24: #{tpu_custom_call.1} parent=11 // pred_fallthru
          _
        // Predicated region
        $region25: #{tpu_custom_call.1} parent=11 // pred_check
          %p450 = pneg %p177
        $region26: #{tpu_custom_call.1} parent=11 // pred_check_branch
          %452 = sbr.rel (%p450) target = $region28
        $region27: #{tpu_custom_call.1} parent=11 // pred_region
          _
        $region28: #{tpu_custom_call.1} parent=11 // pred_fallthru
          _
        // Predicated region
        $region29: #{tpu_custom_call.1} parent=11 // pred_check
          %p453 = pneg %p198
        $region30: #{tpu_custom_call.1} parent=11 // pred_check_branch
          %455 = sbr.rel (%p453) target = $region32
        $region31: #{tpu_custom_call.1} parent=11 // pred_region
          %457 = vsyncadd [#allocation8], 0
          %s458 = sshll.u32 %s6, 4
          %s459 = int_to_ptr.hbm [resolvable:$true] %s458
          %s460 = sshll.u32 [#allocation7], 4
          %s461 = int_to_ptr.vmem [resolvable:$true] %s460
          %466 = dma.hbm_to_vmem [thread:$0]  %s459, 256, %s461, [#allocation8], 64, 64, 4
        $region32: #{tpu_custom_call.1} parent=11 // pred_fallthru
          _
        // Predicated region
        $region33: #{tpu_custom_call.1} parent=11 // pred_check
          %p467 = pneg %p219
        $region34: #{tpu_custom_call.1} parent=11 // pred_check_branch
          %469 = sbr.rel (%p467) target = $region36
        $region35: #{tpu_custom_call.1} parent=11 // pred_region
          _
        $region36: #{tpu_custom_call.1} parent=11 // pred_fallthru
          _
        // Predicated region
        $region37: #{tpu_custom_call.1} parent=11 // pred_check
          %p470 = pneg %p240
        $region38: #{tpu_custom_call.1} parent=11 // pred_check_branch
          %472 = sbr.rel (%p470) target = $region40
        $region39: #{tpu_custom_call.1} parent=11 // pred_region
          _
        $region40: #{tpu_custom_call.1} parent=11 // pred_fallthru
          _
        // Predicated region
        $region41: #{tpu_custom_call.1} parent=11 // pred_check
          %p473 = pneg %p261
        $region42: #{tpu_custom_call.1} parent=11 // pred_check_branch
          %475 = sbr.rel (%p473) target = $region44
        $region43: #{tpu_custom_call.1} parent=11 // pred_region
          _
        $region44: #{tpu_custom_call.1} parent=11 // pred_fallthru
          _
        // Predicated region
        $region45: #{tpu_custom_call.1} parent=11 // pred_check
          %p476 = pneg %p282
        $region46: #{tpu_custom_call.1} parent=11 // pred_check_branch
          %478 = sbr.rel (%p476) target = $region48
        $region47: #{tpu_custom_call.1} parent=11 // pred_region
          %480 = vsyncadd [#allocation8], 0
          %s481 = sshll.u32 %s10, 4
          %s482 = int_to_ptr.hbm [resolvable:$true] %s481
          %s483 = sshll.u32 [#allocation9], 4
          %s484 = int_to_ptr.vmem [resolvable:$true] %s483
          %489 = dma.hbm_to_vmem [thread:$0]  %s482, 256, %s484, [#allocation8], 64, 64, 4
        $region48: #{tpu_custom_call.1} parent=11 // pred_fallthru
          _
        // Predicated region
        $region49: #{tpu_custom_call.1} parent=11 // pred_check
          %p490 = pneg %p303
        $region50: #{tpu_custom_call.1} parent=11 // pred_check_branch
          %492 = sbr.rel (%p490) target = $region52
        $region51: #{tpu_custom_call.1} parent=11 // pred_region
          _
        $region52: #{tpu_custom_call.1} parent=11 // pred_fallthru
          _
        // Predicated region
        $region53: #{tpu_custom_call.1} parent=11 // pred_check
          %p493 = pneg %p324
        $region54: #{tpu_custom_call.1} parent=11 // pred_check_branch
          %495 = sbr.rel (%p493) target = $region56
        $region55: #{tpu_custom_call.1} parent=11 // pred_region
          _
        $region56: #{tpu_custom_call.1} parent=11 // pred_fallthru
          _
        // Predicated region
        $region57: #{tpu_custom_call.1} parent=11 // pred_check
          %p496 = pneg %p345
        $region58: #{tpu_custom_call.1} parent=11 // pred_check_branch
          %498 = sbr.rel (%p496) target = $region60
        $region59: #{tpu_custom_call.1} parent=11 // pred_region
          _
        $region60: #{tpu_custom_call.1} parent=11 // pred_fallthru
          _
        // Predicated region
        $region61: #{tpu_custom_call.1} parent=11 // pred_check
          %p499 = pneg %p366
        $region62: #{tpu_custom_call.1} parent=11 // pred_check_branch
          %501 = sbr.rel (%p499) target = $region64
        $region63: #{tpu_custom_call.1} parent=11 // pred_region
          _
        $region64: #{tpu_custom_call.1} parent=11 // pred_fallthru
          _
        // Predicated region
        $region65: #{tpu_custom_call.1} parent=11 // pred_check
          %p502 = pneg %p387
        $region66: #{tpu_custom_call.1} parent=11 // pred_check_branch
          %504 = sbr.rel (%p502) target = $region68
        $region67: #{tpu_custom_call.1} parent=11 // pred_region
          _
        $region68: #{tpu_custom_call.1} parent=11 // pred_fallthru
          _
      $region12: #{tpu_custom_call.1} parent=5 // pred_fallthru
        _
      %p505 = scmp.lt.s32.totalorder %s27, 4
      // Predicated region
      $region69: #{tpu_custom_call.1} parent=5 // pred_check
        %p506 = pneg %p505
      $region70: #{tpu_custom_call.1} parent=5 // pred_check_branch
        %508 = sbr.rel (%p506) target = $region72
      $region71: #{tpu_custom_call.1} parent=5 // pred_region
        // Predicated region
        $region73: #{tpu_custom_call.1} parent=71 // pred_check
          %p509 = pneg %p59
        $region74: #{tpu_custom_call.1} parent=71 // pred_check_branch
          %511 = sbr.rel (%p509) target = $region76
        $region75: #{tpu_custom_call.1} parent=71 // pred_region
          %p512 = scmp.lt.s32.totalorder %s34, 1
          %s513 = scalar_select %p512, %s34, 1
          %s514 = smul.addr %s513, 2
          %s515 = smul.addr %s514, 8
          %s516 = scalar_lea.vmem %s0, %s515
        $region76: #{tpu_custom_call.1} parent=71 // pred_fallthru
          _
        // Predicated region
        $region77: #{tpu_custom_call.1} parent=71 // pred_check
          %p517 = pneg %p87
        $region78: #{tpu_custom_call.1} parent=71 // pred_check_branch
          %519 = sbr.rel (%p517) target = $region80
        $region79: #{tpu_custom_call.1} parent=71 // pred_region
          %p520 = scmp.lt.s32.totalorder %s34, 1
          %s521 = scalar_select %p520, %s34, 1
          %p522 = scmp.lt.s32.totalorder %s35, 1
          %s523 = scalar_select %p522, %s35, 1
          %s524 = smul.addr %s521, 2
          %s525 = sadd.s32 %s523, %s524
          %s526 = smul.addr %s525, 8
          %s527 = scalar_lea.vmem %s1, %s526
        $region80: #{tpu_custom_call.1} parent=71 // pred_fallthru
          _
      $region72: #{tpu_custom_call.1} parent=5 // pred_fallthru
        _
      %p528 = scmp.le.s32.totalorder 1, %s27
      %p529 = scmp.lt.s32.totalorder %s27, 5
      %p530 = pnand %p528, %p529
      %p531 = pneg %p530
      // Predicated region
      $region81: #{tpu_custom_call.1} parent=5 // pred_check
        _
      $region82: #{tpu_custom_call.1} parent=5 // pred_check_branch
        %533 = sbr.rel (%p530) target = $region84
      $region83: #{tpu_custom_call.1} parent=5 // pred_region
        %s534 = ssub.s32 %s27, 1
        // Predicated region
        $region85: #{tpu_custom_call.1} parent=83 // pred_check
          %p535 = pneg %p156
        $region86: #{tpu_custom_call.1} parent=83 // pred_check_branch
          %537 = sbr.rel (%p535) target = $region88
        $region87: #{tpu_custom_call.1} parent=83 // pred_region
          %539 = dma.done [#allocation5], 256
        $region88: #{tpu_custom_call.1} parent=83 // pred_fallthru
          _
        // Predicated region
        $region89: #{tpu_custom_call.1} parent=83 // pred_check
          %p540 = pneg %p198
        $region90: #{tpu_custom_call.1} parent=83 // pred_check_branch
          %542 = sbr.rel (%p540) target = $region92
        $region91: #{tpu_custom_call.1} parent=83 // pred_region
          %544 = dma.done [#allocation8], 256
        $region92: #{tpu_custom_call.1} parent=83 // pred_fallthru
          _
        // Predicated region
        $region93: #{tpu_custom_call.1} parent=83 // pred_check
          %p545 = pneg %p282
        $region94: #{tpu_custom_call.1} parent=83 // pred_check_branch
          %547 = sbr.rel (%p545) target = $region96
        $region95: #{tpu_custom_call.1} parent=83 // pred_region
          %549 = dma.done [#allocation8], 256
        $region96: #{tpu_custom_call.1} parent=83 // pred_fallthru
          _
        %p550 = scmp.lt.s32.totalorder %s36, 1
        %s551 = scalar_select %p550, %s36, 1
        %s552 = smul.addr %s551, 2
        %s553 = smul.addr %s552, 8
        %s554 = scalar_lea.vmem %s0, %s553
        %p555 = pneg %p65
        %p556 = pneg %p62
        %p557 = scmp.lt.s32.totalorder %s36, 1
        %s558 = scalar_select %p557, %s36, 1
        %p559 = scmp.lt.s32.totalorder %s37, 1
        %s560 = scalar_select %p559, %s37, 1
        %s561 = smul.addr %s558, 2
        %s562 = sadd.s32 %s560, %s561
        %s563 = smul.addr %s562, 8
        %s564 = scalar_lea.vmem %s1, %s563
        %p565 = pneg %p93
        %p566 = pneg %p90
        %p567 = pneg %p114
        %p568 = pneg %p111
        %p569 = pneg %p135
        %p570 = pneg %p132
        %p571 = pneg %p156
        %p572 = pneg %p153
        %p573 = pneg %p177
        %p574 = pneg %p174
        %p575 = pneg %p198
        %p576 = pneg %p195
        %p577 = pneg %p219
        %p578 = pneg %p216
        %p579 = pneg %p240
        %p580 = pneg %p237
        %p581 = pneg %p261
        %p582 = pneg %p258
        %p583 = pneg %p282
        %p584 = pneg %p279
        %p585 = pneg %p303
        %p586 = pneg %p300
        %p587 = pneg %p324
        %p588 = pneg %p321
        %p589 = pneg %p345
        %p590 = pneg %p342
        %p591 = pneg %p366
        %p592 = pneg %p363
        %p593 = pneg %p387
        %p594 = pneg %p384
        %p595 = pneg %p415
        %p596 = pneg %p412
        %s597 = sand.u32 %s402, 1
        %s598 = scalar_lea.sflag [#allocation6], %s597
        %s599 = sand.u32 %s402, 1
        %s600 = smul.addr %s599, 8
        %s601 = scalar_lea.vmem [#allocation10], %s600
        %p602 = scmp.lt.s32.totalorder %s36, 1
        %s603 = scalar_select %p602, %s36, 1
        %s604 = smul.addr %s603, 2
        %s605 = smul.addr %s604, 8
        %s606 = scalar_lea.vmem %s0, %s605
        %p607 = scmp.lt.s32.totalorder %s36, 1
        %s608 = scalar_select %p607, %s36, 1
        %p609 = scmp.lt.s32.totalorder %s37, 1
        %s610 = scalar_select %p609, %s37, 1
        %s611 = smul.addr %s608, 2
        %s612 = sadd.s32 %s610, %s611
        %s613 = smul.addr %s612, 8
        %s614 = scalar_lea.vmem %s1, %s613
        %p616 = scmp.eq.s32.totalorder %s37, 0
        // Predicated region
        $region97: #{tpu_custom_call.1} parent=83 // pred_check
          %p617 = pneg %p616
        $region98: #{tpu_custom_call.1} parent=83 // pred_check_branch
          %619 = sbr.rel (%p617) target = $region100
        $region99: #{tpu_custom_call.1} parent=83 // pred_region
          %v620 = vld [vmem:[%s606] sm:$0xff]
          %v621 = vld [vmem:[%s606 + $0x8] sm:$0xff]
          %v622 = vpack.c.bf16 %v621, %v620
          %v623 = vld [vmem:[#allocation4] sm:$0xf]
          %v624 = vld [vmem:[#allocation4 + $0x4] sm:$0xf]
          %v625 = vld [vmem:[#allocation4 + $0x8] sm:$0xf]
          %v626 = vld [vmem:[#allocation4 + $0xc] sm:$0xf]
          %v627 = vld [vmem:[%s5] sm:$0x1]
          %v629 = vperm.slane %v627, 0
          %v635 = vunpack.c.l.b16 %v623
          %v636 = vunpack.c.l.b16 %v624
          %v637 = vunpack.c.l.b16 %v625
          %v638 = vunpack.c.l.b16 %v626
          %v639 = vpack.c.b16 %v636, %v635
          %v640 = vpack.c.b16 %v638, %v637
          %vm643 = vcmask 261120
          %v645 = vsel %vm643, %v622, 0
          %647 = vmatpush.bf16.msra.mxu0 0
          %648 = vmatpush.bf16.msra.mxu0 0
          %649 = vmatpush.bf16.msra.mxu0 0
          %650 = vmatpush.bf16.msra.mxu0 0
          %651 = vmatpush.bf16.msra.mxu0 0
          %652 = vmatpush.bf16.msra.mxu0 0
          %653 = vmatpush.bf16.msra.mxu0 %v640
          %654 = vmatpush.bf16.msra.mxu0 %v639
          %655 = vmatmul.bf16.gmra.mxu0 %v645
          %v656 = vpop.f32.mrf.mxu0
          %v657 = vadd.f32 %v629, %v656
          %v658 = vpop.f32.mrf.mxu0
          %v659 = vadd.f32 %v629, %v658
          %660 = vdwg.mxu0
          %v661 = vpack.c.bf16 %v657, %v657
          %v662 = vpack.c.bf16 %v659, %v659
          %vm663 = vcmask 60416
          %664 = vst.msk [vmem:[#allocation2] sm:$0xf] %vm663, %v661
          %665 = vst.msk [vmem:[#allocation2 + $0x4] sm:$0xf] %vm663, %v662
          %668 = vrot.lane.b32.xlu0 %v661, 96
          %v669 = vpop.permute.xlu0 %668
          %670 = vrot.lane.b32.xlu0 %v662, 96
          %v671 = vpop.permute.xlu0 %670
          %674 = vst.msk [vmem:[#allocation3] sm:$0xf] %vm663, %v669
          %675 = vst.msk [vmem:[#allocation3 + $0x4] sm:$0xf] %vm663, %v671
          %676 = vrot.lane.b32.xlu0 %v661, 120
          %v677 = vpop.permute.xlu0 %676
          %678 = vrot.lane.b32.xlu0 %v662, 120
          %v679 = vpop.permute.xlu0 %678
          %s682 = scalar_lea.vmem [#allocation2], 8
          %683 = vst.msk [vmem:[%s682] sm:$0xf] %vm663, %v677
          %684 = vst.msk [vmem:[%s682 + $0x4] sm:$0xf] %vm663, %v679
          %685 = vrot.lane.b32.xlu0 %v661, 88
          %v686 = vpop.permute.xlu0 %685
          %687 = vrot.lane.b32.xlu0 %v662, 88
          %v688 = vpop.permute.xlu0 %687
          %s691 = scalar_lea.vmem [#allocation3], 8
          %692 = vst.msk [vmem:[%s691] sm:$0xf] %vm663, %v686
          %693 = vst.msk [vmem:[%s691 + $0x4] sm:$0xf] %vm663, %v688
          %694 = vrot.lane.b32.xlu0 %v661, 112
          %v695 = vpop.permute.xlu0 %694
          %696 = vrot.lane.b32.xlu0 %v662, 112
          %v697 = vpop.permute.xlu0 %696
          %s700 = scalar_lea.vmem [#allocation2], 16
          %701 = vst.msk [vmem:[%s700] sm:$0xf] %vm663, %v695
          %702 = vst.msk [vmem:[%s700 + $0x4] sm:$0xf] %vm663, %v697
          %703 = vrot.lane.b32.xlu0 %v661, 80
          %v704 = vpop.permute.xlu0 %703
          %705 = vrot.lane.b32.xlu0 %v662, 80
          %v706 = vpop.permute.xlu0 %705
          %s709 = scalar_lea.vmem [#allocation3], 16
          %710 = vst.msk [vmem:[%s709] sm:$0xf] %vm663, %v704
          %711 = vst.msk [vmem:[%s709 + $0x4] sm:$0xf] %vm663, %v706
          %712 = vrot.lane.b32.xlu0 %v661, 104
          %v713 = vpop.permute.xlu0 %712
          %714 = vrot.lane.b32.xlu0 %v662, 104
          %v715 = vpop.permute.xlu0 %714
          %s718 = scalar_lea.vmem [#allocation2], 24
          %719 = vst.msk [vmem:[%s718] sm:$0xf] %vm663, %v713
          %720 = vst.msk [vmem:[%s718 + $0x4] sm:$0xf] %vm663, %v715
          %721 = vrot.lane.b32.xlu0 %v661, 72
          %v722 = vpop.permute.xlu0 %721
          %723 = vrot.lane.b32.xlu0 %v662, 72
          %v724 = vpop.permute.xlu0 %723
          %s727 = scalar_lea.vmem [#allocation3], 24
          %728 = vst.msk [vmem:[%s727] sm:$0xf] %vm663, %v722
          %729 = vst.msk [vmem:[%s727 + $0x4] sm:$0xf] %vm663, %v724
        $region100: #{tpu_custom_call.1} parent=83 // pred_fallthru
          _
        %v730 = vld [vmem:[%s614] sm:$0xff]
        %v731 = vpack.c.bf16 %v730, %v730
        %v732 = vld [vmem:[%s2] sm:$0xf]
        %v733 = vld [vmem:[%s2 + $0x4] sm:$0xf]
        %v734 = vld [vmem:[%s2 + $0x8] sm:$0xf]
        %v735 = vld [vmem:[%s2 + $0xc] sm:$0xf]
        %v736 = vld [vmem:[%s3] sm:$0x1]
        %v738 = vperm.slane %v736, 0
        %v744 = vunpack.c.l.b16 %v732
        %v745 = vunpack.c.l.b16 %v733
        %v746 = vunpack.c.l.b16 %v734
        %v747 = vunpack.c.l.b16 %v735
        %v748 = vpack.c.b16 %v745, %v744
        %v749 = vpack.c.b16 %v747, %v746
        %vm752 = vcmask 261120
        %v754 = vsel %vm752, %v731, 0
        %756 = vmatpush.bf16.msra.mxu0 0
        %757 = vmatpush.bf16.msra.mxu0 0
        %758 = vmatpush.bf16.msra.mxu0 0
        %759 = vmatpush.bf16.msra.mxu0 0
        %760 = vmatpush.bf16.msra.mxu0 0
        %761 = vmatpush.bf16.msra.mxu0 0
        %762 = vmatpush.bf16.msra.mxu0 %v749
        %763 = vmatpush.bf16.msra.mxu0 %v748
        %764 = vmatmul.bf16.gmra.mxu0 %v754
        %v765 = vpop.f32.mrf.mxu0
        %v766 = vadd.f32 %v738, %v765
        %v767 = vpop.f32.mrf.mxu0
        %768 = vdwg.mxu0
        %v769 = vmul.f32 %v766, 0.35355338
        %v770 = vpack.c.bf16 %v769, %v769
        %772 = vrot.lane.b32.xlu0 %v770, 120
        %v773 = vpop.permute.xlu0 %772
        %774 = vrot.lane.b32.xlu0 %v770, 112
        %v775 = vpop.permute.xlu0 %774
        %776 = vrot.lane.b32.xlu0 %v770, 104
        %v777 = vpop.permute.xlu0 %776
        %v778 = vld [vmem:[#allocation2] sm:$0xf]
        %v779 = vld [vmem:[#allocation2 + $0x4] sm:$0xf]
        %v780 = vld [vmem:[#allocation2 + $0x8] sm:$0xf]
        %v781 = vld [vmem:[#allocation2 + $0xc] sm:$0xf]
        %v782 = vld [vmem:[#allocation2 + $0x10] sm:$0xf]
        %v783 = vld [vmem:[#allocation2 + $0x14] sm:$0xf]
        %v784 = vld [vmem:[#allocation2 + $0x18] sm:$0xf]
        %v785 = vld [vmem:[#allocation2 + $0x1c] sm:$0xf]
        %v788 = vunpack.c.l.b16 %v778
        %v789 = vunpack.c.l.b16 %v779
        %v790 = vpack.c.b16 %v789, %v788
        %vm791 = vcmask 64512
        %v793 = vsel %vm791, %v770, 0
        %v796 = vsel %vm791, %v790, 0
        %798 = vmatpush.bf16.xpose.msra.mxu0 0
        %799 = vmatpush.bf16.xpose.msra.mxu0 0
        %800 = vmatpush.bf16.xpose.msra.mxu0 0
        %801 = vmatpush.bf16.xpose.msra.mxu0 0
        %802 = vmatpush.bf16.xpose.msra.mxu0 0
        %803 = vmatpush.bf16.xpose.msra.mxu0 0
        %804 = vmatpush.bf16.xpose.msra.mxu0 0
        %805 = vmatpush.bf16.xpose.msra.mxu0 %v796
        %806 = vmatmul.bf16.gmra.mxu0 %v793
        %v807 = vpop.f32.mrf.mxu0
        %v808 = vadd.f32 0.0, %v807
        %v809 = vpop.f32.mrf.mxu0
        %810 = vdwg.mxu0
        %v813 = vunpack.c.l.b16 %v780
        %v814 = vunpack.c.l.b16 %v781
        %v815 = vpack.c.b16 %v814, %v813
        %v817 = vsel %vm791, %v773, 0
        %v820 = vsel %vm791, %v815, 0
        %822 = vmatpush.bf16.xpose.msra.mxu0 0
        %823 = vmatpush.bf16.xpose.msra.mxu0 0
        %824 = vmatpush.bf16.xpose.msra.mxu0 0
        %825 = vmatpush.bf16.xpose.msra.mxu0 0
        %826 = vmatpush.bf16.xpose.msra.mxu0 0
        %827 = vmatpush.bf16.xpose.msra.mxu0 0
        %828 = vmatpush.bf16.xpose.msra.mxu0 0
        %829 = vmatpush.bf16.xpose.msra.mxu0 %v820
        %830 = vmatmul.bf16.gmra.mxu0 %v817
        %v831 = vpop.f32.mrf.mxu0
        %v832 = vadd.f32 0.0, %v831
        %v833 = vpop.f32.mrf.mxu0
        %834 = vdwg.mxu0
        %v837 = vunpack.c.l.b16 %v782
        %v838 = vunpack.c.l.b16 %v783
        %v839 = vpack.c.b16 %v838, %v837
        %v841 = vsel %vm791, %v775, 0
        %v844 = vsel %vm791, %v839, 0
        %846 = vmatpush.bf16.xpose.msra.mxu0 0
        %847 = vmatpush.bf16.xpose.msra.mxu0 0
        %848 = vmatpush.bf16.xpose.msra.mxu0 0
        %849 = vmatpush.bf16.xpose.msra.mxu0 0
        %850 = vmatpush.bf16.xpose.msra.mxu0 0
        %851 = vmatpush.bf16.xpose.msra.mxu0 0
        %852 = vmatpush.bf16.xpose.msra.mxu0 0
        %853 = vmatpush.bf16.xpose.msra.mxu0 %v844
        %854 = vmatmul.bf16.gmra.mxu0 %v841
        %v855 = vpop.f32.mrf.mxu0
        %v856 = vadd.f32 0.0, %v855
        %v857 = vpop.f32.mrf.mxu0
        %858 = vdwg.mxu0
        %v861 = vunpack.c.l.b16 %v784
        %v862 = vunpack.c.l.b16 %v785
        %v863 = vpack.c.b16 %v862, %v861
        %v865 = vsel %vm791, %v777, 0
        %v868 = vsel %vm791, %v863, 0
        %870 = vmatpush.bf16.xpose.msra.mxu0 0
        %871 = vmatpush.bf16.xpose.msra.mxu0 0
        %872 = vmatpush.bf16.xpose.msra.mxu0 0
        %873 = vmatpush.bf16.xpose.msra.mxu0 0
        %874 = vmatpush.bf16.xpose.msra.mxu0 0
        %875 = vmatpush.bf16.xpose.msra.mxu0 0
        %876 = vmatpush.bf16.xpose.msra.mxu0 0
        %877 = vmatpush.bf16.xpose.msra.mxu0 %v868
        %878 = vmatmul.bf16.gmra.mxu0 %v865
        %v879 = vpop.f32.mrf.mxu0
        %v880 = vadd.f32 0.0, %v879
        %v881 = vpop.f32.mrf.mxu0
        %882 = vdwg.mxu0
        %v883 = vlaneseq
        %v884 = vshrl.u32 %v883, 7
        %s885 = smul.u32 %s37, 8
        %v886 = vstv %s885
        %v887 = vadd.s32 %v884, %v886
        %v888 = vlaneseq
        %v889 = vand.u32 %v888, 127
        %vm890 = vcmp.ge.s32.totalorder %v887, %v889
        %v891 = vsel %vm890, 1, 0
        %vm892 = vcmp.eq.s32.totalorder %v891, 1
        %v893 = vsel %vm892, %v808, -1e+09
        %v894 = vsel %vm892, %v832, -1e+09
        %v895 = vsel %vm892, %v856, -1e+09
        %v896 = vsel %vm892, %v880, -1e+09
        %vm897 = vcmask 130048
        %v898 = vsel %vm897, %v893, -inf
        %899 = vmax.xlane.f32.xlu0 %v898
        %v900 = vpop.xlane.xlu0 %899
        %v901 = vsel %vm897, %v894, -inf
        %902 = vmax.xlane.f32.xlu0 %v901
        %v903 = vpop.xlane.xlu0 %902
        %v904 = vsel %vm897, %v895, -inf
        %905 = vmax.xlane.f32.xlu0 %v904
        %v906 = vpop.xlane.xlu0 %905
        %v907 = vsel %vm897, %v896, -inf
        %908 = vmax.xlane.f32.xlu0 %v907
        %v909 = vpop.xlane.xlu0 %908
        %v910 = vsub.f32 %v893, %v900
        %v911 = vsub.f32 %v894, %v903
        %v912 = vsub.f32 %v895, %v906
        %v913 = vsub.f32 %v896, %v909
        %v914 = vmul.f32 %v910, 1.442695
        %v915 = vpow.pop %v914
        %v916 = vmul.f32 %v911, 1.442695
        %v917 = vpow.pop %v916
        %v918 = vmul.f32 %v912, 1.442695
        %v919 = vpow.pop %v918
        %v920 = vmul.f32 %v913, 1.442695
        %v921 = vpow.pop %v920
        %v922 = vsel %vm897, %v915, 0.0
        %923 = vadd.xlane.f32.xlu0 %v922
        %v924 = vpop.xlane.xlu0 %923
        %v925 = vsel %vm897, %v917, 0.0
        %926 = vadd.xlane.f32.xlu0 %v925
        %v927 = vpop.xlane.xlu0 %926
        %v928 = vsel %vm897, %v919, 0.0
        %929 = vadd.xlane.f32.xlu0 %v928
        %v930 = vpop.xlane.xlu0 %929
        %v931 = vsel %vm897, %v921, 0.0
        %932 = vadd.xlane.f32.xlu0 %v931
        %v933 = vpop.xlane.xlu0 %932
        %v934 = vrcp.pop %v924
        %v935 = vrcp.pop %v927
        %v936 = vrcp.pop %v930
        %v937 = vrcp.pop %v933
        %v938 = vmul.f32 %v915, %v934
        %v939 = vmul.f32 %v917, %v935
        %v940 = vmul.f32 %v919, %v936
        %v941 = vmul.f32 %v921, %v937
        %v942 = vpack.c.bf16 %v938, %v938
        %v943 = vpack.c.bf16 %v939, %v939
        %v944 = vpack.c.bf16 %v940, %v940
        %v945 = vpack.c.bf16 %v941, %v941
        %v946 = vld [vmem:[#allocation3] sm:$0xf]
        %v947 = vld [vmem:[#allocation3 + $0x4] sm:$0xf]
        %v948 = vld [vmem:[#allocation3 + $0x8] sm:$0xf]
        %v949 = vld [vmem:[#allocation3 + $0xc] sm:$0xf]
        %v950 = vld [vmem:[#allocation3 + $0x10] sm:$0xf]
        %v951 = vld [vmem:[#allocation3 + $0x14] sm:$0xf]
        %v952 = vld [vmem:[#allocation3 + $0x18] sm:$0xf]
        %v953 = vld [vmem:[#allocation3 + $0x1c] sm:$0xf]
        %v956 = vunpack.c.l.b16 %v946
        %v957 = vunpack.c.l.b16 %v947
        %v958 = vpack.c.b16 %v957, %v956
        %v961 = vsel %vm897, %v942, 0
        %963 = vmatpush.bf16.msra.mxu0 0
        %964 = vmatpush.bf16.msra.mxu0 0
        %965 = vmatpush.bf16.msra.mxu0 0
        %966 = vmatpush.bf16.msra.mxu0 0
        %967 = vmatpush.bf16.msra.mxu0 0
        %968 = vmatpush.bf16.msra.mxu0 0
        %969 = vmatpush.bf16.msra.mxu0 0
        %970 = vmatpush.bf16.msra.mxu0 %v958
        %971 = vmatmul.bf16.gmra.mxu0 %v961
        %v972 = vpop.f32.mrf.mxu0
        %v973 = vadd.f32 0.0, %v972
        %v974 = vpop.f32.mrf.mxu0
        %975 = vdwg.mxu0
        %v978 = vunpack.c.l.b16 %v948
        %v979 = vunpack.c.l.b16 %v949
        %v980 = vpack.c.b16 %v979, %v978
        %v983 = vsel %vm897, %v943, 0
        %985 = vmatpush.bf16.msra.mxu0 0
        %986 = vmatpush.bf16.msra.mxu0 0
        %987 = vmatpush.bf16.msra.mxu0 0
        %988 = vmatpush.bf16.msra.mxu0 0
        %989 = vmatpush.bf16.msra.mxu0 0
        %990 = vmatpush.bf16.msra.mxu0 0
        %991 = vmatpush.bf16.msra.mxu0 0
        %992 = vmatpush.bf16.msra.mxu0 %v980
        %993 = vmatmul.bf16.gmra.mxu0 %v983
        %v994 = vpop.f32.mrf.mxu0
        %v995 = vadd.f32 0.0, %v994
        %v996 = vpop.f32.mrf.mxu0
        %997 = vdwg.mxu0
        %v1000 = vunpack.c.l.b16 %v950
        %v1001 = vunpack.c.l.b16 %v951
        %v1002 = vpack.c.b16 %v1001, %v1000
        %v1005 = vsel %vm897, %v944, 0
        %1007 = vmatpush.bf16.msra.mxu0 0
        %1008 = vmatpush.bf16.msra.mxu0 0
        %1009 = vmatpush.bf16.msra.mxu0 0
        %1010 = vmatpush.bf16.msra.mxu0 0
        %1011 = vmatpush.bf16.msra.mxu0 0
        %1012 = vmatpush.bf16.msra.mxu0 0
        %1013 = vmatpush.bf16.msra.mxu0 0
        %1014 = vmatpush.bf16.msra.mxu0 %v1002
        %1015 = vmatmul.bf16.gmra.mxu0 %v1005
        %v1016 = vpop.f32.mrf.mxu0
        %v1017 = vadd.f32 0.0, %v1016
        %v1018 = vpop.f32.mrf.mxu0
        %1019 = vdwg.mxu0
        %v1022 = vunpack.c.l.b16 %v952
        %v1023 = vunpack.c.l.b16 %v953
        %v1024 = vpack.c.b16 %v1023, %v1022
        %v1027 = vsel %vm897, %v945, 0
        %1029 = vmatpush.bf16.msra.mxu0 0
        %1030 = vmatpush.bf16.msra.mxu0 0
        %1031 = vmatpush.bf16.msra.mxu0 0
        %1032 = vmatpush.bf16.msra.mxu0 0
        %1033 = vmatpush.bf16.msra.mxu0 0
        %1034 = vmatpush.bf16.msra.mxu0 0
        %1035 = vmatpush.bf16.msra.mxu0 0
        %1036 = vmatpush.bf16.msra.mxu0 %v1024
        %1037 = vmatmul.bf16.gmra.mxu0 %v1027
        %v1038 = vpop.f32.mrf.mxu0
        %v1039 = vadd.f32 0.0, %v1038
        %v1040 = vpop.f32.mrf.mxu0
        %1041 = vdwg.mxu0
        %v1042 = vpack.c.bf16 %v973, %v973
        %v1043 = vld [vmem:[#allocation7] sm:$0xf]
        %v1044 = vpack.c.bf16 %v995, %v995
        %v1045 = vld [vmem:[#allocation7 + $0x4] sm:$0xf]
        %v1047 = vsel %vm791, %v1044, 0
        %vm1049 = vcmask 1043456
        %v1051 = vsel %vm1049, %v1045, 0
        %1053 = vmatpush.bf16.msra.mxu0 0
        %1054 = vmatpush.bf16.msra.mxu0 0
        %1055 = vmatpush.bf16.msra.mxu0 0
        %1056 = vmatpush.bf16.msra.mxu0 0
        %1057 = vmatpush.bf16.msra.mxu0 0
        %1058 = vmatpush.bf16.msra.mxu0 0
        %1059 = vmatpush.bf16.msra.mxu0 0
        %1060 = vmatpush.bf16.msra.mxu0 %v1051
        %1061 = vmatmul.bf16.gmra.mxu0 %v1047
        %v1062 = vpop.f32.mrf.mxu0
        %v1063 = vadd.f32 0.0, %v1062
        %v1064 = vpop.f32.mrf.mxu0
        %1065 = vdwg.mxu0
        %v1067 = vsel %vm791, %v1042, 0
        %v1070 = vsel %vm1049, %v1043, 0
        %1072 = vmatpush.bf16.msra.mxu0 0
        %1073 = vmatpush.bf16.msra.mxu0 0
        %1074 = vmatpush.bf16.msra.mxu0 0
        %1075 = vmatpush.bf16.msra.mxu0 0
        %1076 = vmatpush.bf16.msra.mxu0 0
        %1077 = vmatpush.bf16.msra.mxu0 0
        %1078 = vmatpush.bf16.msra.mxu0 0
        %1079 = vmatpush.bf16.msra.mxu0 %v1070
        %1080 = vmatmul.bf16.gmra.mxu0 %v1067
        %v1081 = vpop.f32.mrf.mxu0
        %v1082 = vadd.f32 %v1063, %v1081
        %v1083 = vpop.f32.mrf.mxu0
        %1084 = vdwg.mxu0
        %v1085 = vpack.c.bf16 %v1017, %v1017
        %v1086 = vld [vmem:[#allocation7 + $0x8] sm:$0xf]
        %v1088 = vsel %vm791, %v1085, 0
        %v1091 = vsel %vm1049, %v1086, 0
        %1093 = vmatpush.bf16.msra.mxu0 0
        %1094 = vmatpush.bf16.msra.mxu0 0
        %1095 = vmatpush.bf16.msra.mxu0 0
        %1096 = vmatpush.bf16.msra.mxu0 0
        %1097 = vmatpush.bf16.msra.mxu0 0
        %1098 = vmatpush.bf16.msra.mxu0 0
        %1099 = vmatpush.bf16.msra.mxu0 0
        %1100 = vmatpush.bf16.msra.mxu0 %v1091
        %1101 = vmatmul.bf16.gmra.mxu0 %v1088
        %v1102 = vpop.f32.mrf.mxu0
        %v1103 = vadd.f32 0.0, %v1102
        %v1104 = vpop.f32.mrf.mxu0
        %1105 = vdwg.mxu0
        %v1106 = vadd.f32 %v1082, %v1103
        %v1107 = vpack.c.bf16 %v1039, %v1039
        %v1108 = vld [vmem:[#allocation7 + $0xc] sm:$0xf]
        %v1110 = vsel %vm791, %v1107, 0
        %v1113 = vsel %vm1049, %v1108, 0
        %1115 = vmatpush.bf16.msra.mxu0 0
        %1116 = vmatpush.bf16.msra.mxu0 0
        %1117 = vmatpush.bf16.msra.mxu0 0
        %1118 = vmatpush.bf16.msra.mxu0 0
        %1119 = vmatpush.bf16.msra.mxu0 0
        %1120 = vmatpush.bf16.msra.mxu0 0
        %1121 = vmatpush.bf16.msra.mxu0 0
        %1122 = vmatpush.bf16.msra.mxu0 %v1113
        %1123 = vmatmul.bf16.gmra.mxu0 %v1110
        %v1124 = vpop.f32.mrf.mxu0
        %v1125 = vadd.f32 0.0, %v1124
        %v1126 = vpop.f32.mrf.mxu0
        %1127 = vdwg.mxu0
        %v1128 = vadd.f32 %v1106, %v1125
        %v1129 = vld [vmem:[%s7] sm:$0x1]
        %v1131 = vperm.slane %v1129, 0
        %v1133 = vadd.f32 %v1128, %v1131
        %v1134 = vadd.f32 %v730, %v1133
        %v1135 = vld [vmem:[%s8] sm:$0x1]
        %v1136 = vld [vmem:[%s9] sm:$0x1]
        %v1137 = vsel %vm752, %v1134, 0.0
        %1138 = vadd.xlane.f32.xlu0 %v1137
        %v1139 = vpop.xlane.xlu0 %1138
        %v1140 = vrcp.pop 32.0
        %v1141 = vmul.f32 32.0, %v1140
        %v1142 = vsub.f32 1.0, %v1141
        %v1143 = vmul.f32 %v1140, %v1142
        %v1144 = vadd.f32 %v1140, %v1143
        %vm1145 = vweird.f32 %v1140
        %v1146 = vsel %vm1145, %v1140, %v1144
        %v1147 = vmul.f32 %v1139, %v1146
        %v1148 = vsub.f32 %v1134, %v1147
        %v1149 = vmul.f32 %v1148, %v1148
        %v1150 = vsel %vm752, %v1149, 0.0
        %1151 = vadd.xlane.f32.xlu0 %v1150
        %v1152 = vpop.xlane.xlu0 %1151
        %v1153 = vmul.f32 %v1152, %v1146
        %v1154 = vadd.f32 %v1153, 1e-05
        %v1155 = vrsqrt.pop %v1154
        %v1156 = vmul.f32 %v1155, %v1154
        %v1157 = vmul.f32 %v1156, %v1155
        %v1158 = vmul.f32 0.5, %v1157
        %v1159 = vsub.f32 1.5, %v1158
        %v1160 = vmul.f32 %v1155, %v1159
        %vm1161 = vweird.f32 %v1154
        %vm1162 = vweird.f32 %v1155
        %vm1163 = vmor %vm1161, %vm1162
        %v1164 = vsel %vm1163, %v1155, %v1160
        %v1165 = vmul.f32 %v1148, %v1164
        %v1167 = vperm.slane %v1135, 0
        %v1169 = vmul.f32 %v1167, %v1165
        %v1171 = vperm.slane %v1136, 0
        %v1173 = vadd.f32 %v1169, %v1171
        %v1174 = vpack.c.bf16 %v1173, %v1173
        %v1175 = vld [vmem:[#allocation9] sm:$0xf]
        %v1176 = vld [vmem:[#allocation9 + $0x4] sm:$0xf]
        %v1177 = vld [vmem:[#allocation9 + $0x8] sm:$0xf]
        %v1178 = vld [vmem:[#allocation9 + $0xc] sm:$0xf]
        %v1179 = vld [vmem:[%s11] sm:$0x1]
        %v1181 = vperm.slane %v1179, 0
        %v1187 = vunpack.c.l.b16 %v1175
        %v1188 = vunpack.c.l.b16 %v1176
        %v1189 = vunpack.c.l.b16 %v1177
        %v1190 = vunpack.c.l.b16 %v1178
        %v1191 = vpack.c.b16 %v1188, %v1187
        %v1192 = vpack.c.b16 %v1190, %v1189
        %v1196 = vsel %vm752, %v1174, 0
        %1198 = vmatpush.bf16.msra.mxu0 0
        %1199 = vmatpush.bf16.msra.mxu0 0
        %1200 = vmatpush.bf16.msra.mxu0 0
        %1201 = vmatpush.bf16.msra.mxu0 0
        %1202 = vmatpush.bf16.msra.mxu0 0
        %1203 = vmatpush.bf16.msra.mxu0 0
        %1204 = vmatpush.bf16.msra.mxu0 %v1192
        %1205 = vmatpush.bf16.msra.mxu0 %v1191
        %1206 = vmatmul.bf16.gmra.mxu0 %v1196
        %v1207 = vpop.f32.mrf.mxu0
        %v1208 = vadd.f32 %v1181, %v1207
        %v1209 = vpop.f32.mrf.mxu0
        %1210 = vdwg.mxu0
        %v1211 = vmul.f32 %v1208, 0.5
        %v1212 = vmul.f32 %v1208, 0.044715
        %v1213 = vmul.f32 %v1212, %v1208
        %v1214 = vmul.f32 %v1213, %v1208
        %v1215 = vadd.f32 %v1208, %v1214
        %v1216 = vmul.f32 %v1215, 0.7978846
        %v1217 = vtanh.pop %v1216
        %v1218 = vadd.f32 %v1217, 1.0
        %v1219 = vmul.f32 %v1211, %v1218
        %v1220 = vpack.c.bf16 %v1219, %v1219
        %v1221 = vld [vmem:[%s12] sm:$0xf]
        %v1222 = vld [vmem:[%s12 + $0x4] sm:$0xf]
        %v1223 = vld [vmem:[%s12 + $0x8] sm:$0xf]
        %v1224 = vld [vmem:[%s12 + $0xc] sm:$0xf]
        %v1225 = vld [vmem:[%s12 + $0x10] sm:$0xf]
        %v1226 = vld [vmem:[%s12 + $0x14] sm:$0xf]
        %v1227 = vld [vmem:[%s12 + $0x18] sm:$0xf]
        %v1228 = vld [vmem:[%s12 + $0x1c] sm:$0xf]
        %v1229 = vld [vmem:[%s12 + $0x20] sm:$0xf]
        %v1230 = vld [vmem:[%s12 + $0x24] sm:$0xf]
        %v1231 = vld [vmem:[%s12 + $0x28] sm:$0xf]
        %v1232 = vld [vmem:[%s12 + $0x2c] sm:$0xf]
        %v1233 = vld [vmem:[%s12 + $0x30] sm:$0xf]
        %v1234 = vld [vmem:[%s12 + $0x34] sm:$0xf]
        %v1235 = vld [vmem:[%s12 + $0x38] sm:$0xf]
        %v1236 = vld [vmem:[%s12 + $0x3c] sm:$0xf]
        %v1237 = vld [vmem:[%s13] sm:$0x1]
        %v1239 = vperm.slane %v1237, 0
        %v1257 = vunpack.c.l.b16 %v1221
        %v1258 = vunpack.c.l.b16 %v1222
        %v1259 = vunpack.c.l.b16 %v1223
        %v1260 = vunpack.c.l.b16 %v1224
        %v1261 = vunpack.c.l.b16 %v1225
        %v1262 = vunpack.c.l.b16 %v1226
        %v1263 = vunpack.c.l.b16 %v1227
        %v1264 = vunpack.c.l.b16 %v1228
        %v1265 = vunpack.c.l.b16 %v1229
        %v1266 = vunpack.c.l.b16 %v1230
        %v1267 = vunpack.c.l.b16 %v1231
        %v1268 = vunpack.c.l.b16 %v1232
        %v1269 = vunpack.c.l.b16 %v1233
        %v1270 = vunpack.c.l.b16 %v1234
        %v1271 = vunpack.c.l.b16 %v1235
        %v1272 = vunpack.c.l.b16 %v1236
        %v1273 = vpack.c.b16 %v1258, %v1257
        %v1274 = vpack.c.b16 %v1260, %v1259
        %v1275 = vpack.c.b16 %v1262, %v1261
        %v1276 = vpack.c.b16 %v1264, %v1263
        %v1277 = vpack.c.b16 %v1266, %v1265
        %v1278 = vpack.c.b16 %v1268, %v1267
        %v1279 = vpack.c.b16 %v1270, %v1269
        %v1280 = vpack.c.b16 %v1272, %v1271
        %1289 = vmatpush.bf16.msra.mxu0 %v1280
        %1290 = vmatpush.bf16.msra.mxu0 %v1279
        %1291 = vmatpush.bf16.msra.mxu0 %v1278
        %1292 = vmatpush.bf16.msra.mxu0 %v1277
        %1293 = vmatpush.bf16.msra.mxu0 %v1276
        %1294 = vmatpush.bf16.msra.mxu0 %v1275
        %1295 = vmatpush.bf16.msra.mxu0 %v1274
        %1296 = vmatpush.bf16.msra.mxu0 %v1273
        %1297 = vmatmul.bf16.gmra.mxu0 %v1220
        %v1298 = vpop.f32.mrf.mxu0
        %v1299 = vadd.f32 %v1239, %v1298
        %v1300 = vpop.f32.mrf.mxu0
        %1301 = vdwg.mxu0
        %v1302 = vadd.f32 %v1173, %v1299
        %v1303 = vld [vmem:[%s14] sm:$0x1]
        %v1304 = vld [vmem:[%s15] sm:$0x1]
        %v1305 = vsel %vm752, %v1302, 0.0
        %1306 = vadd.xlane.f32.xlu0 %v1305
        %v1307 = vpop.xlane.xlu0 %1306
        %v1308 = vmul.f32 %v1307, %v1146
        %v1309 = vsub.f32 %v1302, %v1308
        %v1310 = vmul.f32 %v1309, %v1309
        %v1311 = vsel %vm752, %v1310, 0.0
        %1312 = vadd.xlane.f32.xlu0 %v1311
        %v1313 = vpop.xlane.xlu0 %1312
        %v1314 = vmul.f32 %v1313, %v1146
        %v1315 = vadd.f32 %v1314, 1e-05
        %v1316 = vrsqrt.pop %v1315
        %v1317 = vmul.f32 %v1316, %v1315
        %v1318 = vmul.f32 %v1317, %v1316
        %v1319 = vmul.f32 0.5, %v1318
        %v1320 = vsub.f32 1.5, %v1319
        %v1321 = vmul.f32 %v1316, %v1320
        %vm1322 = vweird.f32 %v1315
        %vm1323 = vweird.f32 %v1316
        %vm1324 = vmor %vm1322, %vm1323
        %v1325 = vsel %vm1324, %v1316, %v1321
        %v1326 = vmul.f32 %v1309, %v1325
        %v1328 = vperm.slane %v1303, 0
        %v1330 = vmul.f32 %v1328, %v1326
        %v1332 = vperm.slane %v1304, 0
        %v1334 = vadd.f32 %v1330, %v1332
        %1335 = vst.msk [vmem:[%s601] sm:$0xff] %vm752, %v1334
        %s1336 = sand.u32 %s402, 1
        %s1337 = scalar_lea.sflag [#allocation6], %s1336
        %s1338 = sand.u32 %s402, 1
        %s1339 = smul.addr %s1338, 8
        %s1340 = scalar_lea.vmem [#allocation10], %s1339
        // Predicated region
        $region101: #{tpu_custom_call.1} parent=83 // pred_check
          %p1341 = pneg %p412
        $region102: #{tpu_custom_call.1} parent=83 // pred_check_branch
          %1343 = sbr.rel (%p1341) target = $region104
        $region103: #{tpu_custom_call.1} parent=83 // pred_region
          %1345 = vsyncadd %s1337, 0
          %s1346 = smul.addr %s36, 2
          %s1347 = sadd.s32 %s37, %s1346
          %s1348 = smul.addr %s1347, 8
          %s1349 = scalar_lea.hbm %s16, %s1348
          %s1351 = sshll.u32 %s1340, 4
          %s1352 = int_to_ptr.vmem [resolvable:$true] %s1351
          %s1353 = sshll.u32 %s1349, 4
          %s1354 = int_to_ptr.hbm [resolvable:$true] %s1353
          %1356 = dma.vmem_to_hbm [thread:$0]  %s1352, 128, %s1354, %s1337
        $region104: #{tpu_custom_call.1} parent=83 // pred_fallthru
          _
      $region84: #{tpu_custom_call.1} parent=5 // pred_fallthru
        _
      %p1357 = scmp.le.s32.totalorder 2, %s27
      // Predicated region
      $region105: #{tpu_custom_call.1} parent=5 // pred_check
        %p1358 = pneg %p1357
      $region106: #{tpu_custom_call.1} parent=5 // pred_check_branch
        %1360 = sbr.rel (%p1358) target = $region108
      $region107: #{tpu_custom_call.1} parent=5 // pred_region
        %s1361 = ssub.s32 %s27, 2
        // Predicated region
        $region109: #{tpu_custom_call.1} parent=107 // pred_check
          %p1362 = pneg %p418
        $region110: #{tpu_custom_call.1} parent=107 // pred_check_branch
          %1364 = sbr.rel (%p1362) target = $region112
        $region111: #{tpu_custom_call.1} parent=107 // pred_region
          %s1365 = sand.u32 %s403, 1
          %s1366 = scalar_lea.sflag [#allocation6], %s1365
          %s1367 = sand.u32 %s403, 1
          %s1368 = smul.addr %s1367, 8
          %s1369 = scalar_lea.vmem [#allocation10], %s1368
          %1371 = dma.done %s1366, 128
        $region112: #{tpu_custom_call.1} parent=107 // pred_fallthru
          _
      $region108: #{tpu_custom_call.1} parent=5 // pred_fallthru
        _
    $region6: #{tpu_custom_call.1} parent=1 // loop_footer
      %s31 = sadd.s32 1, %s27
    $region7: #{tpu_custom_call.1} parent=1 // loop_footer_branch
      %26 = sbr.rel target = $region3
    $region8: #{tpu_custom_call.1} parent=1 // loop_exit
      _
    %1372 = vsyncpa [#allocation5], 1
    %s1373 = scalar_lea.sflag [#allocation5], 1
    %1374 = vsyncpa %s1373, 1
    %1375 = vsyncpa [#allocation8], 1
    %1376 = vsyncpa [#allocation6], 1
    %s1377 = scalar_lea.sflag [#allocation6], 1
    %1378 = vsyncpa %s1377, 1

</llo_original>
